<compile_context>
chip_gen: v6e
topology: v6e:2x2x1
jax: 0.10.0
libtpu: 0.0.40
codegen_flags: <defaults>
</compile_context>

<pallas_src>
import jax
import jax.numpy as jnp
import numpy as np
from jax.experimental import pallas as pl
from jax.experimental.pallas import tpu as pltpu


def basic_layer_kernel(x_ref, w1_ref, a1_ref, b1_ref, w2_ref, a2_ref, b2_ref,
                       out_ref):
    # x_ref:   (1, H, W, C)   f32   input activation (NHWC); also the residual
    # w1_ref:  (9*C, C)       bf16  conv1 weights, im2col-flattened HWIO
    # a1/b1:   (1, C)         f32   folded BN1 scale / shift
    # w2_ref:  (9*C, C)       bf16  conv2 weights
    # a2/b2:   (1, C)         f32   folded BN2 scale / shift
    # out_ref: (1, H, W, C)
    H, W, C = x_ref.shape[1], x_ref.shape[2], x_ref.shape[3]
    HW = H * W

    # Flatten to (H*W, C): layout-preserving (W multiple of 8, C on lanes).
    x = x_ref[0].astype(jnp.float32).reshape(HW, C)

    # Static column-validity masks for the kw = 0 / 2 taps (image left/right edges).
    col = jax.lax.broadcasted_iota(jnp.int32, (HW, 1), 0) % W
    left_ok = col >= 1           # tap reads column x-1
    right_ok = col <= W - 2      # tap reads column x+1

    def conv3x3_bn(inp, w_ref, a_ref, b_ref, relu):
        # inp: (H*W, Cin) f32.  Pad W+1 zero rows on both ends of the flattened image
        # so every tap (dh, dw) is a static contiguous slice; out-of-image rows read
        # zeros, out-of-image columns are zeroed by the static masks above.
        cin = inp.shape[1]
        zpad = jnp.zeros((W + 1, cin), jnp.float32)
        xp = jnp.concatenate([zpad, inp, zpad], axis=0)     # (HW + 2W + 2, Cin)
        taps = []
        for kh in range(3):
            for kw in range(3):
                start = kh * W + kw          # == (W+1) + (kh-1)*W + (kw-1)
                t = xp[start:start + HW, :]
                if kw == 0:
                    t = jnp.where(left_ok, t, 0.0)
                elif kw == 2:
                    t = jnp.where(right_ok, t, 0.0)
                taps.append(t.astype(jnp.bfloat16))
        patch = jnp.concatenate(taps, axis=1)               # (HW, 9*Cin) bf16
        acc = jnp.dot(patch, w_ref[...],
                      preferred_element_type=jnp.float32)   # single K=9*Cin MXU matmul
        y = acc * a_ref[...] + b_ref[...]                   # folded BN, f32
        return jnp.maximum(y, 0.0) if relu else y

    h1 = conv3x3_bn(x, w1_ref, a1_ref, b1_ref, relu=True)    # conv1 + BN1 + relu
    h2 = conv3x3_bn(h1, w2_ref, a2_ref, b2_ref, relu=False)  # conv2 + BN2
    y = jnp.maximum(h2 + x, 0.0)                             # identity residual + relu
    out_ref[...] = y.reshape(1, H, W, C).astype(out_ref.dtype)


def rt_detr_resnet_basic_layer(x, w1, a1, b1, w2, a2, b2):
    """x: (N, H, W, C) float32 NHWC. Identity shortcut (Cin == Cout, stride 1).

    w1, w2: (3, 3, Cin, Cout) HWIO f32; a*, b*: folded BN scale/shift (Cout,).
    """
    N, H, W, Cin = x.shape
    Cout = w1.shape[-1]
    assert Cin == Cout, "identity-shortcut configuration requires Cin == Cout"

    # im2col-flattened bf16 weights (halves weight HBM/VMEM traffic, feeds MXU natively)
    w1f = w1.reshape(9 * Cin, Cout).astype(jnp.bfloat16)
    w2f = w2.reshape(9 * Cout, Cout).astype(jnp.bfloat16)
    a1v = a1.reshape(1, Cout).astype(jnp.float32)
    b1v = b1.reshape(1, Cout).astype(jnp.float32)
    a2v = a2.reshape(1, Cout).astype(jnp.float32)
    b2v = b2.reshape(1, Cout).astype(jnp.float32)

    grid_spec = pltpu.PrefetchScalarGridSpec(
        num_scalar_prefetch=0,
        grid=(N,),
        in_specs=[
            pl.BlockSpec((1, H, W, Cin), lambda n: (n, 0, 0, 0)),     # x (also residual)
            pl.BlockSpec((9 * Cin, Cout), lambda n: (0, 0)),          # w1 (bf16)
            pl.BlockSpec((1, Cout), lambda n: (0, 0)),                # a1
            pl.BlockSpec((1, Cout), lambda n: (0, 0)),                # b1
            pl.BlockSpec((9 * Cout, Cout), lambda n: (0, 0)),         # w2 (bf16)
            pl.BlockSpec((1, Cout), lambda n: (0, 0)),                # a2
            pl.BlockSpec((1, Cout), lambda n: (0, 0)),                # b2
        ],
        out_specs=pl.BlockSpec((1, H, W, Cout), lambda n: (n, 0, 0, 0)),
    )

    return pl.pallas_call(
        basic_layer_kernel,
        out_shape=jax.ShapeDtypeStruct((N, H, W, Cout), x.dtype),
        grid_spec=grid_spec,
        compiler_params=pltpu.CompilerParams(
            dimension_semantics=("parallel",)),
    )(x, w1f, a1v, b1v, w2f, a2v, b2v)


def reference_forward(x, w1, a1, b1, w2, a2, b2):
    """Pure-JAX reference (NHWC) with the same bf16-operand / f32-accumulate policy."""
    dn = ("NHWC", "HWIO", "NHWC")
    y1 = jax.lax.conv_general_dilated(
        x.astype(jnp.bfloat16), w1.astype(jnp.bfloat16), (1, 1), "SAME",
        dimension_numbers=dn, preferred_element_type=jnp.float32)
    y1 = jnp.maximum(y1 * a1.reshape(1, 1, 1, -1) + b1.reshape(1, 1, 1, -1), 0.0)
    y2 = jax.lax.conv_general_dilated(
        y1.astype(jnp.bfloat16), w2.astype(jnp.bfloat16), (1, 1), "SAME",
        dimension_numbers=dn, preferred_element_type=jnp.float32)
    y2 = y2 * a2.reshape(1, 1, 1, -1) + b2.reshape(1, 1, 1, -1)
    return jnp.maximum(y2 + x, 0.0)


def fold_bn(gamma, beta, mean, var, eps=1e-5):
    scale = gamma / jnp.sqrt(var + eps)
    shift = beta - mean * scale
    return scale, shift


if __name__ == "__main__":
    # Small but realistic RT-DETR basic-layer shape (late stage): lane-dense C=128.
    N, H, W, C = 2, 16, 16, 128
    key = jax.random.PRNGKey(0)
    ks = jax.random.split(key, 11)

    x = jax.random.normal(ks[0], (N, H, W, C), jnp.float32)

    # conv weights, HWIO, deterministic init
    w1 = jax.random.normal(ks[1], (3, 3, C, C), jnp.float32) * (1.0 / np.sqrt(9 * C))
    w2 = jax.random.normal(ks[2], (3, 3, C, C), jnp.float32) * (1.0 / np.sqrt(9 * C))

    # BatchNorm parameters (eval mode: running stats), folded to scale/shift
    g1 = 1.0 + 0.1 * jax.random.normal(ks[3], (C,), jnp.float32)
    be1 = 0.1 * jax.random.normal(ks[4], (C,), jnp.float32)
    m1 = 0.1 * jax.random.normal(ks[5], (C,), jnp.float32)
    v1 = jnp.abs(jax.random.normal(ks[6], (C,), jnp.float32)) + 0.5
    g2 = 1.0 + 0.1 * jax.random.normal(ks[7], (C,), jnp.float32)
    be2 = 0.1 * jax.random.normal(ks[8], (C,), jnp.float32)
    m2 = 0.1 * jax.random.normal(ks[9], (C,), jnp.float32)
    v2 = jnp.abs(jax.random.normal(ks[10], (C,), jnp.float32)) + 0.5

    a1, b1 = fold_bn(g1, be1, m1, v1)
    a2, b2 = fold_bn(g2, be2, m2, v2)

    out = rt_detr_resnet_basic_layer(x, w1, a1, b1, w2, a2, b2)
    out = jax.block_until_ready(out)

    ref = reference_forward(x, w1, a1, b1, w2, a2, b2)
    np.testing.assert_allclose(np.asarray(out), np.asarray(ref), rtol=2e-3, atol=2e-3)

    print("KERNEL_OK")
</pallas_src>

<mosaic_0001>
module attributes {stable_mosaic.version = 11 : i64} {
  func.func @basic_layer_kernel(%arg0: i32, %arg1: memref<1x16x16x128xf32, #tpu.memory_space<vmem>>, %arg2: memref<1152x128xbf16, #tpu.memory_space<vmem>>, %arg3: memref<1x128xf32, #tpu.memory_space<vmem>>, %arg4: memref<1x128xf32, #tpu.memory_space<vmem>>, %arg5: memref<1152x128xbf16, #tpu.memory_space<vmem>>, %arg6: memref<1x128xf32, #tpu.memory_space<vmem>>, %arg7: memref<1x128xf32, #tpu.memory_space<vmem>>, %arg8: memref<1x16x16x128xf32, #tpu.memory_space<vmem>>) attributes {dimension_semantics = [#tpu.dimension_semantics<parallel>], iteration_bounds = array<i64: 2>, scalar_prefetch = 0 : i64, scratch_operands = 0 : i64, tpu.core_type = #tpu.core_type<tc>, window_params = [{transform_indices = @transform_0, window_bounds = array<i64: 1, 16, 16, 128>}, {pipeline_mode = #tpu.pipeline_mode<synchronous>, transform_indices = @transform_1, window_bounds = array<i64: 1152, 128>}, {pipeline_mode = #tpu.pipeline_mode<synchronous>, transform_indices = @transform_2, window_bounds = array<i64: 1, 128>}, {pipeline_mode = #tpu.pipeline_mode<synchronous>, transform_indices = @transform_3, window_bounds = array<i64: 1, 128>}, {pipeline_mode = #tpu.pipeline_mode<synchronous>, transform_indices = @transform_4, window_bounds = array<i64: 1152, 128>}, {pipeline_mode = #tpu.pipeline_mode<synchronous>, transform_indices = @transform_5, window_bounds = array<i64: 1, 128>}, {pipeline_mode = #tpu.pipeline_mode<synchronous>, transform_indices = @transform_6, window_bounds = array<i64: 1, 128>}, {transform_indices = @transform_7, window_bounds = array<i64: 1, 16, 16, 128>}]} {
    %c0 = arith.constant 0 : index
    %c0_0 = arith.constant 0 : index
    %c0_1 = arith.constant 0 : index
    %c0_2 = arith.constant 0 : index
    %0 = vector.load %arg1[%c0, %c0_0, %c0_1, %c0_2] : memref<1x16x16x128xf32, #tpu.memory_space<vmem>>, vector<1x16x16x128xf32>
    %1 = vector.shape_cast %0 : vector<1x16x16x128xf32> to vector<16x16x128xf32>
    %2 = vector.shape_cast %1 : vector<16x16x128xf32> to vector<256x128xf32>
    %3 = tpu.iota {dimensions = array<i32: 0>} : vector<256x1xi32>
    %c16_i32 = arith.constant 16 : i32
    %c0_i32 = arith.constant 0 : i32
    %4 = arith.cmpi eq, %c16_i32, %c0_i32 : i32
    %c1_i32 = arith.constant 1 : i32
    %5 = arith.select %4, %c1_i32, %c16_i32 : i32
    %6 = vector.broadcast %5 : i32 to vector<256x1xi32>
    %7 = arith.remsi %3, %6 : vector<256x1xi32>
    %c0_i32_3 = arith.constant 0 : i32
    %8 = vector.broadcast %c0_i32_3 : i32 to vector<256x1xi32>
    %9 = arith.cmpi ne, %7, %8 : vector<256x1xi32>
    %c0_i32_4 = arith.constant 0 : i32
    %10 = vector.broadcast %c0_i32_4 : i32 to vector<256x1xi32>
    %11 = arith.cmpi slt, %7, %10 : vector<256x1xi32>
    %c0_i32_5 = arith.constant 0 : i32
    %12 = arith.cmpi slt, %5, %c0_i32_5 : i32
    %13 = vector.broadcast %12 : i1 to vector<256x1xi1>
    %14 = vector.broadcast %13 : vector<256x1xi1> to vector<256x1xi1>
    %15 = arith.xori %11, %14 : vector<256x1xi1>
    %16 = arith.andi %15, %9 : vector<256x1xi1>
    %17 = vector.broadcast %5 : i32 to vector<256x1xi32>
    %18 = arith.addi %7, %17 : vector<256x1xi32>
    %19 = arith.select %16, %18, %7 : vector<256x1xi1>, vector<256x1xi32>
    %c1_i32_6 = arith.constant 1 : i32
    %20 = vector.broadcast %c1_i32_6 : i32 to vector<256x1xi32>
    %21 = arith.cmpi sge, %19, %20 : vector<256x1xi32>
    %c14_i32 = arith.constant 14 : i32
    %22 = vector.broadcast %c14_i32 : i32 to vector<256x1xi32>
    %23 = arith.cmpi sle, %19, %22 : vector<256x1xi32>
    %cst = arith.constant 0.000000e+00 : f32
    %24 = vector.broadcast %cst : f32 to vector<17x128xf32>
    %25 = tpu.concatenate %24, %2, %24 in 0 : vector<17x128xf32>, vector<256x128xf32>, vector<17x128xf32> -> vector<290x128xf32>
    %26 = vector.extract_strided_slice %25 {offsets = [0, 0], sizes = [256, 128], strides = [1, 1]} : vector<290x128xf32> to vector<256x128xf32>
    %cst_7 = arith.constant 0.000000e+00 : f32
    %27 = vector.shape_cast %21 : vector<256x1xi1> to vector<256x1xi1>
    %28 = vector.broadcast %27 : vector<256x1xi1> to vector<256x128xi1>
    %29 = vector.broadcast %cst_7 : f32 to vector<256x128xf32>
    %30 = arith.select %28, %26, %29 : vector<256x128xi1>, vector<256x128xf32>
    %31 = arith.truncf %30 : vector<256x128xf32> to vector<256x128xbf16>
    %32 = vector.extract_strided_slice %25 {offsets = [1, 0], sizes = [256, 128], strides = [1, 1]} : vector<290x128xf32> to vector<256x128xf32>
    %33 = arith.truncf %32 : vector<256x128xf32> to vector<256x128xbf16>
    %34 = vector.extract_strided_slice %25 {offsets = [2, 0], sizes = [256, 128], strides = [1, 1]} : vector<290x128xf32> to vector<256x128xf32>
    %cst_8 = arith.constant 0.000000e+00 : f32
    %35 = vector.shape_cast %23 : vector<256x1xi1> to vector<256x1xi1>
    %36 = vector.broadcast %35 : vector<256x1xi1> to vector<256x128xi1>
    %37 = vector.broadcast %cst_8 : f32 to vector<256x128xf32>
    %38 = arith.select %36, %34, %37 : vector<256x128xi1>, vector<256x128xf32>
    %39 = arith.truncf %38 : vector<256x128xf32> to vector<256x128xbf16>
    %40 = vector.extract_strided_slice %25 {offsets = [16, 0], sizes = [256, 128], strides = [1, 1]} : vector<290x128xf32> to vector<256x128xf32>
    %cst_9 = arith.constant 0.000000e+00 : f32
    %41 = vector.shape_cast %21 : vector<256x1xi1> to vector<256x1xi1>
    %42 = vector.broadcast %41 : vector<256x1xi1> to vector<256x128xi1>
    %43 = vector.broadcast %cst_9 : f32 to vector<256x128xf32>
    %44 = arith.select %42, %40, %43 : vector<256x128xi1>, vector<256x128xf32>
    %45 = arith.truncf %44 : vector<256x128xf32> to vector<256x128xbf16>
    %46 = vector.extract_strided_slice %25 {offsets = [17, 0], sizes = [256, 128], strides = [1, 1]} : vector<290x128xf32> to vector<256x128xf32>
    %47 = arith.truncf %46 : vector<256x128xf32> to vector<256x128xbf16>
    %48 = vector.extract_strided_slice %25 {offsets = [18, 0], sizes = [256, 128], strides = [1, 1]} : vector<290x128xf32> to vector<256x128xf32>
    %cst_10 = arith.constant 0.000000e+00 : f32
    %49 = vector.shape_cast %23 : vector<256x1xi1> to vector<256x1xi1>
    %50 = vector.broadcast %49 : vector<256x1xi1> to vector<256x128xi1>
    %51 = vector.broadcast %cst_10 : f32 to vector<256x128xf32>
    %52 = arith.select %50, %48, %51 : vector<256x128xi1>, vector<256x128xf32>
    %53 = arith.truncf %52 : vector<256x128xf32> to vector<256x128xbf16>
    %54 = vector.extract_strided_slice %25 {offsets = [32, 0], sizes = [256, 128], strides = [1, 1]} : vector<290x128xf32> to vector<256x128xf32>
    %cst_11 = arith.constant 0.000000e+00 : f32
    %55 = vector.shape_cast %21 : vector<256x1xi1> to vector<256x1xi1>
    %56 = vector.broadcast %55 : vector<256x1xi1> to vector<256x128xi1>
    %57 = vector.broadcast %cst_11 : f32 to vector<256x128xf32>
    %58 = arith.select %56, %54, %57 : vector<256x128xi1>, vector<256x128xf32>
    %59 = arith.truncf %58 : vector<256x128xf32> to vector<256x128xbf16>
    %60 = vector.extract_strided_slice %25 {offsets = [33, 0], sizes = [256, 128], strides = [1, 1]} : vector<290x128xf32> to vector<256x128xf32>
    %61 = arith.truncf %60 : vector<256x128xf32> to vector<256x128xbf16>
    %62 = vector.extract_strided_slice %25 {offsets = [34, 0], sizes = [256, 128], strides = [1, 1]} : vector<290x128xf32> to vector<256x128xf32>
    %cst_12 = arith.constant 0.000000e+00 : f32
    %63 = vector.shape_cast %23 : vector<256x1xi1> to vector<256x1xi1>
    %64 = vector.broadcast %63 : vector<256x1xi1> to vector<256x128xi1>
    %65 = vector.broadcast %cst_12 : f32 to vector<256x128xf32>
    %66 = arith.select %64, %62, %65 : vector<256x128xi1>, vector<256x128xf32>
    %67 = arith.truncf %66 : vector<256x128xf32> to vector<256x128xbf16>
    %68 = tpu.concatenate %31, %33, %39, %45, %47, %53, %59, %61, %67 in 1 : vector<256x128xbf16>, vector<256x128xbf16>, vector<256x128xbf16>, vector<256x128xbf16>, vector<256x128xbf16>, vector<256x128xbf16>, vector<256x128xbf16>, vector<256x128xbf16>, vector<256x128xbf16> -> vector<256x1152xbf16>
    %c0_13 = arith.constant 0 : index
    %c0_14 = arith.constant 0 : index
    %69 = vector.load %arg2[%c0_13, %c0_14] : memref<1152x128xbf16, #tpu.memory_space<vmem>>, vector<1152x128xbf16>
    %cst_15 = arith.constant dense<0.000000e+00> : vector<256x128xf32>
    %70 = tpu.matmul %68, %69, %cst_15 {dimension_numbers = #tpu.dot_dimension_numbers<[1], [0], [0], [1], [0, 0, 1, 1], [], []>} : vector<256x1152xbf16>, vector<1152x128xbf16>, vector<256x128xf32> -> vector<256x128xf32>
    %c0_16 = arith.constant 0 : index
    %c0_17 = arith.constant 0 : index
    %71 = vector.load %arg3[%c0_16, %c0_17] : memref<1x128xf32, #tpu.memory_space<vmem>>, vector<1x128xf32>
    %72 = vector.broadcast %71 : vector<1x128xf32> to vector<256x128xf32>
    %73 = arith.mulf %70, %72 : vector<256x128xf32>
    %c0_18 = arith.constant 0 : index
    %c0_19 = arith.constant 0 : index
    %74 = vector.load %arg4[%c0_18, %c0_19] : memref<1x128xf32, #tpu.memory_space<vmem>>, vector<1x128xf32>
    %75 = vector.broadcast %74 : vector<1x128xf32> to vector<256x128xf32>
    %76 = arith.addf %73, %75 : vector<256x128xf32>
    %cst_20 = arith.constant 0.000000e+00 : f32
    %77 = vector.broadcast %cst_20 : f32 to vector<256x128xf32>
    %78 = arith.maximumf %76, %77 : vector<256x128xf32>
    %cst_21 = arith.constant 0.000000e+00 : f32
    %79 = vector.broadcast %cst_21 : f32 to vector<17x128xf32>
    %80 = tpu.concatenate %79, %78, %79 in 0 : vector<17x128xf32>, vector<256x128xf32>, vector<17x128xf32> -> vector<290x128xf32>
    %81 = vector.extract_strided_slice %80 {offsets = [0, 0], sizes = [256, 128], strides = [1, 1]} : vector<290x128xf32> to vector<256x128xf32>
    %cst_22 = arith.constant 0.000000e+00 : f32
    %82 = vector.shape_cast %21 : vector<256x1xi1> to vector<256x1xi1>
    %83 = vector.broadcast %82 : vector<256x1xi1> to vector<256x128xi1>
    %84 = vector.broadcast %cst_22 : f32 to vector<256x128xf32>
    %85 = arith.select %83, %81, %84 : vector<256x128xi1>, vector<256x128xf32>
    %86 = arith.truncf %85 : vector<256x128xf32> to vector<256x128xbf16>
    %87 = vector.extract_strided_slice %80 {offsets = [1, 0], sizes = [256, 128], strides = [1, 1]} : vector<290x128xf32> to vector<256x128xf32>
    %88 = arith.truncf %87 : vector<256x128xf32> to vector<256x128xbf16>
    %89 = vector.extract_strided_slice %80 {offsets = [2, 0], sizes = [256, 128], strides = [1, 1]} : vector<290x128xf32> to vector<256x128xf32>
    %cst_23 = arith.constant 0.000000e+00 : f32
    %90 = vector.shape_cast %23 : vector<256x1xi1> to vector<256x1xi1>
    %91 = vector.broadcast %90 : vector<256x1xi1> to vector<256x128xi1>
    %92 = vector.broadcast %cst_23 : f32 to vector<256x128xf32>
    %93 = arith.select %91, %89, %92 : vector<256x128xi1>, vector<256x128xf32>
    %94 = arith.truncf %93 : vector<256x128xf32> to vector<256x128xbf16>
    %95 = vector.extract_strided_slice %80 {offsets = [16, 0], sizes = [256, 128], strides = [1, 1]} : vector<290x128xf32> to vector<256x128xf32>
    %cst_24 = arith.constant 0.000000e+00 : f32
    %96 = vector.shape_cast %21 : vector<256x1xi1> to vector<256x1xi1>
    %97 = vector.broadcast %96 : vector<256x1xi1> to vector<256x128xi1>
    %98 = vector.broadcast %cst_24 : f32 to vector<256x128xf32>
    %99 = arith.select %97, %95, %98 : vector<256x128xi1>, vector<256x128xf32>
    %100 = arith.truncf %99 : vector<256x128xf32> to vector<256x128xbf16>
    %101 = vector.extract_strided_slice %80 {offsets = [17, 0], sizes = [256, 128], strides = [1, 1]} : vector<290x128xf32> to vector<256x128xf32>
    %102 = arith.truncf %101 : vector<256x128xf32> to vector<256x128xbf16>
    %103 = vector.extract_strided_slice %80 {offsets = [18, 0], sizes = [256, 128], strides = [1, 1]} : vector<290x128xf32> to vector<256x128xf32>
    %cst_25 = arith.constant 0.000000e+00 : f32
    %104 = vector.shape_cast %23 : vector<256x1xi1> to vector<256x1xi1>
    %105 = vector.broadcast %104 : vector<256x1xi1> to vector<256x128xi1>
    %106 = vector.broadcast %cst_25 : f32 to vector<256x128xf32>
    %107 = arith.select %105, %103, %106 : vector<256x128xi1>, vector<256x128xf32>
    %108 = arith.truncf %107 : vector<256x128xf32> to vector<256x128xbf16>
    %109 = vector.extract_strided_slice %80 {offsets = [32, 0], sizes = [256, 128], strides = [1, 1]} : vector<290x128xf32> to vector<256x128xf32>
    %cst_26 = arith.constant 0.000000e+00 : f32
    %110 = vector.shape_cast %21 : vector<256x1xi1> to vector<256x1xi1>
    %111 = vector.broadcast %110 : vector<256x1xi1> to vector<256x128xi1>
    %112 = vector.broadcast %cst_26 : f32 to vector<256x128xf32>
    %113 = arith.select %111, %109, %112 : vector<256x128xi1>, vector<256x128xf32>
    %114 = arith.truncf %113 : vector<256x128xf32> to vector<256x128xbf16>
    %115 = vector.extract_strided_slice %80 {offsets = [33, 0], sizes = [256, 128], strides = [1, 1]} : vector<290x128xf32> to vector<256x128xf32>
    %116 = arith.truncf %115 : vector<256x128xf32> to vector<256x128xbf16>
    %117 = vector.extract_strided_slice %80 {offsets = [34, 0], sizes = [256, 128], strides = [1, 1]} : vector<290x128xf32> to vector<256x128xf32>
    %cst_27 = arith.constant 0.000000e+00 : f32
    %118 = vector.shape_cast %23 : vector<256x1xi1> to vector<256x1xi1>
    %119 = vector.broadcast %118 : vector<256x1xi1> to vector<256x128xi1>
    %120 = vector.broadcast %cst_27 : f32 to vector<256x128xf32>
    %121 = arith.select %119, %117, %120 : vector<256x128xi1>, vector<256x128xf32>
    %122 = arith.truncf %121 : vector<256x128xf32> to vector<256x128xbf16>
    %123 = tpu.concatenate %86, %88, %94, %100, %102, %108, %114, %116, %122 in 1 : vector<256x128xbf16>, vector<256x128xbf16>, vector<256x128xbf16>, vector<256x128xbf16>, vector<256x128xbf16>, vector<256x128xbf16>, vector<256x128xbf16>, vector<256x128xbf16>, vector<256x128xbf16> -> vector<256x1152xbf16>
    %c0_28 = arith.constant 0 : index
    %c0_29 = arith.constant 0 : index
    %124 = vector.load %arg5[%c0_28, %c0_29] : memref<1152x128xbf16, #tpu.memory_space<vmem>>, vector<1152x128xbf16>
    %cst_30 = arith.constant dense<0.000000e+00> : vector<256x128xf32>
    %125 = tpu.matmul %123, %124, %cst_30 {dimension_numbers = #tpu.dot_dimension_numbers<[1], [0], [0], [1], [0, 0, 1, 1], [], []>} : vector<256x1152xbf16>, vector<1152x128xbf16>, vector<256x128xf32> -> vector<256x128xf32>
    %c0_31 = arith.constant 0 : index
    %c0_32 = arith.constant 0 : index
    %126 = vector.load %arg6[%c0_31, %c0_32] : memref<1x128xf32, #tpu.memory_space<vmem>>, vector<1x128xf32>
    %127 = vector.broadcast %126 : vector<1x128xf32> to vector<256x128xf32>
    %128 = arith.mulf %125, %127 : vector<256x128xf32>
    %c0_33 = arith.constant 0 : index
    %c0_34 = arith.constant 0 : index
    %129 = vector.load %arg7[%c0_33, %c0_34] : memref<1x128xf32, #tpu.memory_space<vmem>>, vector<1x128xf32>
    %130 = vector.broadcast %129 : vector<1x128xf32> to vector<256x128xf32>
    %131 = arith.addf %128, %130 : vector<256x128xf32>
    %132 = arith.addf %131, %2 : vector<256x128xf32>
    %cst_35 = arith.constant 0.000000e+00 : f32
    %133 = vector.broadcast %cst_35 : f32 to vector<256x128xf32>
    %134 = arith.maximumf %132, %133 : vector<256x128xf32>
    %135 = vector.shape_cast %134 : vector<256x128xf32> to vector<1x16x16x128xf32>
    %c0_36 = arith.constant 0 : index
    %c0_37 = arith.constant 0 : index
    %c0_38 = arith.constant 0 : index
    %c0_39 = arith.constant 0 : index
    %136 = vector.load %arg8[%c0_36, %c0_37, %c0_38, %c0_39] : memref<1x16x16x128xf32, #tpu.memory_space<vmem>>, vector<1x16x16x128xf32>
    tpu.vector_store %arg8[%c0_36, %c0_37, %c0_38, %c0_39], %135 {strides = array<i32>} : memref<1x16x16x128xf32, #tpu.memory_space<vmem>>, vector<1x16x16x128xf32>,
    return
  }
  func.func @transform_0(%arg0: i32) -> (i32, i32, i32, i32) {
    %c0_i32 = arith.constant 0 : i32
    %c0_i32_0 = arith.constant 0 : i32
    %c0_i32_1 = arith.constant 0 : i32
    %c0_i32_2 = arith.constant 0 : i32
    return %arg0, %c0_i32, %c0_i32_0, %c0_i32_1 : i32, i32, i32, i32
  }
  func.func @transform_1(%arg0: i32) -> (i32, i32) {
    %c0_i32 = arith.constant 0 : i32
    %c0_i32_0 = arith.constant 0 : i32
    %c0_i32_1 = arith.constant 0 : i32
    return %c0_i32, %c0_i32_0 : i32, i32
  }
  func.func @transform_2(%arg0: i32) -> (i32, i32) {
    %c0_i32 = arith.constant 0 : i32
    %c0_i32_0 = arith.constant 0 : i32
    %c0_i32_1 = arith.constant 0 : i32
    return %c0_i32, %c0_i32_0 : i32, i32
  }
  func.func @transform_3(%arg0: i32) -> (i32, i32) {
    %c0_i32 = arith.constant 0 : i32
    %c0_i32_0 = arith.constant 0 : i32
    %c0_i32_1 = arith.constant 0 : i32
    return %c0_i32, %c0_i32_0 : i32, i32
  }
  func.func @transform_4(%arg0: i32) -> (i32, i32) {
    %c0_i32 = arith.constant 0 : i32
    %c0_i32_0 = arith.constant 0 : i32
    %c0_i32_1 = arith.constant 0 : i32
    return %c0_i32, %c0_i32_0 : i32, i32
  }
  func.func @transform_5(%arg0: i32) -> (i32, i32) {
    %c0_i32 = arith.constant 0 : i32
    %c0_i32_0 = arith.constant 0 : i32
    %c0_i32_1 = arith.constant 0 : i32
    return %c0_i32, %c0_i32_0 : i32, i32
  }
  func.func @transform_6(%arg0: i32) -> (i32, i32) {
    %c0_i32 = arith.constant 0 : i32
    %c0_i32_0 = arith.constant 0 : i32
    %c0_i32_1 = arith.constant 0 : i32
    return %c0_i32, %c0_i32_0 : i32, i32
  }
  func.func @transform_7(%arg0: i32) -> (i32, i32, i32, i32) {
    %c0_i32 = arith.constant 0 : i32
    %c0_i32_0 = arith.constant 0 : i32
    %c0_i32_1 = arith.constant 0 : i32
    %c0_i32_2 = arith.constant 0 : i32
    return %arg0, %c0_i32, %c0_i32_0, %c0_i32_1 : i32, i32, i32, i32
  }
}

</mosaic_0001>

<llo_original>
// kernel: tpu_custom_call.1
$region0: #{tpu_custom_call.1}
  #allocation0 [shape = 'u32[]', space=smem, size = 0x4, offset = 0x4, fixed_abs, tag = 'smem constant byte address 0x4 - core index']
  #allocation1 [shape = 'u32[144,128]{1,0:T(1,128)}', space=vmem, size = 0x12000, scoped, tag = 'internal scratch']
  %s0 = inlined_call_operand.hbm [shape: f32[2,16,16,128], index: 0, kind: input, shape index: {}]
  %s1 = inlined_call_operand.hbm [shape: bf16[1152,128], index: 1, kind: input, shape index: {}]
  %s2 = inlined_call_operand.vmem [shape: f32[1,128], index: 2, kind: input, shape index: {}]
  %s3 = inlined_call_operand.vmem [shape: f32[1,128], index: 3, kind: input, shape index: {}]
  %s4 = inlined_call_operand.hbm [shape: bf16[1152,128], index: 4, kind: input, shape index: {}]
  %s5 = inlined_call_operand.vmem [shape: f32[1,128], index: 5, kind: input, shape index: {}]
  %s6 = inlined_call_operand.vmem [shape: f32[1,128], index: 6, kind: input, shape index: {}]
  %s7 = inlined_call_operand.hbm [shape: f32[2,16,16,128], index: 7, kind: output, shape index: {}]
  %s8 = sld [smem:[#allocation0]]
  $region73: #{tpu_custom_call.1} parent=0
    _
  %s10 = ssub.s32 1, %s8
  %s11 = scalar_select 0, %s10, %s8
  $region1: #{tpu_custom_call.1} parent=0
    #allocation2 [shape = 'u8[262144]{0}', space=vmem, size = 0x40000, scoped, tag = 'input window, operand 0']
    #allocation3 [shape = 's32[2]{0}', space=sflag, size = 0x8, scoped, tag = 'scoped memory for tpu_custom_call.1']
    #allocation4 [shape = 's32[2]{0}', space=sflag, size = 0x8, scoped, tag = 'scoped memory for tpu_custom_call.1']
    #allocation5 [shape = 'u8[294912]{0}', space=vmem, size = 0x48000, scoped, tag = 'input window, operand 1, single buffered']
    #allocation6 [shape = 's32[1]{0}', space=sflag, size = 0x4, scoped, tag = 'scoped memory for tpu_custom_call.1']
    #allocation7 [shape = 'u8[294912]{0}', space=vmem, size = 0x48000, scoped, tag = 'input window, operand 4, single buffered']
    #allocation8 [shape = 'u8[262144]{0}', space=vmem, size = 0x40000, scoped, tag = 'output window, operand 0']
    %12 = vsyncpa [#allocation3], 0
    %s13 = scalar_lea.sflag [#allocation3], 1
    %14 = vsyncpa %s13, 0
    %15 = vsyncpa [#allocation6], 0
    %16 = vsyncpa [#allocation4], 0
    %s17 = scalar_lea.sflag [#allocation4], 1
    %18 = vsyncpa %s17, 0
    loop: start=0, step=1, limit=4
    $region2: #{tpu_custom_call.1} parent=1 // loop_pre_header
      _
    $region3: #{tpu_custom_call.1} parent=1 // loop_header
      %s20 = sphi 0, %s24
      %p21 = scmp.ge.s32.totalorder %s20, 4
      %s30 = sphi 0, %s32
      %s33 = sphi 0, %s30
      %s34 = sphi 0, %s33
      %s50 = sphi 0, %s34
      %s54 = sphi 0, %s54
      %s56 = sphi 0, %s54
      %s57 = sphi 0, %s56
      %s71 = sphi 0, %s57
      %s75 = sphi 0, %s75
      %s77 = sphi 0, %s75
      %s78 = sphi 0, %s77
      %s92 = sphi 0, %s78
      %s96 = sphi 0, %s96
      %s98 = sphi 0, %s96
      %s99 = sphi 0, %s98
      %s113 = sphi 0, %s99
      %s117 = sphi 0, %s117
      %s119 = sphi 0, %s117
      %s120 = sphi 0, %s119
      %s134 = sphi 0, %s120
      %s138 = sphi 0, %s138
      %s140 = sphi 0, %s138
      %s141 = sphi 0, %s140
      %s155 = sphi 0, %s141
      %s159 = sphi 0, %s159
      %s161 = sphi 0, %s159
      %s162 = sphi 0, %s161
      %s176 = sphi 0, %s162
      %s182 = sphi 0, %s184
      %s185 = sphi 0, %s182
      %s186 = sphi 0, %s185
      %s202 = sphi 0, %s186
    $region4: #{tpu_custom_call.1} parent=1 // loop_header_branch
      %23 = sbr.rel (%p21) target = $region8
    $region5: #{tpu_custom_call.1} parent=1 // loop_body
      %s25 = ssub.s32 %s20, 1
      %s26 = ssub.s32 %s20, 2
      %s27 = sadd.s32 %s20, 1
      %s28 = ssub.s32 %s20, %s27
      %p29 = scmp.eq.s32.totalorder %s28, 0
      %s31 = sadd.s32 %s30, 1
      %s32 = scalar_select %p29, %s30, %s31
      %p35 = pneg %p29
      %p36 = scmp.eq.s32.totalorder %s20, 1
      %p37 = por %p35, %p36
      %p38 = scmp.ne.s32.totalorder %s30, %s33
      %p39 = scmp.eq.s32.totalorder %s20, 0
      %p40 = por %p38, %p39
      %p41 = scmp.ne.s32.totalorder %s30, %s33
      %p42 = scmp.eq.s32.totalorder %s25, 1
      %p43 = por %p41, %p42
      %p44 = scmp.ne.s32.totalorder %s33, %s34
      %p45 = scmp.eq.s32.totalorder %s25, 0
      %p46 = por %p44, %p45
      %p47 = scmp.ne.s32.totalorder %s33, %s34
      %p48 = scmp.eq.s32.totalorder %s26, 1
      %p49 = por %p47, %p48
      %p51 = scmp.ne.s32.totalorder %s34, %s50
      %p52 = scmp.eq.s32.totalorder %s26, 0
      %p53 = por %p51, %p52
      %s55 = sadd.s32 %s54, 1
      %p58 = scmp.eq.s32.totalorder %s20, 1
      %p59 = scmp.ne.s32.totalorder %s54, %s56
      %p60 = scmp.eq.s32.totalorder %s20, 0
      %p61 = por %p59, %p60
      %p62 = scmp.ne.s32.totalorder %s54, %s56
      %p63 = scmp.eq.s32.totalorder %s25, 1
      %p64 = por %p62, %p63
      %p65 = scmp.ne.s32.totalorder %s56, %s57
      %p66 = scmp.eq.s32.totalorder %s25, 0
      %p67 = por %p65, %p66
      %p68 = scmp.ne.s32.totalorder %s56, %s57
      %p69 = scmp.eq.s32.totalorder %s26, 1
      %p70 = por %p68, %p69
      %p72 = scmp.ne.s32.totalorder %s57, %s71
      %p73 = scmp.eq.s32.totalorder %s26, 0
      %p74 = por %p72, %p73
      %s76 = sadd.s32 %s75, 1
      %p79 = scmp.eq.s32.totalorder %s20, 1
      %p80 = scmp.ne.s32.totalorder %s75, %s77
      %p81 = scmp.eq.s32.totalorder %s20, 0
      %p82 = por %p80, %p81
      %p83 = scmp.ne.s32.totalorder %s75, %s77
      %p84 = scmp.eq.s32.totalorder %s25, 1
      %p85 = por %p83, %p84
      %p86 = scmp.ne.s32.totalorder %s77, %s78
      %p87 = scmp.eq.s32.totalorder %s25, 0
      %p88 = por %p86, %p87
      %p89 = scmp.ne.s32.totalorder %s77, %s78
      %p90 = scmp.eq.s32.totalorder %s26, 1
      %p91 = por %p89, %p90
      %p93 = scmp.ne.s32.totalorder %s78, %s92
      %p94 = scmp.eq.s32.totalorder %s26, 0
      %p95 = por %p93, %p94
      %s97 = sadd.s32 %s96, 1
      %p100 = scmp.eq.s32.totalorder %s20, 1
      %p101 = scmp.ne.s32.totalorder %s96, %s98
      %p102 = scmp.eq.s32.totalorder %s20, 0
      %p103 = por %p101, %p102
      %p104 = scmp.ne.s32.totalorder %s96, %s98
      %p105 = scmp.eq.s32.totalorder %s25, 1
      %p106 = por %p104, %p105
      %p107 = scmp.ne.s32.totalorder %s98, %s99
      %p108 = scmp.eq.s32.totalorder %s25, 0
      %p109 = por %p107, %p108
      %p110 = scmp.ne.s32.totalorder %s98, %s99
      %p111 = scmp.eq.s32.totalorder %s26, 1
      %p112 = por %p110, %p111
      %p114 = scmp.ne.s32.totalorder %s99, %s113
      %p115 = scmp.eq.s32.totalorder %s26, 0
      %p116 = por %p114, %p115
      %s118 = sadd.s32 %s117, 1
      %p121 = scmp.eq.s32.totalorder %s20, 1
      %p122 = scmp.ne.s32.totalorder %s117, %s119
      %p123 = scmp.eq.s32.totalorder %s20, 0
      %p124 = por %p122, %p123
      %p125 = scmp.ne.s32.totalorder %s117, %s119
      %p126 = scmp.eq.s32.totalorder %s25, 1
      %p127 = por %p125, %p126
      %p128 = scmp.ne.s32.totalorder %s119, %s120
      %p129 = scmp.eq.s32.totalorder %s25, 0
      %p130 = por %p128, %p129
      %p131 = scmp.ne.s32.totalorder %s119, %s120
      %p132 = scmp.eq.s32.totalorder %s26, 1
      %p133 = por %p131, %p132
      %p135 = scmp.ne.s32.totalorder %s120, %s134
      %p136 = scmp.eq.s32.totalorder %s26, 0
      %p137 = por %p135, %p136
      %s139 = sadd.s32 %s138, 1
      %p142 = scmp.eq.s32.totalorder %s20, 1
      %p143 = scmp.ne.s32.totalorder %s138, %s140
      %p144 = scmp.eq.s32.totalorder %s20, 0
      %p145 = por %p143, %p144
      %p146 = scmp.ne.s32.totalorder %s138, %s140
      %p147 = scmp.eq.s32.totalorder %s25, 1
      %p148 = por %p146, %p147
      %p149 = scmp.ne.s32.totalorder %s140, %s141
      %p150 = scmp.eq.s32.totalorder %s25, 0
      %p151 = por %p149, %p150
      %p152 = scmp.ne.s32.totalorder %s140, %s141
      %p153 = scmp.eq.s32.totalorder %s26, 1
      %p154 = por %p152, %p153
      %p156 = scmp.ne.s32.totalorder %s141, %s155
      %p157 = scmp.eq.s32.totalorder %s26, 0
      %p158 = por %p156, %p157
      %s160 = sadd.s32 %s159, 1
      %p163 = scmp.eq.s32.totalorder %s20, 1
      %p164 = scmp.ne.s32.totalorder %s159, %s161
      %p165 = scmp.eq.s32.totalorder %s20, 0
      %p166 = por %p164, %p165
      %p167 = scmp.ne.s32.totalorder %s159, %s161
      %p168 = scmp.eq.s32.totalorder %s25, 1
      %p169 = por %p167, %p168
      %p170 = scmp.ne.s32.totalorder %s161, %s162
      %p171 = scmp.eq.s32.totalorder %s25, 0
      %p172 = por %p170, %p171
      %p173 = scmp.ne.s32.totalorder %s161, %s162
      %p174 = scmp.eq.s32.totalorder %s26, 1
      %p175 = por %p173, %p174
      %p177 = scmp.ne.s32.totalorder %s162, %s176
      %p178 = scmp.eq.s32.totalorder %s26, 0
      %p179 = por %p177, %p178
      %s180 = ssub.s32 %s20, %s27
      %p181 = scmp.eq.s32.totalorder %s180, 0
      %s183 = sadd.s32 %s182, 1
      %s184 = scalar_select %p181, %s182, %s183
      %p187 = pneg %p181
      %p188 = scmp.eq.s32.totalorder %s20, 1
      %p189 = por %p187, %p188
      %p190 = scmp.ne.s32.totalorder %s182, %s185
      %p191 = scmp.eq.s32.totalorder %s20, 0
      %p192 = por %p190, %p191
      %p193 = scmp.ne.s32.totalorder %s182, %s185
      %p194 = scmp.eq.s32.totalorder %s25, 1
      %p195 = por %p193, %p194
      %p196 = scmp.ne.s32.totalorder %s185, %s186
      %p197 = scmp.eq.s32.totalorder %s25, 0
      %p198 = por %p196, %p197
      %p199 = scmp.ne.s32.totalorder %s185, %s186
      %p200 = scmp.eq.s32.totalorder %s26, 1
      %p201 = por %p199, %p200
      %p203 = scmp.ne.s32.totalorder %s186, %s202
      %p204 = scmp.eq.s32.totalorder %s26, 0
      %p205 = por %p203, %p204
      %p206 = scmp.le.s32.totalorder 1, %s20
      %p207 = scmp.lt.s32.totalorder %s20, 3
      %p208 = pnand %p206, %p207
      %p209 = pneg %p208
      // Predicated region
      $region9: #{tpu_custom_call.1} parent=5 // pred_check
        _
      $region10: #{tpu_custom_call.1} parent=5 // pred_check_branch
        %211 = sbr.rel (%p208) target = $region12
      $region11: #{tpu_custom_call.1} parent=5 // pred_region
        %s212 = ssub.s32 %s20, 1
        // Predicated region
        $region13: #{tpu_custom_call.1} parent=11 // pred_check
          %p213 = pneg %p67
        $region14: #{tpu_custom_call.1} parent=11 // pred_check_branch
          %215 = sbr.rel (%p213) target = $region16
        $region15: #{tpu_custom_call.1} parent=11 // pred_region
          %s217 = ssub.s32 9216, 9216
          %218 = vsyncadd [#allocation6], %s217
          %s219 = sshll.u32 [#allocation5], 4
          %s220 = int_to_ptr.vmem [resolvable:$true] %s219
          %225 = dma.hbm_to_vmem [thread:$0]  %s1, 9216, %s220, [#allocation6], 64, 64, 4
        $region16: #{tpu_custom_call.1} parent=11 // pred_fallthru
          _
        // Predicated region
        $region17: #{tpu_custom_call.1} parent=11 // pred_check
          %p226 = pneg %p88
        $region18: #{tpu_custom_call.1} parent=11 // pred_check_branch
          %228 = sbr.rel (%p226) target = $region20
        $region19: #{tpu_custom_call.1} parent=11 // pred_region
          _
        $region20: #{tpu_custom_call.1} parent=11 // pred_fallthru
          _
        // Predicated region
        $region21: #{tpu_custom_call.1} parent=11 // pred_check
          %p229 = pneg %p109
        $region22: #{tpu_custom_call.1} parent=11 // pred_check_branch
          %231 = sbr.rel (%p229) target = $region24
        $region23: #{tpu_custom_call.1} parent=11 // pred_region
          _
        $region24: #{tpu_custom_call.1} parent=11 // pred_fallthru
          _
        // Predicated region
        $region25: #{tpu_custom_call.1} parent=11 // pred_check
          %p232 = pneg %p130
        $region26: #{tpu_custom_call.1} parent=11 // pred_check_branch
          %234 = sbr.rel (%p232) target = $region28
        $region27: #{tpu_custom_call.1} parent=11 // pred_region
          %s236 = ssub.s32 9216, 9216
          %237 = vsyncadd [#allocation6], %s236
          %s238 = sshll.u32 [#allocation7], 4
          %s239 = int_to_ptr.vmem [resolvable:$true] %s238
          %244 = dma.hbm_to_vmem [thread:$0]  %s4, 9216, %s239, [#allocation6], 64, 64, 4
        $region28: #{tpu_custom_call.1} parent=11 // pred_fallthru
          _
        // Predicated region
        $region29: #{tpu_custom_call.1} parent=11 // pred_check
          %p245 = pneg %p151
        $region30: #{tpu_custom_call.1} parent=11 // pred_check_branch
          %247 = sbr.rel (%p245) target = $region32
        $region31: #{tpu_custom_call.1} parent=11 // pred_region
          _
        $region32: #{tpu_custom_call.1} parent=11 // pred_fallthru
          _
        // Predicated region
        $region33: #{tpu_custom_call.1} parent=11 // pred_check
          %p248 = pneg %p172
        $region34: #{tpu_custom_call.1} parent=11 // pred_check_branch
          %250 = sbr.rel (%p248) target = $region36
        $region35: #{tpu_custom_call.1} parent=11 // pred_region
          _
        $region36: #{tpu_custom_call.1} parent=11 // pred_fallthru
          _
      $region12: #{tpu_custom_call.1} parent=5 // pred_fallthru
        _
      %p251 = scmp.lt.s32.totalorder %s20, 2
      // Predicated region
      $region37: #{tpu_custom_call.1} parent=5 // pred_check
        %p252 = pneg %p251
      $region38: #{tpu_custom_call.1} parent=5 // pred_check_branch
        %254 = sbr.rel (%p252) target = $region40
      $region39: #{tpu_custom_call.1} parent=5 // pred_region
        // Predicated region
        $region41: #{tpu_custom_call.1} parent=39 // pred_check
          %p255 = pneg %p40
        $region42: #{tpu_custom_call.1} parent=39 // pred_check_branch
          %257 = sbr.rel (%p255) target = $region44
        $region43: #{tpu_custom_call.1} parent=39 // pred_region
          %s258 = sand.u32 %s30, 1
          %s259 = scalar_lea.sflag [#allocation3], %s258
          %s260 = sand.u32 %s30, 1
          %s261 = smul.addr %s260, 256
          %s262 = scalar_lea.vmem [#allocation2], %s261
          %s264 = ssub.s32 4096, 4096
          %265 = vsyncadd %s259, %s264
          %s266 = smul.addr %s20, 32
          %s267 = smul.addr %s266, 128
          %s268 = scalar_lea.hbm %s0, %s267
          %s269 = sshll.u32 %s262, 4
          %s270 = int_to_ptr.vmem [resolvable:$true] %s269
          %275 = dma.hbm_to_vmem [thread:$0]  %s268, 4096, %s270, %s259, 128, 128, 8
        $region44: #{tpu_custom_call.1} parent=39 // pred_fallthru
          _
      $region40: #{tpu_custom_call.1} parent=5 // pred_fallthru
        _
      %p276 = scmp.le.s32.totalorder 1, %s20
      %p277 = scmp.lt.s32.totalorder %s20, 3
      %p278 = pnand %p276, %p277
      %p279 = pneg %p278
      // Predicated region
      $region45: #{tpu_custom_call.1} parent=5 // pred_check
        _
      $region46: #{tpu_custom_call.1} parent=5 // pred_check_branch
        %281 = sbr.rel (%p278) target = $region48
      $region47: #{tpu_custom_call.1} parent=5 // pred_region
        %s282 = ssub.s32 %s20, 1
        %s283 = sand.u32 %s33, 1
        %s284 = scalar_lea.sflag [#allocation3], %s283
        %s285 = sand.u32 %s33, 1
        %s286 = smul.addr %s285, 256
        %s287 = scalar_lea.vmem [#allocation2], %s286
        // Predicated region
        $region49: #{tpu_custom_call.1} parent=47 // pred_check
          %p288 = pneg %p46
        $region50: #{tpu_custom_call.1} parent=47 // pred_check_branch
          %290 = sbr.rel (%p288) target = $region52
        $region51: #{tpu_custom_call.1} parent=47 // pred_region
          %291 = dma.done %s284, 4096
        $region52: #{tpu_custom_call.1} parent=47 // pred_fallthru
          _
        // Predicated region
        $region53: #{tpu_custom_call.1} parent=47 // pred_check
          %p292 = pneg %p67
        $region54: #{tpu_custom_call.1} parent=47 // pred_check_branch
          %294 = sbr.rel (%p292) target = $region56
        $region55: #{tpu_custom_call.1} parent=47 // pred_region
          %295 = dma.done [#allocation6], 9216
        $region56: #{tpu_custom_call.1} parent=47 // pred_fallthru
          _
        // Predicated region
        $region57: #{tpu_custom_call.1} parent=47 // pred_check
          %p296 = pneg %p130
        $region58: #{tpu_custom_call.1} parent=47 // pred_check_branch
          %298 = sbr.rel (%p296) target = $region60
        $region59: #{tpu_custom_call.1} parent=47 // pred_region
          %299 = dma.done [#allocation6], 9216
        $region60: #{tpu_custom_call.1} parent=47 // pred_fallthru
          _
        %s300 = sand.u32 %s33, 1
        %s301 = scalar_lea.sflag [#allocation3], %s300
        %s302 = sand.u32 %s33, 1
        %s303 = smul.addr %s302, 256
        %s304 = scalar_lea.vmem [#allocation2], %s303
        %p305 = pneg %p46
        %p306 = pneg %p43
        %p307 = pneg %p67
        %p308 = pneg %p64
        %p309 = pneg %p88
        %p310 = pneg %p85
        %p311 = pneg %p109
        %p312 = pneg %p106
        %p313 = pneg %p130
        %p314 = pneg %p127
        %p315 = pneg %p151
        %p316 = pneg %p148
        %p317 = pneg %p172
        %p318 = pneg %p169
        %p319 = pneg %p198
        %p320 = pneg %p195
        %s321 = sand.u32 %s185, 1
        %s322 = scalar_lea.sflag [#allocation4], %s321
        %s323 = sand.u32 %s185, 1
        %s324 = smul.addr %s323, 256
        %s325 = scalar_lea.vmem [#allocation8], %s324
        %v327 = vld [vmem:[%s287] sm:$0xff]
        %v328 = vld [vmem:[%s287 + $0x8] sm:$0xff]
        %v329 = vld [vmem:[%s287 + $0x10] sm:$0xff]
        %v330 = vld [vmem:[%s287 + $0x18] sm:$0xff]
        %v331 = vld [vmem:[%s287 + $0x20] sm:$0xff]
        %v332 = vld [vmem:[%s287 + $0x28] sm:$0xff]
        %v333 = vld [vmem:[%s287 + $0x30] sm:$0xff]
        %v334 = vld [vmem:[%s287 + $0x38] sm:$0xff]
        %v335 = vld [vmem:[%s287 + $0x40] sm:$0xff]
        %v336 = vld [vmem:[%s287 + $0x48] sm:$0xff]
        %v337 = vld [vmem:[%s287 + $0x50] sm:$0xff]
        %v338 = vld [vmem:[%s287 + $0x58] sm:$0xff]
        %v339 = vld [vmem:[%s287 + $0x60] sm:$0xff]
        %v340 = vld [vmem:[%s287 + $0x68] sm:$0xff]
        %v341 = vld [vmem:[%s287 + $0x70] sm:$0xff]
        %v342 = vld [vmem:[%s287 + $0x78] sm:$0xff]
        %v343 = vld [vmem:[%s287 + $0x80] sm:$0xff]
        %v344 = vld [vmem:[%s287 + $0x88] sm:$0xff]
        %v345 = vld [vmem:[%s287 + $0x90] sm:$0xff]
        %v346 = vld [vmem:[%s287 + $0x98] sm:$0xff]
        %v347 = vld [vmem:[%s287 + $0xa0] sm:$0xff]
        %v348 = vld [vmem:[%s287 + $0xa8] sm:$0xff]
        %v349 = vld [vmem:[%s287 + $0xb0] sm:$0xff]
        %v350 = vld [vmem:[%s287 + $0xb8] sm:$0xff]
        %v351 = vld [vmem:[%s287 + $0xc0] sm:$0xff]
        %v352 = vld [vmem:[%s287 + $0xc8] sm:$0xff]
        %v353 = vld [vmem:[%s287 + $0xd0] sm:$0xff]
        %v354 = vld [vmem:[%s287 + $0xd8] sm:$0xff]
        %v355 = vld [vmem:[%s287 + $0xe0] sm:$0xff]
        %v356 = vld [vmem:[%s287 + $0xe8] sm:$0xff]
        %v357 = vld [vmem:[%s287 + $0xf0] sm:$0xff]
        %v358 = vld [vmem:[%s287 + $0xf8] sm:$0xff]
        %v359 = vlaneseq
        %v360 = vshrl.u32 %v359, 7
        %v361 = vadd.s32 %v360, 8
        %v362 = vadd.s32 %v360, 16
        %v363 = vadd.s32 %v360, 24
        %v364 = vadd.s32 %v360, 32
        %v365 = vadd.s32 %v360, 40
        %v366 = vadd.s32 %v360, 48
        %v367 = vadd.s32 %v360, 56
        %v368 = vadd.s32 %v360, 64
        %v369 = vadd.s32 %v360, 72
        %v370 = vadd.s32 %v360, 80
        %v371 = vadd.s32 %v360, 88
        %v372 = vadd.s32 %v360, 96
        %v373 = vadd.s32 %v360, 104
        %v374 = vadd.s32 %v360, 112
        %v375 = vadd.s32 %v360, 120
        %v376 = vadd.s32 %v360, 128
        %v377 = vadd.s32 %v360, 136
        %v378 = vadd.s32 %v360, 144
        %v379 = vadd.s32 %v360, 152
        %v380 = vadd.s32 %v360, 160
        %v381 = vadd.s32 %v360, 168
        %v382 = vadd.s32 %v360, 176
        %v383 = vadd.s32 %v360, 184
        %v384 = vadd.s32 %v360, 192
        %v385 = vadd.s32 %v360, 200
        %v386 = vadd.s32 %v360, 208
        %v387 = vadd.s32 %v360, 216
        %v388 = vadd.s32 %v360, 224
        %v389 = vadd.s32 %v360, 232
        %v390 = vadd.s32 %v360, 240
        %v391 = vadd.s32 %v360, 248
        %vm392 = vcmp.lt.s32.totalorder %v360, 0
        %v393 = vsub.s32 0, %v360
        %v394 = vsel %vm392, %v393, %v360
        %v395 = vshrl.u32 %v394, 4
        %v396 = vand.u32 %v394, 15
        %v397 = vsub.s32 0, %v396
        %v398 = vsel %vm392, %v397, %v396
        %vm399 = vcmp.lt.s32.totalorder %v361, 0
        %v400 = vsub.s32 0, %v361
        %v401 = vsel %vm399, %v400, %v361
        %v402 = vshrl.u32 %v401, 4
        %v403 = vand.u32 %v401, 15
        %v404 = vsub.s32 0, %v403
        %v405 = vsel %vm399, %v404, %v403
        %vm406 = vcmp.lt.s32.totalorder %v362, 0
        %v407 = vsub.s32 0, %v362
        %v408 = vsel %vm406, %v407, %v362
        %v409 = vshrl.u32 %v408, 4
        %v410 = vand.u32 %v408, 15
        %v411 = vsub.s32 0, %v410
        %v412 = vsel %vm406, %v411, %v410
        %vm413 = vcmp.lt.s32.totalorder %v363, 0
        %v414 = vsub.s32 0, %v363
        %v415 = vsel %vm413, %v414, %v363
        %v416 = vshrl.u32 %v415, 4
        %v417 = vand.u32 %v415, 15
        %v418 = vsub.s32 0, %v417
        %v419 = vsel %vm413, %v418, %v417
        %vm420 = vcmp.lt.s32.totalorder %v364, 0
        %v421 = vsub.s32 0, %v364
        %v422 = vsel %vm420, %v421, %v364
        %v423 = vshrl.u32 %v422, 4
        %v424 = vand.u32 %v422, 15
        %v425 = vsub.s32 0, %v424
        %v426 = vsel %vm420, %v425, %v424
        %vm427 = vcmp.lt.s32.totalorder %v365, 0
        %v428 = vsub.s32 0, %v365
        %v429 = vsel %vm427, %v428, %v365
        %v430 = vshrl.u32 %v429, 4
        %v431 = vand.u32 %v429, 15
        %v432 = vsub.s32 0, %v431
        %v433 = vsel %vm427, %v432, %v431
        %vm434 = vcmp.lt.s32.totalorder %v366, 0
        %v435 = vsub.s32 0, %v366
        %v436 = vsel %vm434, %v435, %v366
        %v437 = vshrl.u32 %v436, 4
        %v438 = vand.u32 %v436, 15
        %v439 = vsub.s32 0, %v438
        %v440 = vsel %vm434, %v439, %v438
        %vm441 = vcmp.lt.s32.totalorder %v367, 0
        %v442 = vsub.s32 0, %v367
        %v443 = vsel %vm441, %v442, %v367
        %v444 = vshrl.u32 %v443, 4
        %v445 = vand.u32 %v443, 15
        %v446 = vsub.s32 0, %v445
        %v447 = vsel %vm441, %v446, %v445
        %vm448 = vcmp.lt.s32.totalorder %v368, 0
        %v449 = vsub.s32 0, %v368
        %v450 = vsel %vm448, %v449, %v368
        %v451 = vshrl.u32 %v450, 4
        %v452 = vand.u32 %v450, 15
        %v453 = vsub.s32 0, %v452
        %v454 = vsel %vm448, %v453, %v452
        %vm455 = vcmp.lt.s32.totalorder %v369, 0
        %v456 = vsub.s32 0, %v369
        %v457 = vsel %vm455, %v456, %v369
        %v458 = vshrl.u32 %v457, 4
        %v459 = vand.u32 %v457, 15
        %v460 = vsub.s32 0, %v459
        %v461 = vsel %vm455, %v460, %v459
        %vm462 = vcmp.lt.s32.totalorder %v370, 0
        %v463 = vsub.s32 0, %v370
        %v464 = vsel %vm462, %v463, %v370
        %v465 = vshrl.u32 %v464, 4
        %v466 = vand.u32 %v464, 15
        %v467 = vsub.s32 0, %v466
        %v468 = vsel %vm462, %v467, %v466
        %vm469 = vcmp.lt.s32.totalorder %v371, 0
        %v470 = vsub.s32 0, %v371
        %v471 = vsel %vm469, %v470, %v371
        %v472 = vshrl.u32 %v471, 4
        %v473 = vand.u32 %v471, 15
        %v474 = vsub.s32 0, %v473
        %v475 = vsel %vm469, %v474, %v473
        %vm476 = vcmp.lt.s32.totalorder %v372, 0
        %v477 = vsub.s32 0, %v372
        %v478 = vsel %vm476, %v477, %v372
        %v479 = vshrl.u32 %v478, 4
        %v480 = vand.u32 %v478, 15
        %v481 = vsub.s32 0, %v480
        %v482 = vsel %vm476, %v481, %v480
        %vm483 = vcmp.lt.s32.totalorder %v373, 0
        %v484 = vsub.s32 0, %v373
        %v485 = vsel %vm483, %v484, %v373
        %v486 = vshrl.u32 %v485, 4
        %v487 = vand.u32 %v485, 15
        %v488 = vsub.s32 0, %v487
        %v489 = vsel %vm483, %v488, %v487
        %vm490 = vcmp.lt.s32.totalorder %v374, 0
        %v491 = vsub.s32 0, %v374
        %v492 = vsel %vm490, %v491, %v374
        %v493 = vshrl.u32 %v492, 4
        %v494 = vand.u32 %v492, 15
        %v495 = vsub.s32 0, %v494
        %v496 = vsel %vm490, %v495, %v494
        %vm497 = vcmp.lt.s32.totalorder %v375, 0
        %v498 = vsub.s32 0, %v375
        %v499 = vsel %vm497, %v498, %v375
        %v500 = vshrl.u32 %v499, 4
        %v501 = vand.u32 %v499, 15
        %v502 = vsub.s32 0, %v501
        %v503 = vsel %vm497, %v502, %v501
        %vm504 = vcmp.lt.s32.totalorder %v376, 0
        %v505 = vsub.s32 0, %v376
        %v506 = vsel %vm504, %v505, %v376
        %v507 = vshrl.u32 %v506, 4
        %v508 = vand.u32 %v506, 15
        %v509 = vsub.s32 0, %v508
        %v510 = vsel %vm504, %v509, %v508
        %vm511 = vcmp.lt.s32.totalorder %v377, 0
        %v512 = vsub.s32 0, %v377
        %v513 = vsel %vm511, %v512, %v377
        %v514 = vshrl.u32 %v513, 4
        %v515 = vand.u32 %v513, 15
        %v516 = vsub.s32 0, %v515
        %v517 = vsel %vm511, %v516, %v515
        %vm518 = vcmp.lt.s32.totalorder %v378, 0
        %v519 = vsub.s32 0, %v378
        %v520 = vsel %vm518, %v519, %v378
        %v521 = vshrl.u32 %v520, 4
        %v522 = vand.u32 %v520, 15
        %v523 = vsub.s32 0, %v522
        %v524 = vsel %vm518, %v523, %v522
        %vm525 = vcmp.lt.s32.totalorder %v379, 0
        %v526 = vsub.s32 0, %v379
        %v527 = vsel %vm525, %v526, %v379
        %v528 = vshrl.u32 %v527, 4
        %v529 = vand.u32 %v527, 15
        %v530 = vsub.s32 0, %v529
        %v531 = vsel %vm525, %v530, %v529
        %vm532 = vcmp.lt.s32.totalorder %v380, 0
        %v533 = vsub.s32 0, %v380
        %v534 = vsel %vm532, %v533, %v380
        %v535 = vshrl.u32 %v534, 4
        %v536 = vand.u32 %v534, 15
        %v537 = vsub.s32 0, %v536
        %v538 = vsel %vm532, %v537, %v536
        %vm539 = vcmp.lt.s32.totalorder %v381, 0
        %v540 = vsub.s32 0, %v381
        %v541 = vsel %vm539, %v540, %v381
        %v542 = vshrl.u32 %v541, 4
        %v543 = vand.u32 %v541, 15
        %v544 = vsub.s32 0, %v543
        %v545 = vsel %vm539, %v544, %v543
        %vm546 = vcmp.lt.s32.totalorder %v382, 0
        %v547 = vsub.s32 0, %v382
        %v548 = vsel %vm546, %v547, %v382
        %v549 = vshrl.u32 %v548, 4
        %v550 = vand.u32 %v548, 15
        %v551 = vsub.s32 0, %v550
        %v552 = vsel %vm546, %v551, %v550
        %vm553 = vcmp.lt.s32.totalorder %v383, 0
        %v554 = vsub.s32 0, %v383
        %v555 = vsel %vm553, %v554, %v383
        %v556 = vshrl.u32 %v555, 4
        %v557 = vand.u32 %v555, 15
        %v558 = vsub.s32 0, %v557
        %v559 = vsel %vm553, %v558, %v557
        %vm560 = vcmp.lt.s32.totalorder %v384, 0
        %v561 = vsub.s32 0, %v384
        %v562 = vsel %vm560, %v561, %v384
        %v563 = vshrl.u32 %v562, 4
        %v564 = vand.u32 %v562, 15
        %v565 = vsub.s32 0, %v564
        %v566 = vsel %vm560, %v565, %v564
        %vm567 = vcmp.lt.s32.totalorder %v385, 0
        %v568 = vsub.s32 0, %v385
        %v569 = vsel %vm567, %v568, %v385
        %v570 = vshrl.u32 %v569, 4
        %v571 = vand.u32 %v569, 15
        %v572 = vsub.s32 0, %v571
        %v573 = vsel %vm567, %v572, %v571
        %vm574 = vcmp.lt.s32.totalorder %v386, 0
        %v575 = vsub.s32 0, %v386
        %v576 = vsel %vm574, %v575, %v386
        %v577 = vshrl.u32 %v576, 4
        %v578 = vand.u32 %v576, 15
        %v579 = vsub.s32 0, %v578
        %v580 = vsel %vm574, %v579, %v578
        %vm581 = vcmp.lt.s32.totalorder %v387, 0
        %v582 = vsub.s32 0, %v387
        %v583 = vsel %vm581, %v582, %v387
        %v584 = vshrl.u32 %v583, 4
        %v585 = vand.u32 %v583, 15
        %v586 = vsub.s32 0, %v585
        %v587 = vsel %vm581, %v586, %v585
        %vm588 = vcmp.lt.s32.totalorder %v388, 0
        %v589 = vsub.s32 0, %v388
        %v590 = vsel %vm588, %v589, %v388
        %v591 = vshrl.u32 %v590, 4
        %v592 = vand.u32 %v590, 15
        %v593 = vsub.s32 0, %v592
        %v594 = vsel %vm588, %v593, %v592
        %vm595 = vcmp.lt.s32.totalorder %v389, 0
        %v596 = vsub.s32 0, %v389
        %v597 = vsel %vm595, %v596, %v389
        %v598 = vshrl.u32 %v597, 4
        %v599 = vand.u32 %v597, 15
        %v600 = vsub.s32 0, %v599
        %v601 = vsel %vm595, %v600, %v599
        %vm602 = vcmp.lt.s32.totalorder %v390, 0
        %v603 = vsub.s32 0, %v390
        %v604 = vsel %vm602, %v603, %v390
        %v605 = vshrl.u32 %v604, 4
        %v606 = vand.u32 %v604, 15
        %v607 = vsub.s32 0, %v606
        %v608 = vsel %vm602, %v607, %v606
        %vm609 = vcmp.lt.s32.totalorder %v391, 0
        %v610 = vsub.s32 0, %v391
        %v611 = vsel %vm609, %v610, %v391
        %v612 = vshrl.u32 %v611, 4
        %v613 = vand.u32 %v611, 15
        %v614 = vsub.s32 0, %v613
        %v615 = vsel %vm609, %v614, %v613
        %vm616 = vcmp.ne.s32.totalorder %v398, 0
        %vm617 = vcmp.ne.s32.totalorder %v405, 0
        %vm618 = vcmp.ne.s32.totalorder %v412, 0
        %vm619 = vcmp.ne.s32.totalorder %v419, 0
        %vm620 = vcmp.ne.s32.totalorder %v426, 0
        %vm621 = vcmp.ne.s32.totalorder %v433, 0
        %vm622 = vcmp.ne.s32.totalorder %v440, 0
        %vm623 = vcmp.ne.s32.totalorder %v447, 0
        %vm624 = vcmp.ne.s32.totalorder %v454, 0
        %vm625 = vcmp.ne.s32.totalorder %v461, 0
        %vm626 = vcmp.ne.s32.totalorder %v468, 0
        %vm627 = vcmp.ne.s32.totalorder %v475, 0
        %vm628 = vcmp.ne.s32.totalorder %v482, 0
        %vm629 = vcmp.ne.s32.totalorder %v489, 0
        %vm630 = vcmp.ne.s32.totalorder %v496, 0
        %vm631 = vcmp.ne.s32.totalorder %v503, 0
        %vm632 = vcmp.ne.s32.totalorder %v510, 0
        %vm633 = vcmp.ne.s32.totalorder %v517, 0
        %vm634 = vcmp.ne.s32.totalorder %v524, 0
        %vm635 = vcmp.ne.s32.totalorder %v531, 0
        %vm636 = vcmp.ne.s32.totalorder %v538, 0
        %vm637 = vcmp.ne.s32.totalorder %v545, 0
        %vm638 = vcmp.ne.s32.totalorder %v552, 0
        %vm639 = vcmp.ne.s32.totalorder %v559, 0
        %vm640 = vcmp.ne.s32.totalorder %v566, 0
        %vm641 = vcmp.ne.s32.totalorder %v573, 0
        %vm642 = vcmp.ne.s32.totalorder %v580, 0
        %vm643 = vcmp.ne.s32.totalorder %v587, 0
        %vm644 = vcmp.ne.s32.totalorder %v594, 0
        %vm645 = vcmp.ne.s32.totalorder %v601, 0
        %vm646 = vcmp.ne.s32.totalorder %v608, 0
        %vm647 = vcmp.ne.s32.totalorder %v615, 0
        %vm648 = vcmp.lt.s32.totalorder %v398, 0
        %vm649 = vcmp.lt.s32.totalorder %v405, 0
        %vm650 = vcmp.lt.s32.totalorder %v412, 0
        %vm651 = vcmp.lt.s32.totalorder %v419, 0
        %vm652 = vcmp.lt.s32.totalorder %v426, 0
        %vm653 = vcmp.lt.s32.totalorder %v433, 0
        %vm654 = vcmp.lt.s32.totalorder %v440, 0
        %vm655 = vcmp.lt.s32.totalorder %v447, 0
        %vm656 = vcmp.lt.s32.totalorder %v454, 0
        %vm657 = vcmp.lt.s32.totalorder %v461, 0
        %vm658 = vcmp.lt.s32.totalorder %v468, 0
        %vm659 = vcmp.lt.s32.totalorder %v475, 0
        %vm660 = vcmp.lt.s32.totalorder %v482, 0
        %vm661 = vcmp.lt.s32.totalorder %v489, 0
        %vm662 = vcmp.lt.s32.totalorder %v496, 0
        %vm663 = vcmp.lt.s32.totalorder %v503, 0
        %vm664 = vcmp.lt.s32.totalorder %v510, 0
        %vm665 = vcmp.lt.s32.totalorder %v517, 0
        %vm666 = vcmp.lt.s32.totalorder %v524, 0
        %vm667 = vcmp.lt.s32.totalorder %v531, 0
        %vm668 = vcmp.lt.s32.totalorder %v538, 0
        %vm669 = vcmp.lt.s32.totalorder %v545, 0
        %vm670 = vcmp.lt.s32.totalorder %v552, 0
        %vm671 = vcmp.lt.s32.totalorder %v559, 0
        %vm672 = vcmp.lt.s32.totalorder %v566, 0
        %vm673 = vcmp.lt.s32.totalorder %v573, 0
        %vm674 = vcmp.lt.s32.totalorder %v580, 0
        %vm675 = vcmp.lt.s32.totalorder %v587, 0
        %vm676 = vcmp.lt.s32.totalorder %v594, 0
        %vm677 = vcmp.lt.s32.totalorder %v601, 0
        %vm678 = vcmp.lt.s32.totalorder %v608, 0
        %vm679 = vcmp.lt.s32.totalorder %v615, 0
        %vm680 = vmand %vm648, %vm616
        %vm681 = vmand %vm649, %vm617
        %vm682 = vmand %vm650, %vm618
        %vm683 = vmand %vm651, %vm619
        %vm684 = vmand %vm652, %vm620
        %vm685 = vmand %vm653, %vm621
        %vm686 = vmand %vm654, %vm622
        %vm687 = vmand %vm655, %vm623
        %vm688 = vmand %vm656, %vm624
        %vm689 = vmand %vm657, %vm625
        %vm690 = vmand %vm658, %vm626
        %vm691 = vmand %vm659, %vm627
        %vm692 = vmand %vm660, %vm628
        %vm693 = vmand %vm661, %vm629
        %vm694 = vmand %vm662, %vm630
        %vm695 = vmand %vm663, %vm631
        %vm696 = vmand %vm664, %vm632
        %vm697 = vmand %vm665, %vm633
        %vm698 = vmand %vm666, %vm634
        %vm699 = vmand %vm667, %vm635
        %vm700 = vmand %vm668, %vm636
        %vm701 = vmand %vm669, %vm637
        %vm702 = vmand %vm670, %vm638
        %vm703 = vmand %vm671, %vm639
        %vm704 = vmand %vm672, %vm640
        %vm705 = vmand %vm673, %vm641
        %vm706 = vmand %vm674, %vm642
        %vm707 = vmand %vm675, %vm643
        %vm708 = vmand %vm676, %vm644
        %vm709 = vmand %vm677, %vm645
        %vm710 = vmand %vm678, %vm646
        %vm711 = vmand %vm679, %vm647
        %v712 = vadd.s32 %v398, 16
        %v713 = vadd.s32 %v405, 16
        %v714 = vadd.s32 %v412, 16
        %v715 = vadd.s32 %v419, 16
        %v716 = vadd.s32 %v426, 16
        %v717 = vadd.s32 %v433, 16
        %v718 = vadd.s32 %v440, 16
        %v719 = vadd.s32 %v447, 16
        %v720 = vadd.s32 %v454, 16
        %v721 = vadd.s32 %v461, 16
        %v722 = vadd.s32 %v468, 16
        %v723 = vadd.s32 %v475, 16
        %v724 = vadd.s32 %v482, 16
        %v725 = vadd.s32 %v489, 16
        %v726 = vadd.s32 %v496, 16
        %v727 = vadd.s32 %v503, 16
        %v728 = vadd.s32 %v510, 16
        %v729 = vadd.s32 %v517, 16
        %v730 = vadd.s32 %v524, 16
        %v731 = vadd.s32 %v531, 16
        %v732 = vadd.s32 %v538, 16
        %v733 = vadd.s32 %v545, 16
        %v734 = vadd.s32 %v552, 16
        %v735 = vadd.s32 %v559, 16
        %v736 = vadd.s32 %v566, 16
        %v737 = vadd.s32 %v573, 16
        %v738 = vadd.s32 %v580, 16
        %v739 = vadd.s32 %v587, 16
        %v740 = vadd.s32 %v594, 16
        %v741 = vadd.s32 %v601, 16
        %v742 = vadd.s32 %v608, 16
        %v743 = vadd.s32 %v615, 16
        %v744 = vsel %vm680, %v712, %v398
        %v745 = vsel %vm681, %v713, %v405
        %v746 = vsel %vm682, %v714, %v412
        %v747 = vsel %vm683, %v715, %v419
        %v748 = vsel %vm684, %v716, %v426
        %v749 = vsel %vm685, %v717, %v433
        %v750 = vsel %vm686, %v718, %v440
        %v751 = vsel %vm687, %v719, %v447
        %v752 = vsel %vm688, %v720, %v454
        %v753 = vsel %vm689, %v721, %v461
        %v754 = vsel %vm690, %v722, %v468
        %v755 = vsel %vm691, %v723, %v475
        %v756 = vsel %vm692, %v724, %v482
        %v757 = vsel %vm693, %v725, %v489
        %v758 = vsel %vm694, %v726, %v496
        %v759 = vsel %vm695, %v727, %v503
        %v760 = vsel %vm696, %v728, %v510
        %v761 = vsel %vm697, %v729, %v517
        %v762 = vsel %vm698, %v730, %v524
        %v763 = vsel %vm699, %v731, %v531
        %v764 = vsel %vm700, %v732, %v538
        %v765 = vsel %vm701, %v733, %v545
        %v766 = vsel %vm702, %v734, %v552
        %v767 = vsel %vm703, %v735, %v559
        %v768 = vsel %vm704, %v736, %v566
        %v769 = vsel %vm705, %v737, %v573
        %v770 = vsel %vm706, %v738, %v580
        %v771 = vsel %vm707, %v739, %v587
        %v772 = vsel %vm708, %v740, %v594
        %v773 = vsel %vm709, %v741, %v601
        %v774 = vsel %vm710, %v742, %v608
        %v775 = vsel %vm711, %v743, %v615
        %vm776 = vcmp.ge.s32.totalorder %v744, 1
        %vm777 = vcmp.ge.s32.totalorder %v745, 1
        %vm778 = vcmp.ge.s32.totalorder %v746, 1
        %vm779 = vcmp.ge.s32.totalorder %v747, 1
        %vm780 = vcmp.ge.s32.totalorder %v748, 1
        %vm781 = vcmp.ge.s32.totalorder %v749, 1
        %vm782 = vcmp.ge.s32.totalorder %v750, 1
        %vm783 = vcmp.ge.s32.totalorder %v751, 1
        %vm784 = vcmp.ge.s32.totalorder %v752, 1
        %vm785 = vcmp.ge.s32.totalorder %v753, 1
        %vm786 = vcmp.ge.s32.totalorder %v754, 1
        %vm787 = vcmp.ge.s32.totalorder %v755, 1
        %vm788 = vcmp.ge.s32.totalorder %v756, 1
        %vm789 = vcmp.ge.s32.totalorder %v757, 1
        %vm790 = vcmp.ge.s32.totalorder %v758, 1
        %vm791 = vcmp.ge.s32.totalorder %v759, 1
        %vm792 = vcmp.ge.s32.totalorder %v760, 1
        %vm793 = vcmp.ge.s32.totalorder %v761, 1
        %vm794 = vcmp.ge.s32.totalorder %v762, 1
        %vm795 = vcmp.ge.s32.totalorder %v763, 1
        %vm796 = vcmp.ge.s32.totalorder %v764, 1
        %vm797 = vcmp.ge.s32.totalorder %v765, 1
        %vm798 = vcmp.ge.s32.totalorder %v766, 1
        %vm799 = vcmp.ge.s32.totalorder %v767, 1
        %vm800 = vcmp.ge.s32.totalorder %v768, 1
        %vm801 = vcmp.ge.s32.totalorder %v769, 1
        %vm802 = vcmp.ge.s32.totalorder %v770, 1
        %vm803 = vcmp.ge.s32.totalorder %v771, 1
        %vm804 = vcmp.ge.s32.totalorder %v772, 1
        %vm805 = vcmp.ge.s32.totalorder %v773, 1
        %vm806 = vcmp.ge.s32.totalorder %v774, 1
        %vm807 = vcmp.ge.s32.totalorder %v775, 1
        %vm808 = vcmp.le.s32.totalorder %v744, 14
        %vm809 = vcmp.le.s32.totalorder %v745, 14
        %vm810 = vcmp.le.s32.totalorder %v746, 14
        %vm811 = vcmp.le.s32.totalorder %v747, 14
        %vm812 = vcmp.le.s32.totalorder %v748, 14
        %vm813 = vcmp.le.s32.totalorder %v749, 14
        %vm814 = vcmp.le.s32.totalorder %v750, 14
        %vm815 = vcmp.le.s32.totalorder %v751, 14
        %vm816 = vcmp.le.s32.totalorder %v752, 14
        %vm817 = vcmp.le.s32.totalorder %v753, 14
        %vm818 = vcmp.le.s32.totalorder %v754, 14
        %vm819 = vcmp.le.s32.totalorder %v755, 14
        %vm820 = vcmp.le.s32.totalorder %v756, 14
        %vm821 = vcmp.le.s32.totalorder %v757, 14
        %vm822 = vcmp.le.s32.totalorder %v758, 14
        %vm823 = vcmp.le.s32.totalorder %v759, 14
        %vm824 = vcmp.le.s32.totalorder %v760, 14
        %vm825 = vcmp.le.s32.totalorder %v761, 14
        %vm826 = vcmp.le.s32.totalorder %v762, 14
        %vm827 = vcmp.le.s32.totalorder %v763, 14
        %vm828 = vcmp.le.s32.totalorder %v764, 14
        %vm829 = vcmp.le.s32.totalorder %v765, 14
        %vm830 = vcmp.le.s32.totalorder %v766, 14
        %vm831 = vcmp.le.s32.totalorder %v767, 14
        %vm832 = vcmp.le.s32.totalorder %v768, 14
        %vm833 = vcmp.le.s32.totalorder %v769, 14
        %vm834 = vcmp.le.s32.totalorder %v770, 14
        %vm835 = vcmp.le.s32.totalorder %v771, 14
        %vm836 = vcmp.le.s32.totalorder %v772, 14
        %vm837 = vcmp.le.s32.totalorder %v773, 14
        %vm838 = vcmp.le.s32.totalorder %v774, 14
        %vm839 = vcmp.le.s32.totalorder %v775, 14
        %vm872 = vcmask 1040384
        %v873 = vrot.slane %v327, 7
        %v874 = vrot.slane %v328, 7
        %v875 = vsel %vm872, %v873, %v874
        %v876 = vrot.slane %v329, 7
        %v877 = vsel %vm872, %v874, %v876
        %v878 = vrot.slane %v330, 7
        %v879 = vsel %vm872, %v876, %v878
        %v880 = vrot.slane %v331, 7
        %v881 = vsel %vm872, %v878, %v880
        %v882 = vrot.slane %v332, 7
        %v883 = vsel %vm872, %v880, %v882
        %v884 = vrot.slane %v333, 7
        %v885 = vsel %vm872, %v882, %v884
        %v886 = vrot.slane %v334, 7
        %v887 = vsel %vm872, %v884, %v886
        %v888 = vrot.slane %v335, 7
        %v889 = vsel %vm872, %v886, %v888
        %v890 = vrot.slane %v336, 7
        %v891 = vsel %vm872, %v888, %v890
        %v892 = vrot.slane %v337, 7
        %v893 = vsel %vm872, %v890, %v892
        %v894 = vrot.slane %v338, 7
        %v895 = vsel %vm872, %v892, %v894
        %v896 = vrot.slane %v339, 7
        %v897 = vsel %vm872, %v894, %v896
        %v898 = vrot.slane %v340, 7
        %v899 = vsel %vm872, %v896, %v898
        %v900 = vrot.slane %v341, 7
        %v901 = vsel %vm872, %v898, %v900
        %v902 = vrot.slane %v342, 7
        %v903 = vsel %vm872, %v900, %v902
        %v904 = vrot.slane %v343, 7
        %v905 = vsel %vm872, %v902, %v904
        %v906 = vrot.slane %v344, 7
        %v907 = vsel %vm872, %v904, %v906
        %v908 = vrot.slane %v345, 7
        %v909 = vsel %vm872, %v906, %v908
        %v910 = vrot.slane %v346, 7
        %v911 = vsel %vm872, %v908, %v910
        %v912 = vrot.slane %v347, 7
        %v913 = vsel %vm872, %v910, %v912
        %v914 = vrot.slane %v348, 7
        %v915 = vsel %vm872, %v912, %v914
        %v916 = vrot.slane %v349, 7
        %v917 = vsel %vm872, %v914, %v916
        %v918 = vrot.slane %v350, 7
        %v919 = vsel %vm872, %v916, %v918
        %v920 = vrot.slane %v351, 7
        %v921 = vsel %vm872, %v918, %v920
        %v922 = vrot.slane %v352, 7
        %v923 = vsel %vm872, %v920, %v922
        %v924 = vrot.slane %v353, 7
        %v925 = vsel %vm872, %v922, %v924
        %v926 = vrot.slane %v354, 7
        %v927 = vsel %vm872, %v924, %v926
        %v928 = vrot.slane %v355, 7
        %v929 = vsel %vm872, %v926, %v928
        %v930 = vrot.slane %v356, 7
        %v931 = vsel %vm872, %v928, %v930
        %v932 = vrot.slane %v357, 7
        %v933 = vsel %vm872, %v930, %v932
        %v934 = vrot.slane %v358, 7
        %v935 = vsel %vm872, %v932, %v934
        %v969 = vsel %vm872, 0.0, %v873
        %v970 = vsel %vm872, %v934, 0.0
        %v971 = vsel %vm776, 1, 0
        %v972 = vsel %vm777, 1, 0
        %v973 = vsel %vm778, 1, 0
        %v974 = vsel %vm779, 1, 0
        %v975 = vsel %vm780, 1, 0
        %v976 = vsel %vm781, 1, 0
        %v977 = vsel %vm782, 1, 0
        %v978 = vsel %vm783, 1, 0
        %v979 = vsel %vm784, 1, 0
        %v980 = vsel %vm785, 1, 0
        %v981 = vsel %vm786, 1, 0
        %v982 = vsel %vm787, 1, 0
        %v983 = vsel %vm788, 1, 0
        %v984 = vsel %vm789, 1, 0
        %v985 = vsel %vm790, 1, 0
        %v986 = vsel %vm791, 1, 0
        %v987 = vsel %vm792, 1, 0
        %v988 = vsel %vm793, 1, 0
        %v989 = vsel %vm794, 1, 0
        %v990 = vsel %vm795, 1, 0
        %v991 = vsel %vm796, 1, 0
        %v992 = vsel %vm797, 1, 0
        %v993 = vsel %vm798, 1, 0
        %v994 = vsel %vm799, 1, 0
        %v995 = vsel %vm800, 1, 0
        %v996 = vsel %vm801, 1, 0
        %v997 = vsel %vm802, 1, 0
        %v998 = vsel %vm803, 1, 0
        %v999 = vsel %vm804, 1, 0
        %v1000 = vsel %vm805, 1, 0
        %v1001 = vsel %vm806, 1, 0
        %v1002 = vsel %vm807, 1, 0
        %vm1003 = vcmp.eq.s32.totalorder %v971, 1
        %vm1004 = vcmp.eq.s32.totalorder %v972, 1
        %vm1005 = vcmp.eq.s32.totalorder %v973, 1
        %vm1006 = vcmp.eq.s32.totalorder %v974, 1
        %vm1007 = vcmp.eq.s32.totalorder %v975, 1
        %vm1008 = vcmp.eq.s32.totalorder %v976, 1
        %vm1009 = vcmp.eq.s32.totalorder %v977, 1
        %vm1010 = vcmp.eq.s32.totalorder %v978, 1
        %vm1011 = vcmp.eq.s32.totalorder %v979, 1
        %vm1012 = vcmp.eq.s32.totalorder %v980, 1
        %vm1013 = vcmp.eq.s32.totalorder %v981, 1
        %vm1014 = vcmp.eq.s32.totalorder %v982, 1
        %vm1015 = vcmp.eq.s32.totalorder %v983, 1
        %vm1016 = vcmp.eq.s32.totalorder %v984, 1
        %vm1017 = vcmp.eq.s32.totalorder %v985, 1
        %vm1018 = vcmp.eq.s32.totalorder %v986, 1
        %vm1019 = vcmp.eq.s32.totalorder %v987, 1
        %vm1020 = vcmp.eq.s32.totalorder %v988, 1
        %vm1021 = vcmp.eq.s32.totalorder %v989, 1
        %vm1022 = vcmp.eq.s32.totalorder %v990, 1
        %vm1023 = vcmp.eq.s32.totalorder %v991, 1
        %vm1024 = vcmp.eq.s32.totalorder %v992, 1
        %vm1025 = vcmp.eq.s32.totalorder %v993, 1
        %vm1026 = vcmp.eq.s32.totalorder %v994, 1
        %vm1027 = vcmp.eq.s32.totalorder %v995, 1
        %vm1028 = vcmp.eq.s32.totalorder %v996, 1
        %vm1029 = vcmp.eq.s32.totalorder %v997, 1
        %vm1030 = vcmp.eq.s32.totalorder %v998, 1
        %vm1031 = vcmp.eq.s32.totalorder %v999, 1
        %vm1032 = vcmp.eq.s32.totalorder %v1000, 1
        %vm1033 = vcmp.eq.s32.totalorder %v1001, 1
        %vm1034 = vcmp.eq.s32.totalorder %v1002, 1
        %v1035 = vsel %vm1005, %v969, 0.0
        %v1036 = vsel %vm1006, %v875, 0.0
        %v1037 = vsel %vm1007, %v877, 0.0
        %v1038 = vsel %vm1008, %v879, 0.0
        %v1039 = vsel %vm1009, %v881, 0.0
        %v1040 = vsel %vm1010, %v883, 0.0
        %v1041 = vsel %vm1011, %v885, 0.0
        %v1042 = vsel %vm1012, %v887, 0.0
        %v1043 = vsel %vm1013, %v889, 0.0
        %v1044 = vsel %vm1014, %v891, 0.0
        %v1045 = vsel %vm1015, %v893, 0.0
        %v1046 = vsel %vm1016, %v895, 0.0
        %v1047 = vsel %vm1017, %v897, 0.0
        %v1048 = vsel %vm1018, %v899, 0.0
        %v1049 = vsel %vm1019, %v901, 0.0
        %v1050 = vsel %vm1020, %v903, 0.0
        %v1051 = vsel %vm1021, %v905, 0.0
        %v1052 = vsel %vm1022, %v907, 0.0
        %v1053 = vsel %vm1023, %v909, 0.0
        %v1054 = vsel %vm1024, %v911, 0.0
        %v1055 = vsel %vm1025, %v913, 0.0
        %v1056 = vsel %vm1026, %v915, 0.0
        %v1057 = vsel %vm1027, %v917, 0.0
        %v1058 = vsel %vm1028, %v919, 0.0
        %v1059 = vsel %vm1029, %v921, 0.0
        %v1060 = vsel %vm1030, %v923, 0.0
        %v1061 = vsel %vm1031, %v925, 0.0
        %v1062 = vsel %vm1032, %v927, 0.0
        %v1063 = vsel %vm1033, %v929, 0.0
        %v1064 = vsel %vm1034, %v931, 0.0
        %v1065 = vpack.c.bf16 0.0, 0.0
        %v1066 = vpack.c.bf16 %v1036, %v1035
        %v1067 = vpack.c.bf16 %v1038, %v1037
        %v1068 = vpack.c.bf16 %v1040, %v1039
        %v1069 = vpack.c.bf16 %v1042, %v1041
        %v1070 = vpack.c.bf16 %v1044, %v1043
        %v1071 = vpack.c.bf16 %v1046, %v1045
        %v1072 = vpack.c.bf16 %v1048, %v1047
        %v1073 = vpack.c.bf16 %v1050, %v1049
        %v1074 = vpack.c.bf16 %v1052, %v1051
        %v1075 = vpack.c.bf16 %v1054, %v1053
        %v1076 = vpack.c.bf16 %v1056, %v1055
        %v1077 = vpack.c.bf16 %v1058, %v1057
        %v1078 = vpack.c.bf16 %v1060, %v1059
        %v1079 = vpack.c.bf16 %v1062, %v1061
        %v1080 = vpack.c.bf16 %v1064, %v1063
        %v1081 = vpack.c.bf16 %v875, %v969
        %v1082 = vpack.c.bf16 %v879, %v877
        %v1083 = vpack.c.bf16 %v883, %v881
        %v1084 = vpack.c.bf16 %v887, %v885
        %v1085 = vpack.c.bf16 %v891, %v889
        %v1086 = vpack.c.bf16 %v895, %v893
        %v1087 = vpack.c.bf16 %v899, %v897
        %v1088 = vpack.c.bf16 %v903, %v901
        %v1089 = vpack.c.bf16 %v907, %v905
        %v1090 = vpack.c.bf16 %v911, %v909
        %v1091 = vpack.c.bf16 %v915, %v913
        %v1092 = vpack.c.bf16 %v919, %v917
        %v1093 = vpack.c.bf16 %v923, %v921
        %v1094 = vpack.c.bf16 %v927, %v925
        %v1095 = vpack.c.bf16 %v931, %v929
        %v1096 = vpack.c.bf16 %v933, %v933
        %v1097 = vsel %vm808, 1, 0
        %v1098 = vsel %vm809, 1, 0
        %v1099 = vsel %vm810, 1, 0
        %v1100 = vsel %vm811, 1, 0
        %v1101 = vsel %vm812, 1, 0
        %v1102 = vsel %vm813, 1, 0
        %v1103 = vsel %vm814, 1, 0
        %v1104 = vsel %vm815, 1, 0
        %v1105 = vsel %vm816, 1, 0
        %v1106 = vsel %vm817, 1, 0
        %v1107 = vsel %vm818, 1, 0
        %v1108 = vsel %vm819, 1, 0
        %v1109 = vsel %vm820, 1, 0
        %v1110 = vsel %vm821, 1, 0
        %v1111 = vsel %vm822, 1, 0
        %v1112 = vsel %vm823, 1, 0
        %v1113 = vsel %vm824, 1, 0
        %v1114 = vsel %vm825, 1, 0
        %v1115 = vsel %vm826, 1, 0
        %v1116 = vsel %vm827, 1, 0
        %v1117 = vsel %vm828, 1, 0
        %v1118 = vsel %vm829, 1, 0
        %v1119 = vsel %vm830, 1, 0
        %v1120 = vsel %vm831, 1, 0
        %v1121 = vsel %vm832, 1, 0
        %v1122 = vsel %vm833, 1, 0
        %v1123 = vsel %vm834, 1, 0
        %v1124 = vsel %vm835, 1, 0
        %v1125 = vsel %vm836, 1, 0
        %v1126 = vsel %vm837, 1, 0
        %v1127 = vsel %vm838, 1, 0
        %v1128 = vsel %vm839, 1, 0
        %vm1129 = vcmp.eq.s32.totalorder %v1097, 1
        %vm1130 = vcmp.eq.s32.totalorder %v1098, 1
        %vm1131 = vcmp.eq.s32.totalorder %v1099, 1
        %vm1132 = vcmp.eq.s32.totalorder %v1100, 1
        %vm1133 = vcmp.eq.s32.totalorder %v1101, 1
        %vm1134 = vcmp.eq.s32.totalorder %v1102, 1
        %vm1135 = vcmp.eq.s32.totalorder %v1103, 1
        %vm1136 = vcmp.eq.s32.totalorder %v1104, 1
        %vm1137 = vcmp.eq.s32.totalorder %v1105, 1
        %vm1138 = vcmp.eq.s32.totalorder %v1106, 1
        %vm1139 = vcmp.eq.s32.totalorder %v1107, 1
        %vm1140 = vcmp.eq.s32.totalorder %v1108, 1
        %vm1141 = vcmp.eq.s32.totalorder %v1109, 1
        %vm1142 = vcmp.eq.s32.totalorder %v1110, 1
        %vm1143 = vcmp.eq.s32.totalorder %v1111, 1
        %vm1144 = vcmp.eq.s32.totalorder %v1112, 1
        %vm1145 = vcmp.eq.s32.totalorder %v1113, 1
        %vm1146 = vcmp.eq.s32.totalorder %v1114, 1
        %vm1147 = vcmp.eq.s32.totalorder %v1115, 1
        %vm1148 = vcmp.eq.s32.totalorder %v1116, 1
        %vm1149 = vcmp.eq.s32.totalorder %v1117, 1
        %vm1150 = vcmp.eq.s32.totalorder %v1118, 1
        %vm1151 = vcmp.eq.s32.totalorder %v1119, 1
        %vm1152 = vcmp.eq.s32.totalorder %v1120, 1
        %vm1153 = vcmp.eq.s32.totalorder %v1121, 1
        %vm1154 = vcmp.eq.s32.totalorder %v1122, 1
        %vm1155 = vcmp.eq.s32.totalorder %v1123, 1
        %vm1156 = vcmp.eq.s32.totalorder %v1124, 1
        %vm1157 = vcmp.eq.s32.totalorder %v1125, 1
        %vm1158 = vcmp.eq.s32.totalorder %v1126, 1
        %vm1159 = vcmp.eq.s32.totalorder %v1127, 1
        %vm1160 = vcmp.eq.s32.totalorder %v1128, 1
        %vm1163 = vcmask 1045504
        %v1164 = vrot.slane 0.0, 2
        %v1165 = vsel %vm1163, %v1164, %v1164
        %v1166 = vrot.slane %v969, 2
        %v1167 = vsel %vm1163, %v1164, %v1166
        %v1168 = vrot.slane %v875, 2
        %v1169 = vsel %vm1163, %v1166, %v1168
        %v1170 = vrot.slane %v877, 2
        %v1171 = vsel %vm1163, %v1168, %v1170
        %v1172 = vrot.slane %v879, 2
        %v1173 = vsel %vm1163, %v1170, %v1172
        %v1174 = vrot.slane %v881, 2
        %v1175 = vsel %vm1163, %v1172, %v1174
        %v1176 = vrot.slane %v883, 2
        %v1177 = vsel %vm1163, %v1174, %v1176
        %v1178 = vrot.slane %v885, 2
        %v1179 = vsel %vm1163, %v1176, %v1178
        %v1180 = vrot.slane %v887, 2
        %v1181 = vsel %vm1163, %v1178, %v1180
        %v1182 = vrot.slane %v889, 2
        %v1183 = vsel %vm1163, %v1180, %v1182
        %v1184 = vrot.slane %v891, 2
        %v1185 = vsel %vm1163, %v1182, %v1184
        %v1186 = vrot.slane %v893, 2
        %v1187 = vsel %vm1163, %v1184, %v1186
        %v1188 = vrot.slane %v895, 2
        %v1189 = vsel %vm1163, %v1186, %v1188
        %v1190 = vrot.slane %v897, 2
        %v1191 = vsel %vm1163, %v1188, %v1190
        %v1192 = vrot.slane %v899, 2
        %v1193 = vsel %vm1163, %v1190, %v1192
        %v1194 = vrot.slane %v901, 2
        %v1195 = vsel %vm1163, %v1192, %v1194
        %v1196 = vrot.slane %v903, 2
        %v1197 = vsel %vm1163, %v1194, %v1196
        %v1198 = vrot.slane %v905, 2
        %v1199 = vsel %vm1163, %v1196, %v1198
        %v1200 = vrot.slane %v907, 2
        %v1201 = vsel %vm1163, %v1198, %v1200
        %v1202 = vrot.slane %v909, 2
        %v1203 = vsel %vm1163, %v1200, %v1202
        %v1204 = vrot.slane %v911, 2
        %v1205 = vsel %vm1163, %v1202, %v1204
        %v1206 = vrot.slane %v913, 2
        %v1207 = vsel %vm1163, %v1204, %v1206
        %v1208 = vrot.slane %v915, 2
        %v1209 = vsel %vm1163, %v1206, %v1208
        %v1210 = vrot.slane %v917, 2
        %v1211 = vsel %vm1163, %v1208, %v1210
        %v1212 = vrot.slane %v919, 2
        %v1213 = vsel %vm1163, %v1210, %v1212
        %v1214 = vrot.slane %v921, 2
        %v1215 = vsel %vm1163, %v1212, %v1214
        %v1216 = vrot.slane %v923, 2
        %v1217 = vsel %vm1163, %v1214, %v1216
        %v1218 = vrot.slane %v925, 2
        %v1219 = vsel %vm1163, %v1216, %v1218
        %v1220 = vrot.slane %v927, 2
        %v1221 = vsel %vm1163, %v1218, %v1220
        %v1222 = vrot.slane %v929, 2
        %v1223 = vsel %vm1163, %v1220, %v1222
        %v1224 = vrot.slane %v931, 2
        %v1225 = vsel %vm1163, %v1222, %v1224
        %v1226 = vrot.slane %v933, 2
        %v1227 = vsel %vm1163, %v1224, %v1226
        %v1260 = vsel %vm1129, %v1165, 0.0
        %v1261 = vsel %vm1130, %v1167, 0.0
        %v1262 = vsel %vm1131, %v1169, 0.0
        %v1263 = vsel %vm1132, %v1171, 0.0
        %v1264 = vsel %vm1133, %v1173, 0.0
        %v1265 = vsel %vm1134, %v1175, 0.0
        %v1266 = vsel %vm1135, %v1177, 0.0
        %v1267 = vsel %vm1136, %v1179, 0.0
        %v1268 = vsel %vm1137, %v1181, 0.0
        %v1269 = vsel %vm1138, %v1183, 0.0
        %v1270 = vsel %vm1139, %v1185, 0.0
        %v1271 = vsel %vm1140, %v1187, 0.0
        %v1272 = vsel %vm1141, %v1189, 0.0
        %v1273 = vsel %vm1142, %v1191, 0.0
        %v1274 = vsel %vm1143, %v1193, 0.0
        %v1275 = vsel %vm1144, %v1195, 0.0
        %v1276 = vsel %vm1145, %v1197, 0.0
        %v1277 = vsel %vm1146, %v1199, 0.0
        %v1278 = vsel %vm1147, %v1201, 0.0
        %v1279 = vsel %vm1148, %v1203, 0.0
        %v1280 = vsel %vm1149, %v1205, 0.0
        %v1281 = vsel %vm1150, %v1207, 0.0
        %v1282 = vsel %vm1151, %v1209, 0.0
        %v1283 = vsel %vm1152, %v1211, 0.0
        %v1284 = vsel %vm1153, %v1213, 0.0
        %v1285 = vsel %vm1154, %v1215, 0.0
        %v1286 = vsel %vm1155, %v1217, 0.0
        %v1287 = vsel %vm1156, %v1219, 0.0
        %v1288 = vsel %vm1157, %v1221, 0.0
        %v1289 = vsel %vm1158, %v1223, 0.0
        %v1290 = vsel %vm1159, %v1225, 0.0
        %v1291 = vsel %vm1160, %v1227, 0.0
        %v1292 = vpack.c.bf16 %v1261, %v1260
        %v1293 = vpack.c.bf16 %v1263, %v1262
        %v1294 = vpack.c.bf16 %v1265, %v1264
        %v1295 = vpack.c.bf16 %v1267, %v1266
        %v1296 = vpack.c.bf16 %v1269, %v1268
        %v1297 = vpack.c.bf16 %v1271, %v1270
        %v1298 = vpack.c.bf16 %v1273, %v1272
        %v1299 = vpack.c.bf16 %v1275, %v1274
        %v1300 = vpack.c.bf16 %v1277, %v1276
        %v1301 = vpack.c.bf16 %v1279, %v1278
        %v1302 = vpack.c.bf16 %v1281, %v1280
        %v1303 = vpack.c.bf16 %v1283, %v1282
        %v1304 = vpack.c.bf16 %v1285, %v1284
        %v1305 = vpack.c.bf16 %v1287, %v1286
        %v1306 = vpack.c.bf16 %v1289, %v1288
        %v1307 = vpack.c.bf16 %v1291, %v1290
        %v1308 = vsel %vm1003, %v969, 0.0
        %v1309 = vsel %vm1004, %v875, 0.0
        %v1310 = vsel %vm1005, %v877, 0.0
        %v1311 = vsel %vm1006, %v879, 0.0
        %v1312 = vsel %vm1007, %v881, 0.0
        %v1313 = vsel %vm1008, %v883, 0.0
        %v1314 = vsel %vm1009, %v885, 0.0
        %v1315 = vsel %vm1010, %v887, 0.0
        %v1316 = vsel %vm1011, %v889, 0.0
        %v1317 = vsel %vm1012, %v891, 0.0
        %v1318 = vsel %vm1013, %v893, 0.0
        %v1319 = vsel %vm1014, %v895, 0.0
        %v1320 = vsel %vm1015, %v897, 0.0
        %v1321 = vsel %vm1016, %v899, 0.0
        %v1322 = vsel %vm1017, %v901, 0.0
        %v1323 = vsel %vm1018, %v903, 0.0
        %v1324 = vsel %vm1019, %v905, 0.0
        %v1325 = vsel %vm1020, %v907, 0.0
        %v1326 = vsel %vm1021, %v909, 0.0
        %v1327 = vsel %vm1022, %v911, 0.0
        %v1328 = vsel %vm1023, %v913, 0.0
        %v1329 = vsel %vm1024, %v915, 0.0
        %v1330 = vsel %vm1025, %v917, 0.0
        %v1331 = vsel %vm1026, %v919, 0.0
        %v1332 = vsel %vm1027, %v921, 0.0
        %v1333 = vsel %vm1028, %v923, 0.0
        %v1334 = vsel %vm1029, %v925, 0.0
        %v1335 = vsel %vm1030, %v927, 0.0
        %v1336 = vsel %vm1031, %v929, 0.0
        %v1337 = vsel %vm1032, %v931, 0.0
        %v1338 = vsel %vm1033, %v933, 0.0
        %v1339 = vsel %vm1034, %v935, 0.0
        %v1340 = vpack.c.bf16 %v1309, %v1308
        %v1341 = vpack.c.bf16 %v1311, %v1310
        %v1342 = vpack.c.bf16 %v1313, %v1312
        %v1343 = vpack.c.bf16 %v1315, %v1314
        %v1344 = vpack.c.bf16 %v1317, %v1316
        %v1345 = vpack.c.bf16 %v1319, %v1318
        %v1346 = vpack.c.bf16 %v1321, %v1320
        %v1347 = vpack.c.bf16 %v1323, %v1322
        %v1348 = vpack.c.bf16 %v1325, %v1324
        %v1349 = vpack.c.bf16 %v1327, %v1326
        %v1350 = vpack.c.bf16 %v1329, %v1328
        %v1351 = vpack.c.bf16 %v1331, %v1330
        %v1352 = vpack.c.bf16 %v1333, %v1332
        %v1353 = vpack.c.bf16 %v1335, %v1334
        %v1354 = vpack.c.bf16 %v1337, %v1336
        %v1355 = vpack.c.bf16 %v1339, %v1338
        %v1356 = vpack.c.bf16 %v935, %v933
        %v1357 = vpack.c.bf16 %v970, %v970
        %v1359 = vrot.slane %v935, 2
        %v1360 = vsel %vm1163, %v1226, %v1359
        %v1361 = vrot.slane %v970, 2
        %v1362 = vsel %vm1163, %v1359, %v1361
        %v1365 = vsel %vm1129, %v1169, 0.0
        %v1366 = vsel %vm1130, %v1171, 0.0
        %v1367 = vsel %vm1131, %v1173, 0.0
        %v1368 = vsel %vm1132, %v1175, 0.0
        %v1369 = vsel %vm1133, %v1177, 0.0
        %v1370 = vsel %vm1134, %v1179, 0.0
        %v1371 = vsel %vm1135, %v1181, 0.0
        %v1372 = vsel %vm1136, %v1183, 0.0
        %v1373 = vsel %vm1137, %v1185, 0.0
        %v1374 = vsel %vm1138, %v1187, 0.0
        %v1375 = vsel %vm1139, %v1189, 0.0
        %v1376 = vsel %vm1140, %v1191, 0.0
        %v1377 = vsel %vm1141, %v1193, 0.0
        %v1378 = vsel %vm1142, %v1195, 0.0
        %v1379 = vsel %vm1143, %v1197, 0.0
        %v1380 = vsel %vm1144, %v1199, 0.0
        %v1381 = vsel %vm1145, %v1201, 0.0
        %v1382 = vsel %vm1146, %v1203, 0.0
        %v1383 = vsel %vm1147, %v1205, 0.0
        %v1384 = vsel %vm1148, %v1207, 0.0
        %v1385 = vsel %vm1149, %v1209, 0.0
        %v1386 = vsel %vm1150, %v1211, 0.0
        %v1387 = vsel %vm1151, %v1213, 0.0
        %v1388 = vsel %vm1152, %v1215, 0.0
        %v1389 = vsel %vm1153, %v1217, 0.0
        %v1390 = vsel %vm1154, %v1219, 0.0
        %v1391 = vsel %vm1155, %v1221, 0.0
        %v1392 = vsel %vm1156, %v1223, 0.0
        %v1393 = vsel %vm1157, %v1225, 0.0
        %v1394 = vsel %vm1158, %v1227, 0.0
        %v1395 = vsel %vm1159, %v1360, 0.0
        %v1396 = vsel %vm1160, %v1362, 0.0
        %v1397 = vpack.c.bf16 %v1366, %v1365
        %v1398 = vpack.c.bf16 %v1368, %v1367
        %v1399 = vpack.c.bf16 %v1370, %v1369
        %v1400 = vpack.c.bf16 %v1372, %v1371
        %v1401 = vpack.c.bf16 %v1374, %v1373
        %v1402 = vpack.c.bf16 %v1376, %v1375
        %v1403 = vpack.c.bf16 %v1378, %v1377
        %v1404 = vpack.c.bf16 %v1380, %v1379
        %v1405 = vpack.c.bf16 %v1382, %v1381
        %v1406 = vpack.c.bf16 %v1384, %v1383
        %v1407 = vpack.c.bf16 %v1386, %v1385
        %v1408 = vpack.c.bf16 %v1388, %v1387
        %v1409 = vpack.c.bf16 %v1390, %v1389
        %v1410 = vpack.c.bf16 %v1392, %v1391
        %v1411 = vpack.c.bf16 %v1394, %v1393
        %v1412 = vpack.c.bf16 %v1396, %v1395
        %v1413 = vsel %vm1003, %v877, 0.0
        %v1414 = vsel %vm1004, %v879, 0.0
        %v1415 = vsel %vm1005, %v881, 0.0
        %v1416 = vsel %vm1006, %v883, 0.0
        %v1417 = vsel %vm1007, %v885, 0.0
        %v1418 = vsel %vm1008, %v887, 0.0
        %v1419 = vsel %vm1009, %v889, 0.0
        %v1420 = vsel %vm1010, %v891, 0.0
        %v1421 = vsel %vm1011, %v893, 0.0
        %v1422 = vsel %vm1012, %v895, 0.0
        %v1423 = vsel %vm1013, %v897, 0.0
        %v1424 = vsel %vm1014, %v899, 0.0
        %v1425 = vsel %vm1015, %v901, 0.0
        %v1426 = vsel %vm1016, %v903, 0.0
        %v1427 = vsel %vm1017, %v905, 0.0
        %v1428 = vsel %vm1018, %v907, 0.0
        %v1429 = vsel %vm1019, %v909, 0.0
        %v1430 = vsel %vm1020, %v911, 0.0
        %v1431 = vsel %vm1021, %v913, 0.0
        %v1432 = vsel %vm1022, %v915, 0.0
        %v1433 = vsel %vm1023, %v917, 0.0
        %v1434 = vsel %vm1024, %v919, 0.0
        %v1435 = vsel %vm1025, %v921, 0.0
        %v1436 = vsel %vm1026, %v923, 0.0
        %v1437 = vsel %vm1027, %v925, 0.0
        %v1438 = vsel %vm1028, %v927, 0.0
        %v1439 = vsel %vm1029, %v929, 0.0
        %v1440 = vsel %vm1030, %v931, 0.0
        %v1441 = vsel %vm1031, %v933, 0.0
        %v1442 = vsel %vm1032, %v935, 0.0
        %v1443 = vsel %vm1033, %v970, 0.0
        %v1444 = vpack.c.bf16 %v1414, %v1413
        %v1445 = vpack.c.bf16 %v1416, %v1415
        %v1446 = vpack.c.bf16 %v1418, %v1417
        %v1447 = vpack.c.bf16 %v1420, %v1419
        %v1448 = vpack.c.bf16 %v1422, %v1421
        %v1449 = vpack.c.bf16 %v1424, %v1423
        %v1450 = vpack.c.bf16 %v1426, %v1425
        %v1451 = vpack.c.bf16 %v1428, %v1427
        %v1452 = vpack.c.bf16 %v1430, %v1429
        %v1453 = vpack.c.bf16 %v1432, %v1431
        %v1454 = vpack.c.bf16 %v1434, %v1433
        %v1455 = vpack.c.bf16 %v1436, %v1435
        %v1456 = vpack.c.bf16 %v1438, %v1437
        %v1457 = vpack.c.bf16 %v1440, %v1439
        %v1458 = vpack.c.bf16 %v1442, %v1441
        %v1459 = vpack.c.bf16 0.0, %v1443
        %v1460 = vpack.c.bf16 0.0, %v970
        %v1461 = vsel %vm1163, %v1361, %v1164
        %v1463 = vsel %vm1129, %v1173, 0.0
        %v1464 = vsel %vm1130, %v1175, 0.0
        %v1465 = vsel %vm1131, %v1177, 0.0
        %v1466 = vsel %vm1132, %v1179, 0.0
        %v1467 = vsel %vm1133, %v1181, 0.0
        %v1468 = vsel %vm1134, %v1183, 0.0
        %v1469 = vsel %vm1135, %v1185, 0.0
        %v1470 = vsel %vm1136, %v1187, 0.0
        %v1471 = vsel %vm1137, %v1189, 0.0
        %v1472 = vsel %vm1138, %v1191, 0.0
        %v1473 = vsel %vm1139, %v1193, 0.0
        %v1474 = vsel %vm1140, %v1195, 0.0
        %v1475 = vsel %vm1141, %v1197, 0.0
        %v1476 = vsel %vm1142, %v1199, 0.0
        %v1477 = vsel %vm1143, %v1201, 0.0
        %v1478 = vsel %vm1144, %v1203, 0.0
        %v1479 = vsel %vm1145, %v1205, 0.0
        %v1480 = vsel %vm1146, %v1207, 0.0
        %v1481 = vsel %vm1147, %v1209, 0.0
        %v1482 = vsel %vm1148, %v1211, 0.0
        %v1483 = vsel %vm1149, %v1213, 0.0
        %v1484 = vsel %vm1150, %v1215, 0.0
        %v1485 = vsel %vm1151, %v1217, 0.0
        %v1486 = vsel %vm1152, %v1219, 0.0
        %v1487 = vsel %vm1153, %v1221, 0.0
        %v1488 = vsel %vm1154, %v1223, 0.0
        %v1489 = vsel %vm1155, %v1225, 0.0
        %v1490 = vsel %vm1156, %v1227, 0.0
        %v1491 = vsel %vm1157, %v1360, 0.0
        %v1492 = vsel %vm1158, %v1362, 0.0
        %v1493 = vsel %vm1159, %v1461, 0.0
        %v1494 = vsel %vm1160, %v1165, 0.0
        %v1495 = vpack.c.bf16 %v1464, %v1463
        %v1496 = vpack.c.bf16 %v1466, %v1465
        %v1497 = vpack.c.bf16 %v1468, %v1467
        %v1498 = vpack.c.bf16 %v1470, %v1469
        %v1499 = vpack.c.bf16 %v1472, %v1471
        %v1500 = vpack.c.bf16 %v1474, %v1473
        %v1501 = vpack.c.bf16 %v1476, %v1475
        %v1502 = vpack.c.bf16 %v1478, %v1477
        %v1503 = vpack.c.bf16 %v1480, %v1479
        %v1504 = vpack.c.bf16 %v1482, %v1481
        %v1505 = vpack.c.bf16 %v1484, %v1483
        %v1506 = vpack.c.bf16 %v1486, %v1485
        %v1507 = vpack.c.bf16 %v1488, %v1487
        %v1508 = vpack.c.bf16 %v1490, %v1489
        %v1509 = vpack.c.bf16 %v1492, %v1491
        %v1510 = vpack.c.bf16 %v1494, %v1493
        %vm1511 = vsmask.f32 7424
        %v1513 = vshrl.u32 %v1065, 16
        %v1515 = vshll.u32 %v1065, 16
        %v1517 = vrot.slane %v1515, 1
        %v1518 = vor.u32 %v1513, %v1517
        %v1520 = vshll.u32 %v1081, 16
        %v1522 = vrot.slane %v1520, 1
        %v1523 = vsel %vm1511, %v1518, %v1522
        %v1524 = vshrl.u32 %v1081, 16
        %v1526 = vor.u32 %v1524, %v1522
        %v1528 = vshll.u32 %v1082, 16
        %v1530 = vrot.slane %v1528, 1
        %v1531 = vsel %vm1511, %v1526, %v1530
        %v1532 = vshrl.u32 %v1082, 16
        %v1534 = vor.u32 %v1532, %v1530
        %v1536 = vshll.u32 %v1083, 16
        %v1538 = vrot.slane %v1536, 1
        %v1539 = vsel %vm1511, %v1534, %v1538
        %v1540 = vshrl.u32 %v1083, 16
        %v1542 = vor.u32 %v1540, %v1538
        %v1544 = vshll.u32 %v1084, 16
        %v1546 = vrot.slane %v1544, 1
        %v1547 = vsel %vm1511, %v1542, %v1546
        %v1548 = vshrl.u32 %v1084, 16
        %v1550 = vor.u32 %v1548, %v1546
        %v1552 = vshll.u32 %v1085, 16
        %v1554 = vrot.slane %v1552, 1
        %v1555 = vsel %vm1511, %v1550, %v1554
        %v1556 = vshrl.u32 %v1085, 16
        %v1558 = vor.u32 %v1556, %v1554
        %v1560 = vshll.u32 %v1086, 16
        %v1562 = vrot.slane %v1560, 1
        %v1563 = vsel %vm1511, %v1558, %v1562
        %v1564 = vshrl.u32 %v1086, 16
        %v1566 = vor.u32 %v1564, %v1562
        %v1568 = vshll.u32 %v1087, 16
        %v1570 = vrot.slane %v1568, 1
        %v1571 = vsel %vm1511, %v1566, %v1570
        %v1572 = vshrl.u32 %v1087, 16
        %v1574 = vor.u32 %v1572, %v1570
        %v1576 = vshll.u32 %v1088, 16
        %v1578 = vrot.slane %v1576, 1
        %v1579 = vsel %vm1511, %v1574, %v1578
        %v1580 = vshrl.u32 %v1088, 16
        %v1582 = vor.u32 %v1580, %v1578
        %v1584 = vshll.u32 %v1089, 16
        %v1586 = vrot.slane %v1584, 1
        %v1587 = vsel %vm1511, %v1582, %v1586
        %v1588 = vshrl.u32 %v1089, 16
        %v1590 = vor.u32 %v1588, %v1586
        %v1592 = vshll.u32 %v1090, 16
        %v1594 = vrot.slane %v1592, 1
        %v1595 = vsel %vm1511, %v1590, %v1594
        %v1596 = vshrl.u32 %v1090, 16
        %v1598 = vor.u32 %v1596, %v1594
        %v1600 = vshll.u32 %v1091, 16
        %v1602 = vrot.slane %v1600, 1
        %v1603 = vsel %vm1511, %v1598, %v1602
        %v1604 = vshrl.u32 %v1091, 16
        %v1606 = vor.u32 %v1604, %v1602
        %v1608 = vshll.u32 %v1092, 16
        %v1610 = vrot.slane %v1608, 1
        %v1611 = vsel %vm1511, %v1606, %v1610
        %v1612 = vshrl.u32 %v1092, 16
        %v1614 = vor.u32 %v1612, %v1610
        %v1616 = vshll.u32 %v1093, 16
        %v1618 = vrot.slane %v1616, 1
        %v1619 = vsel %vm1511, %v1614, %v1618
        %v1620 = vshrl.u32 %v1093, 16
        %v1622 = vor.u32 %v1620, %v1618
        %v1624 = vshll.u32 %v1094, 16
        %v1626 = vrot.slane %v1624, 1
        %v1627 = vsel %vm1511, %v1622, %v1626
        %v1628 = vshrl.u32 %v1094, 16
        %v1630 = vor.u32 %v1628, %v1626
        %v1632 = vshll.u32 %v1095, 16
        %v1634 = vrot.slane %v1632, 1
        %v1635 = vsel %vm1511, %v1630, %v1634
        %v1636 = vshrl.u32 %v1095, 16
        %v1638 = vor.u32 %v1636, %v1634
        %v1640 = vshll.u32 %v1096, 16
        %v1642 = vrot.slane %v1640, 1
        %v1643 = vsel %vm1511, %v1638, %v1642
        %v1661 = vshll.u32 %v1356, 16
        %v1663 = vrot.slane %v1661, 1
        %v1664 = vsel %vm1511, %v1638, %v1663
        %v1665 = vshrl.u32 %v1356, 16
        %v1667 = vor.u32 %v1665, %v1663
        %v1669 = vshll.u32 %v1357, 16
        %v1671 = vrot.slane %v1669, 1
        %v1672 = vsel %vm1511, %v1667, %v1671
        %v1676 = vshll.u32 %v1460, 16
        %v1678 = vrot.slane %v1676, 1
        %v1679 = vsel %vm1511, %v1667, %v1678
        %v1680 = vshrl.u32 %v1460, 16
        %v1682 = vor.u32 %v1680, %v1678
        %v1683 = vsel %vm1511, %v1682, %v1517
        %v1686 = vld [vmem:[#allocation5] sm:$0xf]
        %v1687 = vld [vmem:[#allocation5 + $0x4] sm:$0xf]
        %v1688 = vld [vmem:[#allocation5 + $0x8] sm:$0xf]
        %v1689 = vld [vmem:[#allocation5 + $0xc] sm:$0xf]
        %v1690 = vld [vmem:[#allocation5 + $0x10] sm:$0xf]
        %v1691 = vld [vmem:[#allocation5 + $0x14] sm:$0xf]
        %v1692 = vld [vmem:[#allocation5 + $0x18] sm:$0xf]
        %v1693 = vld [vmem:[#allocation5 + $0x1c] sm:$0xf]
        %v1694 = vld [vmem:[#allocation5 + $0x20] sm:$0xf]
        %v1695 = vld [vmem:[#allocation5 + $0x24] sm:$0xf]
        %v1696 = vld [vmem:[#allocation5 + $0x28] sm:$0xf]
        %v1697 = vld [vmem:[#allocation5 + $0x2c] sm:$0xf]
        %v1698 = vld [vmem:[#allocation5 + $0x30] sm:$0xf]
        %v1699 = vld [vmem:[#allocation5 + $0x34] sm:$0xf]
        %v1700 = vld [vmem:[#allocation5 + $0x38] sm:$0xf]
        %v1701 = vld [vmem:[#allocation5 + $0x3c] sm:$0xf]
        %v1702 = vld [vmem:[#allocation5 + $0x40] sm:$0xf]
        %v1703 = vld [vmem:[#allocation5 + $0x44] sm:$0xf]
        %v1704 = vld [vmem:[#allocation5 + $0x48] sm:$0xf]
        %v1705 = vld [vmem:[#allocation5 + $0x4c] sm:$0xf]
        %v1706 = vld [vmem:[#allocation5 + $0x50] sm:$0xf]
        %v1707 = vld [vmem:[#allocation5 + $0x54] sm:$0xf]
        %v1708 = vld [vmem:[#allocation5 + $0x58] sm:$0xf]
        %v1709 = vld [vmem:[#allocation5 + $0x5c] sm:$0xf]
        %v1710 = vld [vmem:[#allocation5 + $0x60] sm:$0xf]
        %v1711 = vld [vmem:[#allocation5 + $0x64] sm:$0xf]
        %v1712 = vld [vmem:[#allocation5 + $0x68] sm:$0xf]
        %v1713 = vld [vmem:[#allocation5 + $0x6c] sm:$0xf]
        %v1714 = vld [vmem:[#allocation5 + $0x70] sm:$0xf]
        %v1715 = vld [vmem:[#allocation5 + $0x74] sm:$0xf]
        %v1716 = vld [vmem:[#allocation5 + $0x78] sm:$0xf]
        %v1717 = vld [vmem:[#allocation5 + $0x7c] sm:$0xf]
        %v1718 = vld [vmem:[#allocation5 + $0x80] sm:$0xf]
        %v1719 = vld [vmem:[#allocation5 + $0x84] sm:$0xf]
        %v1720 = vld [vmem:[#allocation5 + $0x88] sm:$0xf]
        %v1721 = vld [vmem:[#allocation5 + $0x8c] sm:$0xf]
        %v1722 = vld [vmem:[#allocation5 + $0x90] sm:$0xf]
        %v1723 = vld [vmem:[#allocation5 + $0x94] sm:$0xf]
        %v1724 = vld [vmem:[#allocation5 + $0x98] sm:$0xf]
        %v1725 = vld [vmem:[#allocation5 + $0x9c] sm:$0xf]
        %v1726 = vld [vmem:[#allocation5 + $0xa0] sm:$0xf]
        %v1727 = vld [vmem:[#allocation5 + $0xa4] sm:$0xf]
        %v1728 = vld [vmem:[#allocation5 + $0xa8] sm:$0xf]
        %v1729 = vld [vmem:[#allocation5 + $0xac] sm:$0xf]
        %v1730 = vld [vmem:[#allocation5 + $0xb0] sm:$0xf]
        %v1731 = vld [vmem:[#allocation5 + $0xb4] sm:$0xf]
        %v1732 = vld [vmem:[#allocation5 + $0xb8] sm:$0xf]
        %v1733 = vld [vmem:[#allocation5 + $0xbc] sm:$0xf]
        %v1734 = vld [vmem:[#allocation5 + $0xc0] sm:$0xf]
        %v1735 = vld [vmem:[#allocation5 + $0xc4] sm:$0xf]
        %v1736 = vld [vmem:[#allocation5 + $0xc8] sm:$0xf]
        %v1737 = vld [vmem:[#allocation5 + $0xcc] sm:$0xf]
        %v1738 = vld [vmem:[#allocation5 + $0xd0] sm:$0xf]
        %v1739 = vld [vmem:[#allocation5 + $0xd4] sm:$0xf]
        %v1740 = vld [vmem:[#allocation5 + $0xd8] sm:$0xf]
        %v1741 = vld [vmem:[#allocation5 + $0xdc] sm:$0xf]
        %v1742 = vld [vmem:[#allocation5 + $0xe0] sm:$0xf]
        %v1743 = vld [vmem:[#allocation5 + $0xe4] sm:$0xf]
        %v1744 = vld [vmem:[#allocation5 + $0xe8] sm:$0xf]
        %v1745 = vld [vmem:[#allocation5 + $0xec] sm:$0xf]
        %v1746 = vld [vmem:[#allocation5 + $0xf0] sm:$0xf]
        %v1747 = vld [vmem:[#allocation5 + $0xf4] sm:$0xf]
        %v1748 = vld [vmem:[#allocation5 + $0xf8] sm:$0xf]
        %v1749 = vld [vmem:[#allocation5 + $0xfc] sm:$0xf]
        %v1750 = vld [vmem:[#allocation5 + $0x100] sm:$0xf]
        %v1751 = vld [vmem:[#allocation5 + $0x104] sm:$0xf]
        %v1752 = vld [vmem:[#allocation5 + $0x108] sm:$0xf]
        %v1753 = vld [vmem:[#allocation5 + $0x10c] sm:$0xf]
        %v1754 = vld [vmem:[#allocation5 + $0x110] sm:$0xf]
        %v1755 = vld [vmem:[#allocation5 + $0x114] sm:$0xf]
        %v1756 = vld [vmem:[#allocation5 + $0x118] sm:$0xf]
        %v1757 = vld [vmem:[#allocation5 + $0x11c] sm:$0xf]
        %v1758 = vld [vmem:[#allocation5 + $0x120] sm:$0xf]
        %v1759 = vld [vmem:[#allocation5 + $0x124] sm:$0xf]
        %v1760 = vld [vmem:[#allocation5 + $0x128] sm:$0xf]
        %v1761 = vld [vmem:[#allocation5 + $0x12c] sm:$0xf]
        %v1762 = vld [vmem:[#allocation5 + $0x130] sm:$0xf]
        %v1763 = vld [vmem:[#allocation5 + $0x134] sm:$0xf]
        %v1764 = vld [vmem:[#allocation5 + $0x138] sm:$0xf]
        %v1765 = vld [vmem:[#allocation5 + $0x13c] sm:$0xf]
        %v1766 = vld [vmem:[#allocation5 + $0x140] sm:$0xf]
        %v1767 = vld [vmem:[#allocation5 + $0x144] sm:$0xf]
        %v1768 = vld [vmem:[#allocation5 + $0x148] sm:$0xf]
        %v1769 = vld [vmem:[#allocation5 + $0x14c] sm:$0xf]
        %v1770 = vld [vmem:[#allocation5 + $0x150] sm:$0xf]
        %v1771 = vld [vmem:[#allocation5 + $0x154] sm:$0xf]
        %v1772 = vld [vmem:[#allocation5 + $0x158] sm:$0xf]
        %v1773 = vld [vmem:[#allocation5 + $0x15c] sm:$0xf]
        %v1774 = vld [vmem:[#allocation5 + $0x160] sm:$0xf]
        %v1775 = vld [vmem:[#allocation5 + $0x164] sm:$0xf]
        %v1776 = vld [vmem:[#allocation5 + $0x168] sm:$0xf]
        %v1777 = vld [vmem:[#allocation5 + $0x16c] sm:$0xf]
        %v1778 = vld [vmem:[#allocation5 + $0x170] sm:$0xf]
        %v1779 = vld [vmem:[#allocation5 + $0x174] sm:$0xf]
        %v1780 = vld [vmem:[#allocation5 + $0x178] sm:$0xf]
        %v1781 = vld [vmem:[#allocation5 + $0x17c] sm:$0xf]
        %v1782 = vld [vmem:[#allocation5 + $0x180] sm:$0xf]
        %v1783 = vld [vmem:[#allocation5 + $0x184] sm:$0xf]
        %v1784 = vld [vmem:[#allocation5 + $0x188] sm:$0xf]
        %v1785 = vld [vmem:[#allocation5 + $0x18c] sm:$0xf]
        %v1786 = vld [vmem:[#allocation5 + $0x190] sm:$0xf]
        %v1787 = vld [vmem:[#allocation5 + $0x194] sm:$0xf]
        %v1788 = vld [vmem:[#allocation5 + $0x198] sm:$0xf]
        %v1789 = vld [vmem:[#allocation5 + $0x19c] sm:$0xf]
        %v1790 = vld [vmem:[#allocation5 + $0x1a0] sm:$0xf]
        %v1791 = vld [vmem:[#allocation5 + $0x1a4] sm:$0xf]
        %v1792 = vld [vmem:[#allocation5 + $0x1a8] sm:$0xf]
        %v1793 = vld [vmem:[#allocation5 + $0x1ac] sm:$0xf]
        %v1794 = vld [vmem:[#allocation5 + $0x1b0] sm:$0xf]
        %v1795 = vld [vmem:[#allocation5 + $0x1b4] sm:$0xf]
        %v1796 = vld [vmem:[#allocation5 + $0x1b8] sm:$0xf]
        %v1797 = vld [vmem:[#allocation5 + $0x1bc] sm:$0xf]
        %v1798 = vld [vmem:[#allocation5 + $0x1c0] sm:$0xf]
        %v1799 = vld [vmem:[#allocation5 + $0x1c4] sm:$0xf]
        %v1800 = vld [vmem:[#allocation5 + $0x1c8] sm:$0xf]
        %v1801 = vld [vmem:[#allocation5 + $0x1cc] sm:$0xf]
        %v1802 = vld [vmem:[#allocation5 + $0x1d0] sm:$0xf]
        %v1803 = vld [vmem:[#allocation5 + $0x1d4] sm:$0xf]
        %v1804 = vld [vmem:[#allocation5 + $0x1d8] sm:$0xf]
        %v1805 = vld [vmem:[#allocation5 + $0x1dc] sm:$0xf]
        %v1806 = vld [vmem:[#allocation5 + $0x1e0] sm:$0xf]
        %v1807 = vld [vmem:[#allocation5 + $0x1e4] sm:$0xf]
        %v1808 = vld [vmem:[#allocation5 + $0x1e8] sm:$0xf]
        %v1809 = vld [vmem:[#allocation5 + $0x1ec] sm:$0xf]
        %v1810 = vld [vmem:[#allocation5 + $0x1f0] sm:$0xf]
        %v1811 = vld [vmem:[#allocation5 + $0x1f4] sm:$0xf]
        %v1812 = vld [vmem:[#allocation5 + $0x1f8] sm:$0xf]
        %v1813 = vld [vmem:[#allocation5 + $0x1fc] sm:$0xf]
        %v1814 = vld [vmem:[#allocation5 + $0x200] sm:$0xf]
        %v1815 = vld [vmem:[#allocation5 + $0x204] sm:$0xf]
        %v1816 = vld [vmem:[#allocation5 + $0x208] sm:$0xf]
        %v1817 = vld [vmem:[#allocation5 + $0x20c] sm:$0xf]
        %v1818 = vld [vmem:[#allocation5 + $0x210] sm:$0xf]
        %v1819 = vld [vmem:[#allocation5 + $0x214] sm:$0xf]
        %v1820 = vld [vmem:[#allocation5 + $0x218] sm:$0xf]
        %v1821 = vld [vmem:[#allocation5 + $0x21c] sm:$0xf]
        %v1822 = vld [vmem:[#allocation5 + $0x220] sm:$0xf]
        %v1823 = vld [vmem:[#allocation5 + $0x224] sm:$0xf]
        %v1824 = vld [vmem:[#allocation5 + $0x228] sm:$0xf]
        %v1825 = vld [vmem:[#allocation5 + $0x22c] sm:$0xf]
        %v1826 = vld [vmem:[#allocation5 + $0x230] sm:$0xf]
        %v1827 = vld [vmem:[#allocation5 + $0x234] sm:$0xf]
        %v1828 = vld [vmem:[#allocation5 + $0x238] sm:$0xf]
        %v1829 = vld [vmem:[#allocation5 + $0x23c] sm:$0xf]
        %v1974 = vunpack.c.l.b16 %v1686
        %v1975 = vunpack.c.l.b16 %v1687
        %v1976 = vunpack.c.l.b16 %v1688
        %v1977 = vunpack.c.l.b16 %v1689
        %v1978 = vunpack.c.l.b16 %v1690
        %v1979 = vunpack.c.l.b16 %v1691
        %v1980 = vunpack.c.l.b16 %v1692
        %v1981 = vunpack.c.l.b16 %v1693
        %v1982 = vunpack.c.l.b16 %v1694
        %v1983 = vunpack.c.l.b16 %v1695
        %v1984 = vunpack.c.l.b16 %v1696
        %v1985 = vunpack.c.l.b16 %v1697
        %v1986 = vunpack.c.l.b16 %v1698
        %v1987 = vunpack.c.l.b16 %v1699
        %v1988 = vunpack.c.l.b16 %v1700
        %v1989 = vunpack.c.l.b16 %v1701
        %v1990 = vunpack.c.l.b16 %v1702
        %v1991 = vunpack.c.l.b16 %v1703
        %v1992 = vunpack.c.l.b16 %v1704
        %v1993 = vunpack.c.l.b16 %v1705
        %v1994 = vunpack.c.l.b16 %v1706
        %v1995 = vunpack.c.l.b16 %v1707
        %v1996 = vunpack.c.l.b16 %v1708
        %v1997 = vunpack.c.l.b16 %v1709
        %v1998 = vunpack.c.l.b16 %v1710
        %v1999 = vunpack.c.l.b16 %v1711
        %v2000 = vunpack.c.l.b16 %v1712
        %v2001 = vunpack.c.l.b16 %v1713
        %v2002 = vunpack.c.l.b16 %v1714
        %v2003 = vunpack.c.l.b16 %v1715
        %v2004 = vunpack.c.l.b16 %v1716
        %v2005 = vunpack.c.l.b16 %v1717
        %v2006 = vunpack.c.l.b16 %v1718
        %v2007 = vunpack.c.l.b16 %v1719
        %v2008 = vunpack.c.l.b16 %v1720
        %v2009 = vunpack.c.l.b16 %v1721
        %v2010 = vunpack.c.l.b16 %v1722
        %v2011 = vunpack.c.l.b16 %v1723
        %v2012 = vunpack.c.l.b16 %v1724
        %v2013 = vunpack.c.l.b16 %v1725
        %v2014 = vunpack.c.l.b16 %v1726
        %v2015 = vunpack.c.l.b16 %v1727
        %v2016 = vunpack.c.l.b16 %v1728
        %v2017 = vunpack.c.l.b16 %v1729
        %v2018 = vunpack.c.l.b16 %v1730
        %v2019 = vunpack.c.l.b16 %v1731
        %v2020 = vunpack.c.l.b16 %v1732
        %v2021 = vunpack.c.l.b16 %v1733
        %v2022 = vunpack.c.l.b16 %v1734
        %v2023 = vunpack.c.l.b16 %v1735
        %v2024 = vunpack.c.l.b16 %v1736
        %v2025 = vunpack.c.l.b16 %v1737
        %v2026 = vunpack.c.l.b16 %v1738
        %v2027 = vunpack.c.l.b16 %v1739
        %v2028 = vunpack.c.l.b16 %v1740
        %v2029 = vunpack.c.l.b16 %v1741
        %v2030 = vunpack.c.l.b16 %v1742
        %v2031 = vunpack.c.l.b16 %v1743
        %v2032 = vunpack.c.l.b16 %v1744
        %v2033 = vunpack.c.l.b16 %v1745
        %v2034 = vunpack.c.l.b16 %v1746
        %v2035 = vunpack.c.l.b16 %v1747
        %v2036 = vunpack.c.l.b16 %v1748
        %v2037 = vunpack.c.l.b16 %v1749
        %v2038 = vunpack.c.l.b16 %v1750
        %v2039 = vunpack.c.l.b16 %v1751
        %v2040 = vunpack.c.l.b16 %v1752
        %v2041 = vunpack.c.l.b16 %v1753
        %v2042 = vunpack.c.l.b16 %v1754
        %v2043 = vunpack.c.l.b16 %v1755
        %v2044 = vunpack.c.l.b16 %v1756
        %v2045 = vunpack.c.l.b16 %v1757
        %v2046 = vunpack.c.l.b16 %v1758
        %v2047 = vunpack.c.l.b16 %v1759
        %v2048 = vunpack.c.l.b16 %v1760
        %v2049 = vunpack.c.l.b16 %v1761
        %v2050 = vunpack.c.l.b16 %v1762
        %v2051 = vunpack.c.l.b16 %v1763
        %v2052 = vunpack.c.l.b16 %v1764
        %v2053 = vunpack.c.l.b16 %v1765
        %v2054 = vunpack.c.l.b16 %v1766
        %v2055 = vunpack.c.l.b16 %v1767
        %v2056 = vunpack.c.l.b16 %v1768
        %v2057 = vunpack.c.l.b16 %v1769
        %v2058 = vunpack.c.l.b16 %v1770
        %v2059 = vunpack.c.l.b16 %v1771
        %v2060 = vunpack.c.l.b16 %v1772
        %v2061 = vunpack.c.l.b16 %v1773
        %v2062 = vunpack.c.l.b16 %v1774
        %v2063 = vunpack.c.l.b16 %v1775
        %v2064 = vunpack.c.l.b16 %v1776
        %v2065 = vunpack.c.l.b16 %v1777
        %v2066 = vunpack.c.l.b16 %v1778
        %v2067 = vunpack.c.l.b16 %v1779
        %v2068 = vunpack.c.l.b16 %v1780
        %v2069 = vunpack.c.l.b16 %v1781
        %v2070 = vunpack.c.l.b16 %v1782
        %v2071 = vunpack.c.l.b16 %v1783
        %v2072 = vunpack.c.l.b16 %v1784
        %v2073 = vunpack.c.l.b16 %v1785
        %v2074 = vunpack.c.l.b16 %v1786
        %v2075 = vunpack.c.l.b16 %v1787
        %v2076 = vunpack.c.l.b16 %v1788
        %v2077 = vunpack.c.l.b16 %v1789
        %v2078 = vunpack.c.l.b16 %v1790
        %v2079 = vunpack.c.l.b16 %v1791
        %v2080 = vunpack.c.l.b16 %v1792
        %v2081 = vunpack.c.l.b16 %v1793
        %v2082 = vunpack.c.l.b16 %v1794
        %v2083 = vunpack.c.l.b16 %v1795
        %v2084 = vunpack.c.l.b16 %v1796
        %v2085 = vunpack.c.l.b16 %v1797
        %v2086 = vunpack.c.l.b16 %v1798
        %v2087 = vunpack.c.l.b16 %v1799
        %v2088 = vunpack.c.l.b16 %v1800
        %v2089 = vunpack.c.l.b16 %v1801
        %v2090 = vunpack.c.l.b16 %v1802
        %v2091 = vunpack.c.l.b16 %v1803
        %v2092 = vunpack.c.l.b16 %v1804
        %v2093 = vunpack.c.l.b16 %v1805
        %v2094 = vunpack.c.l.b16 %v1806
        %v2095 = vunpack.c.l.b16 %v1807
        %v2096 = vunpack.c.l.b16 %v1808
        %v2097 = vunpack.c.l.b16 %v1809
        %v2098 = vunpack.c.l.b16 %v1810
        %v2099 = vunpack.c.l.b16 %v1811
        %v2100 = vunpack.c.l.b16 %v1812
        %v2101 = vunpack.c.l.b16 %v1813
        %v2102 = vunpack.c.l.b16 %v1814
        %v2103 = vunpack.c.l.b16 %v1815
        %v2104 = vunpack.c.l.b16 %v1816
        %v2105 = vunpack.c.l.b16 %v1817
        %v2106 = vunpack.c.l.b16 %v1818
        %v2107 = vunpack.c.l.b16 %v1819
        %v2108 = vunpack.c.l.b16 %v1820
        %v2109 = vunpack.c.l.b16 %v1821
        %v2110 = vunpack.c.l.b16 %v1822
        %v2111 = vunpack.c.l.b16 %v1823
        %v2112 = vunpack.c.l.b16 %v1824
        %v2113 = vunpack.c.l.b16 %v1825
        %v2114 = vunpack.c.l.b16 %v1826
        %v2115 = vunpack.c.l.b16 %v1827
        %v2116 = vunpack.c.l.b16 %v1828
        %v2117 = vunpack.c.l.b16 %v1829
        %v2118 = vpack.c.b16 %v1975, %v1974
        %v2119 = vpack.c.b16 %v1977, %v1976
        %v2120 = vpack.c.b16 %v1979, %v1978
        %v2121 = vpack.c.b16 %v1981, %v1980
        %v2122 = vpack.c.b16 %v1983, %v1982
        %v2123 = vpack.c.b16 %v1985, %v1984
        %v2124 = vpack.c.b16 %v1987, %v1986
        %v2125 = vpack.c.b16 %v1989, %v1988
        %v2126 = vpack.c.b16 %v1991, %v1990
        %v2127 = vpack.c.b16 %v1993, %v1992
        %v2128 = vpack.c.b16 %v1995, %v1994
        %v2129 = vpack.c.b16 %v1997, %v1996
        %v2130 = vpack.c.b16 %v1999, %v1998
        %v2131 = vpack.c.b16 %v2001, %v2000
        %v2132 = vpack.c.b16 %v2003, %v2002
        %v2133 = vpack.c.b16 %v2005, %v2004
        %v2134 = vpack.c.b16 %v2007, %v2006
        %v2135 = vpack.c.b16 %v2009, %v2008
        %v2136 = vpack.c.b16 %v2011, %v2010
        %v2137 = vpack.c.b16 %v2013, %v2012
        %v2138 = vpack.c.b16 %v2015, %v2014
        %v2139 = vpack.c.b16 %v2017, %v2016
        %v2140 = vpack.c.b16 %v2019, %v2018
        %v2141 = vpack.c.b16 %v2021, %v2020
        %v2142 = vpack.c.b16 %v2023, %v2022
        %v2143 = vpack.c.b16 %v2025, %v2024
        %v2144 = vpack.c.b16 %v2027, %v2026
        %v2145 = vpack.c.b16 %v2029, %v2028
        %v2146 = vpack.c.b16 %v2031, %v2030
        %v2147 = vpack.c.b16 %v2033, %v2032
        %v2148 = vpack.c.b16 %v2035, %v2034
        %v2149 = vpack.c.b16 %v2037, %v2036
        %v2150 = vpack.c.b16 %v2039, %v2038
        %v2151 = vpack.c.b16 %v2041, %v2040
        %v2152 = vpack.c.b16 %v2043, %v2042
        %v2153 = vpack.c.b16 %v2045, %v2044
        %v2154 = vpack.c.b16 %v2047, %v2046
        %v2155 = vpack.c.b16 %v2049, %v2048
        %v2156 = vpack.c.b16 %v2051, %v2050
        %v2157 = vpack.c.b16 %v2053, %v2052
        %v2158 = vpack.c.b16 %v2055, %v2054
        %v2159 = vpack.c.b16 %v2057, %v2056
        %v2160 = vpack.c.b16 %v2059, %v2058
        %v2161 = vpack.c.b16 %v2061, %v2060
        %v2162 = vpack.c.b16 %v2063, %v2062
        %v2163 = vpack.c.b16 %v2065, %v2064
        %v2164 = vpack.c.b16 %v2067, %v2066
        %v2165 = vpack.c.b16 %v2069, %v2068
        %v2166 = vpack.c.b16 %v2071, %v2070
        %v2167 = vpack.c.b16 %v2073, %v2072
        %v2168 = vpack.c.b16 %v2075, %v2074
        %v2169 = vpack.c.b16 %v2077, %v2076
        %v2170 = vpack.c.b16 %v2079, %v2078
        %v2171 = vpack.c.b16 %v2081, %v2080
        %v2172 = vpack.c.b16 %v2083, %v2082
        %v2173 = vpack.c.b16 %v2085, %v2084
        %v2174 = vpack.c.b16 %v2087, %v2086
        %v2175 = vpack.c.b16 %v2089, %v2088
        %v2176 = vpack.c.b16 %v2091, %v2090
        %v2177 = vpack.c.b16 %v2093, %v2092
        %v2178 = vpack.c.b16 %v2095, %v2094
        %v2179 = vpack.c.b16 %v2097, %v2096
        %v2180 = vpack.c.b16 %v2099, %v2098
        %v2181 = vpack.c.b16 %v2101, %v2100
        %v2182 = vpack.c.b16 %v2103, %v2102
        %v2183 = vpack.c.b16 %v2105, %v2104
        %v2184 = vpack.c.b16 %v2107, %v2106
        %v2185 = vpack.c.b16 %v2109, %v2108
        %v2186 = vpack.c.b16 %v2111, %v2110
        %v2187 = vpack.c.b16 %v2113, %v2112
        %v2188 = vpack.c.b16 %v2115, %v2114
        %v2189 = vpack.c.b16 %v2117, %v2116
        %2262 = vmatprep.subr.bf16.mxu0 0
        %2263 = vmatpush1.bf16.msra.mxu0 %v2125
        %2264 = vmatprep.subr.bf16.mxu0 0
        %2265 = vmatpush1.bf16.msra.mxu0 %v2124
        %2266 = vmatprep.subr.bf16.mxu0 0
        %2267 = vmatpush1.bf16.msra.mxu0 %v2123
        %2268 = vmatprep.subr.bf16.mxu0 0
        %2269 = vmatpush1.bf16.msra.mxu0 %v2122
        %2270 = vmatprep.subr.bf16.mxu0 0
        %2271 = vmatpush1.bf16.msra.mxu0 %v2121
        %2272 = vmatprep.subr.bf16.mxu0 0
        %2273 = vmatpush1.bf16.msra.mxu0 %v2120
        %2274 = vmatprep.subr.bf16.mxu0 0
        %2275 = vmatpush1.bf16.msra.mxu0 %v2119
        %2276 = vmatprep.subr.bf16.mxu0 0
        %2277 = vmatpush1.bf16.msra.mxu0 %v2118
        %2278 = vmatprep.subr.bf16.mxu0 0
        %2279 = vmatpush2.bf16.msra.mxu0 %v2133
        %2280 = vmatprep.subr.bf16.mxu0 0
        %2281 = vmatpush2.bf16.msra.mxu0 %v2132
        %2282 = vmatprep.subr.bf16.mxu0 0
        %2283 = vmatpush2.bf16.msra.mxu0 %v2131
        %2284 = vmatprep.subr.bf16.mxu0 0
        %2285 = vmatpush2.bf16.msra.mxu0 %v2130
        %2286 = vmatprep.subr.bf16.mxu0 0
        %2287 = vmatpush2.bf16.msra.mxu0 %v2129
        %2288 = vmatprep.subr.bf16.mxu0 0
        %2289 = vmatpush2.bf16.msra.mxu0 %v2128
        %2290 = vmatprep.subr.bf16.mxu0 0
        %2291 = vmatpush2.bf16.msra.mxu0 %v2127
        %2292 = vmatprep.subr.bf16.mxu0 0
        %2293 = vmatpush2.bf16.msra.mxu0 %v2126
        %2294 = vmatprep.mubr.bf16.mxu0 %v1523
        %2295 = vmatmul.mubr.bf16.gmra.mxu0 %v1065
        %v2296 = vpop.f32.mrf.mxu0
        %v2297 = vadd.f32 0.0, %v2296
        %v2298 = vpop.f32.mrf.mxu0
        %v2299 = vpop.f32.mrf.mxu0
        %v2300 = vadd.f32 0.0, %v2299
        %v2301 = vpop.f32.mrf.mxu0
        %2302 = vmatprep.mubr.bf16.mxu0 %v1531
        %2303 = vmatmul.mubr.bf16.gmra.mxu0 %v1066
        %v2304 = vpop.f32.mrf.mxu0
        %v2305 = vadd.f32 0.0, %v2304
        %v2306 = vpop.f32.mrf.mxu0
        %v2307 = vpop.f32.mrf.mxu0
        %v2308 = vadd.f32 0.0, %v2307
        %v2309 = vpop.f32.mrf.mxu0
        %2310 = vmatprep.mubr.bf16.mxu0 %v1539
        %2311 = vmatmul.mubr.bf16.gmra.mxu0 %v1067
        %v2312 = vpop.f32.mrf.mxu0
        %v2313 = vadd.f32 0.0, %v2312
        %v2314 = vpop.f32.mrf.mxu0
        %v2315 = vpop.f32.mrf.mxu0
        %v2316 = vadd.f32 0.0, %v2315
        %v2317 = vpop.f32.mrf.mxu0
        %2318 = vmatprep.mubr.bf16.mxu0 %v1547
        %2319 = vmatmul.mubr.bf16.gmra.mxu0 %v1068
        %v2320 = vpop.f32.mrf.mxu0
        %v2321 = vadd.f32 0.0, %v2320
        %v2322 = vpop.f32.mrf.mxu0
        %v2323 = vpop.f32.mrf.mxu0
        %v2324 = vadd.f32 0.0, %v2323
        %v2325 = vpop.f32.mrf.mxu0
        %2326 = vmatprep.mubr.bf16.mxu0 %v1555
        %2327 = vmatmul.mubr.bf16.gmra.mxu0 %v1069
        %v2328 = vpop.f32.mrf.mxu0
        %v2329 = vadd.f32 0.0, %v2328
        %v2330 = vpop.f32.mrf.mxu0
        %v2331 = vpop.f32.mrf.mxu0
        %v2332 = vadd.f32 0.0, %v2331
        %v2333 = vpop.f32.mrf.mxu0
        %2334 = vmatprep.mubr.bf16.mxu0 %v1563
        %2335 = vmatmul.mubr.bf16.gmra.mxu0 %v1070
        %v2336 = vpop.f32.mrf.mxu0
        %v2337 = vadd.f32 0.0, %v2336
        %v2338 = vpop.f32.mrf.mxu0
        %v2339 = vpop.f32.mrf.mxu0
        %v2340 = vadd.f32 0.0, %v2339
        %v2341 = vpop.f32.mrf.mxu0
        %2342 = vmatprep.mubr.bf16.mxu0 %v1571
        %2343 = vmatmul.mubr.bf16.gmra.mxu0 %v1071
        %v2344 = vpop.f32.mrf.mxu0
        %v2345 = vadd.f32 0.0, %v2344
        %v2346 = vpop.f32.mrf.mxu0
        %v2347 = vpop.f32.mrf.mxu0
        %v2348 = vadd.f32 0.0, %v2347
        %v2349 = vpop.f32.mrf.mxu0
        %2350 = vmatprep.mubr.bf16.mxu0 %v1579
        %2351 = vmatmul.mubr.bf16.gmra.mxu0 %v1072
        %v2352 = vpop.f32.mrf.mxu0
        %v2353 = vadd.f32 0.0, %v2352
        %v2354 = vpop.f32.mrf.mxu0
        %v2355 = vpop.f32.mrf.mxu0
        %v2356 = vadd.f32 0.0, %v2355
        %v2357 = vpop.f32.mrf.mxu0
        %2358 = vmatprep.mubr.bf16.mxu0 %v1587
        %2359 = vmatmul.mubr.bf16.gmra.mxu0 %v1073
        %v2360 = vpop.f32.mrf.mxu0
        %v2361 = vadd.f32 0.0, %v2360
        %v2362 = vpop.f32.mrf.mxu0
        %v2363 = vpop.f32.mrf.mxu0
        %v2364 = vadd.f32 0.0, %v2363
        %v2365 = vpop.f32.mrf.mxu0
        %2366 = vmatprep.mubr.bf16.mxu0 %v1595
        %2367 = vmatmul.mubr.bf16.gmra.mxu0 %v1074
        %v2368 = vpop.f32.mrf.mxu0
        %v2369 = vadd.f32 0.0, %v2368
        %v2370 = vpop.f32.mrf.mxu0
        %v2371 = vpop.f32.mrf.mxu0
        %v2372 = vadd.f32 0.0, %v2371
        %v2373 = vpop.f32.mrf.mxu0
        %2374 = vmatprep.mubr.bf16.mxu0 %v1603
        %2375 = vmatmul.mubr.bf16.gmra.mxu0 %v1075
        %v2376 = vpop.f32.mrf.mxu0
        %v2377 = vadd.f32 0.0, %v2376
        %v2378 = vpop.f32.mrf.mxu0
        %v2379 = vpop.f32.mrf.mxu0
        %v2380 = vadd.f32 0.0, %v2379
        %v2381 = vpop.f32.mrf.mxu0
        %2382 = vmatprep.mubr.bf16.mxu0 %v1611
        %2383 = vmatmul.mubr.bf16.gmra.mxu0 %v1076
        %v2384 = vpop.f32.mrf.mxu0
        %v2385 = vadd.f32 0.0, %v2384
        %v2386 = vpop.f32.mrf.mxu0
        %v2387 = vpop.f32.mrf.mxu0
        %v2388 = vadd.f32 0.0, %v2387
        %v2389 = vpop.f32.mrf.mxu0
        %2390 = vmatprep.mubr.bf16.mxu0 %v1619
        %2391 = vmatmul.mubr.bf16.gmra.mxu0 %v1077
        %v2392 = vpop.f32.mrf.mxu0
        %v2393 = vadd.f32 0.0, %v2392
        %v2394 = vpop.f32.mrf.mxu0
        %v2395 = vpop.f32.mrf.mxu0
        %v2396 = vadd.f32 0.0, %v2395
        %v2397 = vpop.f32.mrf.mxu0
        %2398 = vmatprep.mubr.bf16.mxu0 %v1627
        %2399 = vmatmul.mubr.bf16.gmra.mxu0 %v1078
        %v2400 = vpop.f32.mrf.mxu0
        %v2401 = vadd.f32 0.0, %v2400
        %v2402 = vpop.f32.mrf.mxu0
        %v2403 = vpop.f32.mrf.mxu0
        %v2404 = vadd.f32 0.0, %v2403
        %v2405 = vpop.f32.mrf.mxu0
        %2406 = vmatprep.mubr.bf16.mxu0 %v1635
        %2407 = vmatmul.mubr.bf16.gmra.mxu0 %v1079
        %v2408 = vpop.f32.mrf.mxu0
        %v2409 = vadd.f32 0.0, %v2408
        %v2410 = vpop.f32.mrf.mxu0
        %v2411 = vpop.f32.mrf.mxu0
        %v2412 = vadd.f32 0.0, %v2411
        %v2413 = vpop.f32.mrf.mxu0
        %2414 = vmatprep.mubr.bf16.mxu0 %v1643
        %2415 = vmatmul.mubr.bf16.gmra.mxu0 %v1080
        %v2416 = vpop.f32.mrf.mxu0
        %v2417 = vadd.f32 0.0, %v2416
        %v2418 = vpop.f32.mrf.mxu0
        %v2419 = vpop.f32.mrf.mxu0
        %v2420 = vadd.f32 0.0, %v2419
        %v2421 = vpop.f32.mrf.mxu0
        %2422 = vdwg.mxu0
        %2423 = vmatprep.subr.bf16.mxu0 0
        %2424 = vmatpush1.bf16.msra.mxu0 %v2141
        %2425 = vmatprep.subr.bf16.mxu0 0
        %2426 = vmatpush1.bf16.msra.mxu0 %v2140
        %2427 = vmatprep.subr.bf16.mxu0 0
        %2428 = vmatpush1.bf16.msra.mxu0 %v2139
        %2429 = vmatprep.subr.bf16.mxu0 0
        %2430 = vmatpush1.bf16.msra.mxu0 %v2138
        %2431 = vmatprep.subr.bf16.mxu0 0
        %2432 = vmatpush1.bf16.msra.mxu0 %v2137
        %2433 = vmatprep.subr.bf16.mxu0 0
        %2434 = vmatpush1.bf16.msra.mxu0 %v2136
        %2435 = vmatprep.subr.bf16.mxu0 0
        %2436 = vmatpush1.bf16.msra.mxu0 %v2135
        %2437 = vmatprep.subr.bf16.mxu0 0
        %2438 = vmatpush1.bf16.msra.mxu0 %v2134
        %2439 = vmatprep.subr.bf16.mxu0 0
        %2440 = vmatpush2.bf16.msra.mxu0 %v2149
        %2441 = vmatprep.subr.bf16.mxu0 0
        %2442 = vmatpush2.bf16.msra.mxu0 %v2148
        %2443 = vmatprep.subr.bf16.mxu0 0
        %2444 = vmatpush2.bf16.msra.mxu0 %v2147
        %2445 = vmatprep.subr.bf16.mxu0 0
        %2446 = vmatpush2.bf16.msra.mxu0 %v2146
        %2447 = vmatprep.subr.bf16.mxu0 0
        %2448 = vmatpush2.bf16.msra.mxu0 %v2145
        %2449 = vmatprep.subr.bf16.mxu0 0
        %2450 = vmatpush2.bf16.msra.mxu0 %v2144
        %2451 = vmatprep.subr.bf16.mxu0 0
        %2452 = vmatpush2.bf16.msra.mxu0 %v2143
        %2453 = vmatprep.subr.bf16.mxu0 0
        %2454 = vmatpush2.bf16.msra.mxu0 %v2142
        %2455 = vmatprep.mubr.bf16.mxu0 %v1340
        %2456 = vmatmul.mubr.bf16.gmra.mxu0 %v1292
        %v2457 = vpop.f32.mrf.mxu0
        %v2458 = vadd.f32 %v2297, %v2457
        %v2459 = vpop.f32.mrf.mxu0
        %v2460 = vpop.f32.mrf.mxu0
        %v2461 = vadd.f32 %v2300, %v2460
        %v2462 = vpop.f32.mrf.mxu0
        %2463 = vmatprep.mubr.bf16.mxu0 %v1341
        %2464 = vmatmul.mubr.bf16.gmra.mxu0 %v1293
        %v2465 = vpop.f32.mrf.mxu0
        %v2466 = vadd.f32 %v2305, %v2465
        %v2467 = vpop.f32.mrf.mxu0
        %v2468 = vpop.f32.mrf.mxu0
        %v2469 = vadd.f32 %v2308, %v2468
        %v2470 = vpop.f32.mrf.mxu0
        %2471 = vmatprep.mubr.bf16.mxu0 %v1342
        %2472 = vmatmul.mubr.bf16.gmra.mxu0 %v1294
        %v2473 = vpop.f32.mrf.mxu0
        %v2474 = vadd.f32 %v2313, %v2473
        %v2475 = vpop.f32.mrf.mxu0
        %v2476 = vpop.f32.mrf.mxu0
        %v2477 = vadd.f32 %v2316, %v2476
        %v2478 = vpop.f32.mrf.mxu0
        %2479 = vmatprep.mubr.bf16.mxu0 %v1343
        %2480 = vmatmul.mubr.bf16.gmra.mxu0 %v1295
        %v2481 = vpop.f32.mrf.mxu0
        %v2482 = vadd.f32 %v2321, %v2481
        %v2483 = vpop.f32.mrf.mxu0
        %v2484 = vpop.f32.mrf.mxu0
        %v2485 = vadd.f32 %v2324, %v2484
        %v2486 = vpop.f32.mrf.mxu0
        %2487 = vmatprep.mubr.bf16.mxu0 %v1344
        %2488 = vmatmul.mubr.bf16.gmra.mxu0 %v1296
        %v2489 = vpop.f32.mrf.mxu0
        %v2490 = vadd.f32 %v2329, %v2489
        %v2491 = vpop.f32.mrf.mxu0
        %v2492 = vpop.f32.mrf.mxu0
        %v2493 = vadd.f32 %v2332, %v2492
        %v2494 = vpop.f32.mrf.mxu0
        %2495 = vmatprep.mubr.bf16.mxu0 %v1345
        %2496 = vmatmul.mubr.bf16.gmra.mxu0 %v1297
        %v2497 = vpop.f32.mrf.mxu0
        %v2498 = vadd.f32 %v2337, %v2497
        %v2499 = vpop.f32.mrf.mxu0
        %v2500 = vpop.f32.mrf.mxu0
        %v2501 = vadd.f32 %v2340, %v2500
        %v2502 = vpop.f32.mrf.mxu0
        %2503 = vmatprep.mubr.bf16.mxu0 %v1346
        %2504 = vmatmul.mubr.bf16.gmra.mxu0 %v1298
        %v2505 = vpop.f32.mrf.mxu0
        %v2506 = vadd.f32 %v2345, %v2505
        %v2507 = vpop.f32.mrf.mxu0
        %v2508 = vpop.f32.mrf.mxu0
        %v2509 = vadd.f32 %v2348, %v2508
        %v2510 = vpop.f32.mrf.mxu0
        %2511 = vmatprep.mubr.bf16.mxu0 %v1347
        %2512 = vmatmul.mubr.bf16.gmra.mxu0 %v1299
        %v2513 = vpop.f32.mrf.mxu0
        %v2514 = vadd.f32 %v2353, %v2513
        %v2515 = vpop.f32.mrf.mxu0
        %v2516 = vpop.f32.mrf.mxu0
        %v2517 = vadd.f32 %v2356, %v2516
        %v2518 = vpop.f32.mrf.mxu0
        %2519 = vmatprep.mubr.bf16.mxu0 %v1348
        %2520 = vmatmul.mubr.bf16.gmra.mxu0 %v1300
        %v2521 = vpop.f32.mrf.mxu0
        %v2522 = vadd.f32 %v2361, %v2521
        %v2523 = vpop.f32.mrf.mxu0
        %v2524 = vpop.f32.mrf.mxu0
        %v2525 = vadd.f32 %v2364, %v2524
        %v2526 = vpop.f32.mrf.mxu0
        %2527 = vmatprep.mubr.bf16.mxu0 %v1349
        %2528 = vmatmul.mubr.bf16.gmra.mxu0 %v1301
        %v2529 = vpop.f32.mrf.mxu0
        %v2530 = vadd.f32 %v2369, %v2529
        %v2531 = vpop.f32.mrf.mxu0
        %v2532 = vpop.f32.mrf.mxu0
        %v2533 = vadd.f32 %v2372, %v2532
        %v2534 = vpop.f32.mrf.mxu0
        %2535 = vmatprep.mubr.bf16.mxu0 %v1350
        %2536 = vmatmul.mubr.bf16.gmra.mxu0 %v1302
        %v2537 = vpop.f32.mrf.mxu0
        %v2538 = vadd.f32 %v2377, %v2537
        %v2539 = vpop.f32.mrf.mxu0
        %v2540 = vpop.f32.mrf.mxu0
        %v2541 = vadd.f32 %v2380, %v2540
        %v2542 = vpop.f32.mrf.mxu0
        %2543 = vmatprep.mubr.bf16.mxu0 %v1351
        %2544 = vmatmul.mubr.bf16.gmra.mxu0 %v1303
        %v2545 = vpop.f32.mrf.mxu0
        %v2546 = vadd.f32 %v2385, %v2545
        %v2547 = vpop.f32.mrf.mxu0
        %v2548 = vpop.f32.mrf.mxu0
        %v2549 = vadd.f32 %v2388, %v2548
        %v2550 = vpop.f32.mrf.mxu0
        %2551 = vmatprep.mubr.bf16.mxu0 %v1352
        %2552 = vmatmul.mubr.bf16.gmra.mxu0 %v1304
        %v2553 = vpop.f32.mrf.mxu0
        %v2554 = vadd.f32 %v2393, %v2553
        %v2555 = vpop.f32.mrf.mxu0
        %v2556 = vpop.f32.mrf.mxu0
        %v2557 = vadd.f32 %v2396, %v2556
        %v2558 = vpop.f32.mrf.mxu0
        %2559 = vmatprep.mubr.bf16.mxu0 %v1353
        %2560 = vmatmul.mubr.bf16.gmra.mxu0 %v1305
        %v2561 = vpop.f32.mrf.mxu0
        %v2562 = vadd.f32 %v2401, %v2561
        %v2563 = vpop.f32.mrf.mxu0
        %v2564 = vpop.f32.mrf.mxu0
        %v2565 = vadd.f32 %v2404, %v2564
        %v2566 = vpop.f32.mrf.mxu0
        %2567 = vmatprep.mubr.bf16.mxu0 %v1354
        %2568 = vmatmul.mubr.bf16.gmra.mxu0 %v1306
        %v2569 = vpop.f32.mrf.mxu0
        %v2570 = vadd.f32 %v2409, %v2569
        %v2571 = vpop.f32.mrf.mxu0
        %v2572 = vpop.f32.mrf.mxu0
        %v2573 = vadd.f32 %v2412, %v2572
        %v2574 = vpop.f32.mrf.mxu0
        %2575 = vmatprep.mubr.bf16.mxu0 %v1355
        %2576 = vmatmul.mubr.bf16.gmra.mxu0 %v1307
        %v2577 = vpop.f32.mrf.mxu0
        %v2578 = vadd.f32 %v2417, %v2577
        %v2579 = vpop.f32.mrf.mxu0
        %v2580 = vpop.f32.mrf.mxu0
        %v2581 = vadd.f32 %v2420, %v2580
        %v2582 = vpop.f32.mrf.mxu0
        %2583 = vdwg.mxu0
        %2584 = vmatprep.subr.bf16.mxu0 0
        %2585 = vmatpush1.bf16.msra.mxu0 %v2157
        %2586 = vmatprep.subr.bf16.mxu0 0
        %2587 = vmatpush1.bf16.msra.mxu0 %v2156
        %2588 = vmatprep.subr.bf16.mxu0 0
        %2589 = vmatpush1.bf16.msra.mxu0 %v2155
        %2590 = vmatprep.subr.bf16.mxu0 0
        %2591 = vmatpush1.bf16.msra.mxu0 %v2154
        %2592 = vmatprep.subr.bf16.mxu0 0
        %2593 = vmatpush1.bf16.msra.mxu0 %v2153
        %2594 = vmatprep.subr.bf16.mxu0 0
        %2595 = vmatpush1.bf16.msra.mxu0 %v2152
        %2596 = vmatprep.subr.bf16.mxu0 0
        %2597 = vmatpush1.bf16.msra.mxu0 %v2151
        %2598 = vmatprep.subr.bf16.mxu0 0
        %2599 = vmatpush1.bf16.msra.mxu0 %v2150
        %2600 = vmatprep.subr.bf16.mxu0 0
        %2601 = vmatpush2.bf16.msra.mxu0 %v2165
        %2602 = vmatprep.subr.bf16.mxu0 0
        %2603 = vmatpush2.bf16.msra.mxu0 %v2164
        %2604 = vmatprep.subr.bf16.mxu0 0
        %2605 = vmatpush2.bf16.msra.mxu0 %v2163
        %2606 = vmatprep.subr.bf16.mxu0 0
        %2607 = vmatpush2.bf16.msra.mxu0 %v2162
        %2608 = vmatprep.subr.bf16.mxu0 0
        %2609 = vmatpush2.bf16.msra.mxu0 %v2161
        %2610 = vmatprep.subr.bf16.mxu0 0
        %2611 = vmatpush2.bf16.msra.mxu0 %v2160
        %2612 = vmatprep.subr.bf16.mxu0 0
        %2613 = vmatpush2.bf16.msra.mxu0 %v2159
        %2614 = vmatprep.subr.bf16.mxu0 0
        %2615 = vmatpush2.bf16.msra.mxu0 %v2158
        %2616 = vmatprep.mubr.bf16.mxu0 %v1397
        %2617 = vmatmul.mubr.bf16.gmra.mxu0 %v1531
        %v2618 = vpop.f32.mrf.mxu0
        %v2619 = vadd.f32 %v2458, %v2618
        %v2620 = vpop.f32.mrf.mxu0
        %v2621 = vpop.f32.mrf.mxu0
        %v2622 = vadd.f32 %v2461, %v2621
        %v2623 = vpop.f32.mrf.mxu0
        %2624 = vmatprep.mubr.bf16.mxu0 %v1398
        %2625 = vmatmul.mubr.bf16.gmra.mxu0 %v1539
        %v2626 = vpop.f32.mrf.mxu0
        %v2627 = vadd.f32 %v2466, %v2626
        %v2628 = vpop.f32.mrf.mxu0
        %v2629 = vpop.f32.mrf.mxu0
        %v2630 = vadd.f32 %v2469, %v2629
        %v2631 = vpop.f32.mrf.mxu0
        %2632 = vmatprep.mubr.bf16.mxu0 %v1399
        %2633 = vmatmul.mubr.bf16.gmra.mxu0 %v1547
        %v2634 = vpop.f32.mrf.mxu0
        %v2635 = vadd.f32 %v2474, %v2634
        %v2636 = vpop.f32.mrf.mxu0
        %v2637 = vpop.f32.mrf.mxu0
        %v2638 = vadd.f32 %v2477, %v2637
        %v2639 = vpop.f32.mrf.mxu0
        %2640 = vmatprep.mubr.bf16.mxu0 %v1400
        %2641 = vmatmul.mubr.bf16.gmra.mxu0 %v1555
        %v2642 = vpop.f32.mrf.mxu0
        %v2643 = vadd.f32 %v2482, %v2642
        %v2644 = vpop.f32.mrf.mxu0
        %v2645 = vpop.f32.mrf.mxu0
        %v2646 = vadd.f32 %v2485, %v2645
        %v2647 = vpop.f32.mrf.mxu0
        %2648 = vmatprep.mubr.bf16.mxu0 %v1401
        %2649 = vmatmul.mubr.bf16.gmra.mxu0 %v1563
        %v2650 = vpop.f32.mrf.mxu0
        %v2651 = vadd.f32 %v2490, %v2650
        %v2652 = vpop.f32.mrf.mxu0
        %v2653 = vpop.f32.mrf.mxu0
        %v2654 = vadd.f32 %v2493, %v2653
        %v2655 = vpop.f32.mrf.mxu0
        %2656 = vmatprep.mubr.bf16.mxu0 %v1402
        %2657 = vmatmul.mubr.bf16.gmra.mxu0 %v1571
        %v2658 = vpop.f32.mrf.mxu0
        %v2659 = vadd.f32 %v2498, %v2658
        %v2660 = vpop.f32.mrf.mxu0
        %v2661 = vpop.f32.mrf.mxu0
        %v2662 = vadd.f32 %v2501, %v2661
        %v2663 = vpop.f32.mrf.mxu0
        %2664 = vmatprep.mubr.bf16.mxu0 %v1403
        %2665 = vmatmul.mubr.bf16.gmra.mxu0 %v1579
        %v2666 = vpop.f32.mrf.mxu0
        %v2667 = vadd.f32 %v2506, %v2666
        %v2668 = vpop.f32.mrf.mxu0
        %v2669 = vpop.f32.mrf.mxu0
        %v2670 = vadd.f32 %v2509, %v2669
        %v2671 = vpop.f32.mrf.mxu0
        %2672 = vmatprep.mubr.bf16.mxu0 %v1404
        %2673 = vmatmul.mubr.bf16.gmra.mxu0 %v1587
        %v2674 = vpop.f32.mrf.mxu0
        %v2675 = vadd.f32 %v2514, %v2674
        %v2676 = vpop.f32.mrf.mxu0
        %v2677 = vpop.f32.mrf.mxu0
        %v2678 = vadd.f32 %v2517, %v2677
        %v2679 = vpop.f32.mrf.mxu0
        %2680 = vmatprep.mubr.bf16.mxu0 %v1405
        %2681 = vmatmul.mubr.bf16.gmra.mxu0 %v1595
        %v2682 = vpop.f32.mrf.mxu0
        %v2683 = vadd.f32 %v2522, %v2682
        %v2684 = vpop.f32.mrf.mxu0
        %v2685 = vpop.f32.mrf.mxu0
        %v2686 = vadd.f32 %v2525, %v2685
        %v2687 = vpop.f32.mrf.mxu0
        %2688 = vmatprep.mubr.bf16.mxu0 %v1406
        %2689 = vmatmul.mubr.bf16.gmra.mxu0 %v1603
        %v2690 = vpop.f32.mrf.mxu0
        %v2691 = vadd.f32 %v2530, %v2690
        %v2692 = vpop.f32.mrf.mxu0
        %v2693 = vpop.f32.mrf.mxu0
        %v2694 = vadd.f32 %v2533, %v2693
        %v2695 = vpop.f32.mrf.mxu0
        %2696 = vmatprep.mubr.bf16.mxu0 %v1407
        %2697 = vmatmul.mubr.bf16.gmra.mxu0 %v1611
        %v2698 = vpop.f32.mrf.mxu0
        %v2699 = vadd.f32 %v2538, %v2698
        %v2700 = vpop.f32.mrf.mxu0
        %v2701 = vpop.f32.mrf.mxu0
        %v2702 = vadd.f32 %v2541, %v2701
        %v2703 = vpop.f32.mrf.mxu0
        %2704 = vmatprep.mubr.bf16.mxu0 %v1408
        %2705 = vmatmul.mubr.bf16.gmra.mxu0 %v1619
        %v2706 = vpop.f32.mrf.mxu0
        %v2707 = vadd.f32 %v2546, %v2706
        %v2708 = vpop.f32.mrf.mxu0
        %v2709 = vpop.f32.mrf.mxu0
        %v2710 = vadd.f32 %v2549, %v2709
        %v2711 = vpop.f32.mrf.mxu0
        %2712 = vmatprep.mubr.bf16.mxu0 %v1409
        %2713 = vmatmul.mubr.bf16.gmra.mxu0 %v1627
        %v2714 = vpop.f32.mrf.mxu0
        %v2715 = vadd.f32 %v2554, %v2714
        %v2716 = vpop.f32.mrf.mxu0
        %v2717 = vpop.f32.mrf.mxu0
        %v2718 = vadd.f32 %v2557, %v2717
        %v2719 = vpop.f32.mrf.mxu0
        %2720 = vmatprep.mubr.bf16.mxu0 %v1410
        %2721 = vmatmul.mubr.bf16.gmra.mxu0 %v1635
        %v2722 = vpop.f32.mrf.mxu0
        %v2723 = vadd.f32 %v2562, %v2722
        %v2724 = vpop.f32.mrf.mxu0
        %v2725 = vpop.f32.mrf.mxu0
        %v2726 = vadd.f32 %v2565, %v2725
        %v2727 = vpop.f32.mrf.mxu0
        %2728 = vmatprep.mubr.bf16.mxu0 %v1411
        %2729 = vmatmul.mubr.bf16.gmra.mxu0 %v1664
        %v2730 = vpop.f32.mrf.mxu0
        %v2731 = vadd.f32 %v2570, %v2730
        %v2732 = vpop.f32.mrf.mxu0
        %v2733 = vpop.f32.mrf.mxu0
        %v2734 = vadd.f32 %v2573, %v2733
        %v2735 = vpop.f32.mrf.mxu0
        %2736 = vmatprep.mubr.bf16.mxu0 %v1412
        %2737 = vmatmul.mubr.bf16.gmra.mxu0 %v1672
        %v2738 = vpop.f32.mrf.mxu0
        %v2739 = vadd.f32 %v2578, %v2738
        %v2740 = vpop.f32.mrf.mxu0
        %v2741 = vpop.f32.mrf.mxu0
        %v2742 = vadd.f32 %v2581, %v2741
        %v2743 = vpop.f32.mrf.mxu0
        %2744 = vdwg.mxu0
        %2745 = vmatprep.subr.bf16.mxu0 0
        %2746 = vmatpush1.bf16.msra.mxu0 %v2173
        %2747 = vmatprep.subr.bf16.mxu0 0
        %2748 = vmatpush1.bf16.msra.mxu0 %v2172
        %2749 = vmatprep.subr.bf16.mxu0 0
        %2750 = vmatpush1.bf16.msra.mxu0 %v2171
        %2751 = vmatprep.subr.bf16.mxu0 0
        %2752 = vmatpush1.bf16.msra.mxu0 %v2170
        %2753 = vmatprep.subr.bf16.mxu0 0
        %2754 = vmatpush1.bf16.msra.mxu0 %v2169
        %2755 = vmatprep.subr.bf16.mxu0 0
        %2756 = vmatpush1.bf16.msra.mxu0 %v2168
        %2757 = vmatprep.subr.bf16.mxu0 0
        %2758 = vmatpush1.bf16.msra.mxu0 %v2167
        %2759 = vmatprep.subr.bf16.mxu0 0
        %2760 = vmatpush1.bf16.msra.mxu0 %v2166
        %2761 = vmatprep.subr.bf16.mxu0 0
        %2762 = vmatpush2.bf16.msra.mxu0 %v2181
        %2763 = vmatprep.subr.bf16.mxu0 0
        %2764 = vmatpush2.bf16.msra.mxu0 %v2180
        %2765 = vmatprep.subr.bf16.mxu0 0
        %2766 = vmatpush2.bf16.msra.mxu0 %v2179
        %2767 = vmatprep.subr.bf16.mxu0 0
        %2768 = vmatpush2.bf16.msra.mxu0 %v2178
        %2769 = vmatprep.subr.bf16.mxu0 0
        %2770 = vmatpush2.bf16.msra.mxu0 %v2177
        %2771 = vmatprep.subr.bf16.mxu0 0
        %2772 = vmatpush2.bf16.msra.mxu0 %v2176
        %2773 = vmatprep.subr.bf16.mxu0 0
        %2774 = vmatpush2.bf16.msra.mxu0 %v2175
        %2775 = vmatprep.subr.bf16.mxu0 0
        %2776 = vmatpush2.bf16.msra.mxu0 %v2174
        %2777 = vmatprep.mubr.bf16.mxu0 %v1539
        %2778 = vmatmul.mubr.bf16.gmra.mxu0 %v1444
        %v2779 = vpop.f32.mrf.mxu0
        %v2780 = vadd.f32 %v2619, %v2779
        %v2781 = vpop.f32.mrf.mxu0
        %v2782 = vpop.f32.mrf.mxu0
        %v2783 = vadd.f32 %v2622, %v2782
        %v2784 = vpop.f32.mrf.mxu0
        %2785 = vmatprep.mubr.bf16.mxu0 %v1547
        %2786 = vmatmul.mubr.bf16.gmra.mxu0 %v1445
        %v2787 = vpop.f32.mrf.mxu0
        %v2788 = vadd.f32 %v2627, %v2787
        %v2789 = vpop.f32.mrf.mxu0
        %v2790 = vpop.f32.mrf.mxu0
        %v2791 = vadd.f32 %v2630, %v2790
        %v2792 = vpop.f32.mrf.mxu0
        %2793 = vmatprep.mubr.bf16.mxu0 %v1555
        %2794 = vmatmul.mubr.bf16.gmra.mxu0 %v1446
        %v2795 = vpop.f32.mrf.mxu0
        %v2796 = vadd.f32 %v2635, %v2795
        %v2797 = vpop.f32.mrf.mxu0
        %v2798 = vpop.f32.mrf.mxu0
        %v2799 = vadd.f32 %v2638, %v2798
        %v2800 = vpop.f32.mrf.mxu0
        %2801 = vmatprep.mubr.bf16.mxu0 %v1563
        %2802 = vmatmul.mubr.bf16.gmra.mxu0 %v1447
        %v2803 = vpop.f32.mrf.mxu0
        %v2804 = vadd.f32 %v2643, %v2803
        %v2805 = vpop.f32.mrf.mxu0
        %v2806 = vpop.f32.mrf.mxu0
        %v2807 = vadd.f32 %v2646, %v2806
        %v2808 = vpop.f32.mrf.mxu0
        %2809 = vmatprep.mubr.bf16.mxu0 %v1571
        %2810 = vmatmul.mubr.bf16.gmra.mxu0 %v1448
        %v2811 = vpop.f32.mrf.mxu0
        %v2812 = vadd.f32 %v2651, %v2811
        %v2813 = vpop.f32.mrf.mxu0
        %v2814 = vpop.f32.mrf.mxu0
        %v2815 = vadd.f32 %v2654, %v2814
        %v2816 = vpop.f32.mrf.mxu0
        %2817 = vmatprep.mubr.bf16.mxu0 %v1579
        %2818 = vmatmul.mubr.bf16.gmra.mxu0 %v1449
        %v2819 = vpop.f32.mrf.mxu0
        %v2820 = vadd.f32 %v2659, %v2819
        %v2821 = vpop.f32.mrf.mxu0
        %v2822 = vpop.f32.mrf.mxu0
        %v2823 = vadd.f32 %v2662, %v2822
        %v2824 = vpop.f32.mrf.mxu0
        %2825 = vmatprep.mubr.bf16.mxu0 %v1587
        %2826 = vmatmul.mubr.bf16.gmra.mxu0 %v1450
        %v2827 = vpop.f32.mrf.mxu0
        %v2828 = vadd.f32 %v2667, %v2827
        %v2829 = vpop.f32.mrf.mxu0
        %v2830 = vpop.f32.mrf.mxu0
        %v2831 = vadd.f32 %v2670, %v2830
        %v2832 = vpop.f32.mrf.mxu0
        %2833 = vmatprep.mubr.bf16.mxu0 %v1595
        %2834 = vmatmul.mubr.bf16.gmra.mxu0 %v1451
        %v2835 = vpop.f32.mrf.mxu0
        %v2836 = vadd.f32 %v2675, %v2835
        %v2837 = vpop.f32.mrf.mxu0
        %v2838 = vpop.f32.mrf.mxu0
        %v2839 = vadd.f32 %v2678, %v2838
        %v2840 = vpop.f32.mrf.mxu0
        %2841 = vmatprep.mubr.bf16.mxu0 %v1603
        %2842 = vmatmul.mubr.bf16.gmra.mxu0 %v1452
        %v2843 = vpop.f32.mrf.mxu0
        %v2844 = vadd.f32 %v2683, %v2843
        %v2845 = vpop.f32.mrf.mxu0
        %v2846 = vpop.f32.mrf.mxu0
        %v2847 = vadd.f32 %v2686, %v2846
        %v2848 = vpop.f32.mrf.mxu0
        %2849 = vmatprep.mubr.bf16.mxu0 %v1611
        %2850 = vmatmul.mubr.bf16.gmra.mxu0 %v1453
        %v2851 = vpop.f32.mrf.mxu0
        %v2852 = vadd.f32 %v2691, %v2851
        %v2853 = vpop.f32.mrf.mxu0
        %v2854 = vpop.f32.mrf.mxu0
        %v2855 = vadd.f32 %v2694, %v2854
        %v2856 = vpop.f32.mrf.mxu0
        %2857 = vmatprep.mubr.bf16.mxu0 %v1619
        %2858 = vmatmul.mubr.bf16.gmra.mxu0 %v1454
        %v2859 = vpop.f32.mrf.mxu0
        %v2860 = vadd.f32 %v2699, %v2859
        %v2861 = vpop.f32.mrf.mxu0
        %v2862 = vpop.f32.mrf.mxu0
        %v2863 = vadd.f32 %v2702, %v2862
        %v2864 = vpop.f32.mrf.mxu0
        %2865 = vmatprep.mubr.bf16.mxu0 %v1627
        %2866 = vmatmul.mubr.bf16.gmra.mxu0 %v1455
        %v2867 = vpop.f32.mrf.mxu0
        %v2868 = vadd.f32 %v2707, %v2867
        %v2869 = vpop.f32.mrf.mxu0
        %v2870 = vpop.f32.mrf.mxu0
        %v2871 = vadd.f32 %v2710, %v2870
        %v2872 = vpop.f32.mrf.mxu0
        %2873 = vmatprep.mubr.bf16.mxu0 %v1635
        %2874 = vmatmul.mubr.bf16.gmra.mxu0 %v1456
        %v2875 = vpop.f32.mrf.mxu0
        %v2876 = vadd.f32 %v2715, %v2875
        %v2877 = vpop.f32.mrf.mxu0
        %v2878 = vpop.f32.mrf.mxu0
        %v2879 = vadd.f32 %v2718, %v2878
        %v2880 = vpop.f32.mrf.mxu0
        %2881 = vmatprep.mubr.bf16.mxu0 %v1664
        %2882 = vmatmul.mubr.bf16.gmra.mxu0 %v1457
        %v2883 = vpop.f32.mrf.mxu0
        %v2884 = vadd.f32 %v2723, %v2883
        %v2885 = vpop.f32.mrf.mxu0
        %v2886 = vpop.f32.mrf.mxu0
        %v2887 = vadd.f32 %v2726, %v2886
        %v2888 = vpop.f32.mrf.mxu0
        %2889 = vmatprep.mubr.bf16.mxu0 %v1679
        %2890 = vmatmul.mubr.bf16.gmra.mxu0 %v1458
        %v2891 = vpop.f32.mrf.mxu0
        %v2892 = vadd.f32 %v2731, %v2891
        %v2893 = vpop.f32.mrf.mxu0
        %v2894 = vpop.f32.mrf.mxu0
        %v2895 = vadd.f32 %v2734, %v2894
        %v2896 = vpop.f32.mrf.mxu0
        %2897 = vmatprep.mubr.bf16.mxu0 %v1683
        %2898 = vmatmul.mubr.bf16.gmra.mxu0 %v1459
        %v2899 = vpop.f32.mrf.mxu0
        %v2900 = vadd.f32 %v2739, %v2899
        %v2901 = vpop.f32.mrf.mxu0
        %v2902 = vpop.f32.mrf.mxu0
        %v2903 = vadd.f32 %v2742, %v2902
        %v2904 = vpop.f32.mrf.mxu0
        %2905 = vdwg.mxu0
        %2906 = vmatprep.subr.bf16.mxu0 0
        %2907 = vmatpush1.bf16.msra.mxu0 %v2189
        %2908 = vmatprep.subr.bf16.mxu0 0
        %2909 = vmatpush1.bf16.msra.mxu0 %v2188
        %2910 = vmatprep.subr.bf16.mxu0 0
        %2911 = vmatpush1.bf16.msra.mxu0 %v2187
        %2912 = vmatprep.subr.bf16.mxu0 0
        %2913 = vmatpush1.bf16.msra.mxu0 %v2186
        %2914 = vmatprep.subr.bf16.mxu0 0
        %2915 = vmatpush1.bf16.msra.mxu0 %v2185
        %2916 = vmatprep.subr.bf16.mxu0 0
        %2917 = vmatpush1.bf16.msra.mxu0 %v2184
        %2918 = vmatprep.subr.bf16.mxu0 0
        %2919 = vmatpush1.bf16.msra.mxu0 %v2183
        %2920 = vmatprep.subr.bf16.mxu0 0
        %2921 = vmatpush1.bf16.msra.mxu0 %v2182
        %2922 = vmatprep.subr.bf16.mxu0 0
        %2923 = vmatpush2.bf16.msra.mxu0 0
        %2924 = vmatprep.subr.bf16.mxu0 0
        %2925 = vmatpush2.bf16.msra.mxu0 0
        %2926 = vmatprep.subr.bf16.mxu0 0
        %2927 = vmatpush2.bf16.msra.mxu0 0
        %2928 = vmatprep.subr.bf16.mxu0 0
        %2929 = vmatpush2.bf16.msra.mxu0 0
        %2930 = vmatprep.subr.bf16.mxu0 0
        %2931 = vmatpush2.bf16.msra.mxu0 0
        %2932 = vmatprep.subr.bf16.mxu0 0
        %2933 = vmatpush2.bf16.msra.mxu0 0
        %2934 = vmatprep.subr.bf16.mxu0 0
        %2935 = vmatpush2.bf16.msra.mxu0 0
        %2936 = vmatprep.subr.bf16.mxu0 0
        %2937 = vmatpush2.bf16.msra.mxu0 0
        %2938 = vmatprep.mubr.bf16.mxu0 0
        %2939 = vmatmul.mubr.bf16.gmra.mxu0 %v1495
        %v2940 = vpop.f32.mrf.mxu0
        %v2941 = vadd.f32 %v2780, %v2940
        %v2942 = vpop.f32.mrf.mxu0
        %v2943 = vpop.f32.mrf.mxu0
        %v2944 = vadd.f32 %v2783, %v2943
        %v2945 = vpop.f32.mrf.mxu0
        %2946 = vmatprep.mubr.bf16.mxu0 0
        %2947 = vmatmul.mubr.bf16.gmra.mxu0 %v1496
        %v2948 = vpop.f32.mrf.mxu0
        %v2949 = vadd.f32 %v2788, %v2948
        %v2950 = vpop.f32.mrf.mxu0
        %v2951 = vpop.f32.mrf.mxu0
        %v2952 = vadd.f32 %v2791, %v2951
        %v2953 = vpop.f32.mrf.mxu0
        %2954 = vmatprep.mubr.bf16.mxu0 0
        %2955 = vmatmul.mubr.bf16.gmra.mxu0 %v1497
        %v2956 = vpop.f32.mrf.mxu0
        %v2957 = vadd.f32 %v2796, %v2956
        %v2958 = vpop.f32.mrf.mxu0
        %v2959 = vpop.f32.mrf.mxu0
        %v2960 = vadd.f32 %v2799, %v2959
        %v2961 = vpop.f32.mrf.mxu0
        %2962 = vmatprep.mubr.bf16.mxu0 0
        %2963 = vmatmul.mubr.bf16.gmra.mxu0 %v1498
        %v2964 = vpop.f32.mrf.mxu0
        %v2965 = vadd.f32 %v2804, %v2964
        %v2966 = vpop.f32.mrf.mxu0
        %v2967 = vpop.f32.mrf.mxu0
        %v2968 = vadd.f32 %v2807, %v2967
        %v2969 = vpop.f32.mrf.mxu0
        %2970 = vmatprep.mubr.bf16.mxu0 0
        %2971 = vmatmul.mubr.bf16.gmra.mxu0 %v1499
        %v2972 = vpop.f32.mrf.mxu0
        %v2973 = vadd.f32 %v2812, %v2972
        %v2974 = vpop.f32.mrf.mxu0
        %v2975 = vpop.f32.mrf.mxu0
        %v2976 = vadd.f32 %v2815, %v2975
        %v2977 = vpop.f32.mrf.mxu0
        %2978 = vmatprep.mubr.bf16.mxu0 0
        %2979 = vmatmul.mubr.bf16.gmra.mxu0 %v1500
        %v2980 = vpop.f32.mrf.mxu0
        %v2981 = vadd.f32 %v2820, %v2980
        %v2982 = vpop.f32.mrf.mxu0
        %v2983 = vpop.f32.mrf.mxu0
        %v2984 = vadd.f32 %v2823, %v2983
        %v2985 = vpop.f32.mrf.mxu0
        %2986 = vmatprep.mubr.bf16.mxu0 0
        %2987 = vmatmul.mubr.bf16.gmra.mxu0 %v1501
        %v2988 = vpop.f32.mrf.mxu0
        %v2989 = vadd.f32 %v2828, %v2988
        %v2990 = vpop.f32.mrf.mxu0
        %v2991 = vpop.f32.mrf.mxu0
        %v2992 = vadd.f32 %v2831, %v2991
        %v2993 = vpop.f32.mrf.mxu0
        %2994 = vmatprep.mubr.bf16.mxu0 0
        %2995 = vmatmul.mubr.bf16.gmra.mxu0 %v1502
        %v2996 = vpop.f32.mrf.mxu0
        %v2997 = vadd.f32 %v2836, %v2996
        %v2998 = vpop.f32.mrf.mxu0
        %v2999 = vpop.f32.mrf.mxu0
        %v3000 = vadd.f32 %v2839, %v2999
        %v3001 = vpop.f32.mrf.mxu0
        %3002 = vmatprep.mubr.bf16.mxu0 0
        %3003 = vmatmul.mubr.bf16.gmra.mxu0 %v1503
        %v3004 = vpop.f32.mrf.mxu0
        %v3005 = vadd.f32 %v2844, %v3004
        %v3006 = vpop.f32.mrf.mxu0
        %v3007 = vpop.f32.mrf.mxu0
        %v3008 = vadd.f32 %v2847, %v3007
        %v3009 = vpop.f32.mrf.mxu0
        %3010 = vmatprep.mubr.bf16.mxu0 0
        %3011 = vmatmul.mubr.bf16.gmra.mxu0 %v1504
        %v3012 = vpop.f32.mrf.mxu0
        %v3013 = vadd.f32 %v2852, %v3012
        %v3014 = vpop.f32.mrf.mxu0
        %v3015 = vpop.f32.mrf.mxu0
        %v3016 = vadd.f32 %v2855, %v3015
        %v3017 = vpop.f32.mrf.mxu0
        %3018 = vmatprep.mubr.bf16.mxu0 0
        %3019 = vmatmul.mubr.bf16.gmra.mxu0 %v1505
        %v3020 = vpop.f32.mrf.mxu0
        %v3021 = vadd.f32 %v2860, %v3020
        %v3022 = vpop.f32.mrf.mxu0
        %v3023 = vpop.f32.mrf.mxu0
        %v3024 = vadd.f32 %v2863, %v3023
        %v3025 = vpop.f32.mrf.mxu0
        %3026 = vmatprep.mubr.bf16.mxu0 0
        %3027 = vmatmul.mubr.bf16.gmra.mxu0 %v1506
        %v3028 = vpop.f32.mrf.mxu0
        %v3029 = vadd.f32 %v2868, %v3028
        %v3030 = vpop.f32.mrf.mxu0
        %v3031 = vpop.f32.mrf.mxu0
        %v3032 = vadd.f32 %v2871, %v3031
        %v3033 = vpop.f32.mrf.mxu0
        %3034 = vmatprep.mubr.bf16.mxu0 0
        %3035 = vmatmul.mubr.bf16.gmra.mxu0 %v1507
        %v3036 = vpop.f32.mrf.mxu0
        %v3037 = vadd.f32 %v2876, %v3036
        %v3038 = vpop.f32.mrf.mxu0
        %v3039 = vpop.f32.mrf.mxu0
        %v3040 = vadd.f32 %v2879, %v3039
        %v3041 = vpop.f32.mrf.mxu0
        %3042 = vmatprep.mubr.bf16.mxu0 0
        %3043 = vmatmul.mubr.bf16.gmra.mxu0 %v1508
        %v3044 = vpop.f32.mrf.mxu0
        %v3045 = vadd.f32 %v2884, %v3044
        %v3046 = vpop.f32.mrf.mxu0
        %v3047 = vpop.f32.mrf.mxu0
        %v3048 = vadd.f32 %v2887, %v3047
        %v3049 = vpop.f32.mrf.mxu0
        %3050 = vmatprep.mubr.bf16.mxu0 0
        %3051 = vmatmul.mubr.bf16.gmra.mxu0 %v1509
        %v3052 = vpop.f32.mrf.mxu0
        %v3053 = vadd.f32 %v2892, %v3052
        %v3054 = vpop.f32.mrf.mxu0
        %v3055 = vpop.f32.mrf.mxu0
        %v3056 = vadd.f32 %v2895, %v3055
        %v3057 = vpop.f32.mrf.mxu0
        %3058 = vmatprep.mubr.bf16.mxu0 0
        %3059 = vmatmul.mubr.bf16.gmra.mxu0 %v1510
        %v3060 = vpop.f32.mrf.mxu0
        %v3061 = vadd.f32 %v2900, %v3060
        %v3062 = vpop.f32.mrf.mxu0
        %v3063 = vpop.f32.mrf.mxu0
        %v3064 = vadd.f32 %v2903, %v3063
        %v3065 = vpop.f32.mrf.mxu0
        %3066 = vdwg.mxu0
        %v3067 = vld [vmem:[%s2] sm:$0x1]
        %v3069 = vlaneseq
        %v3070 = vshrl.u32 %v3069, 7
        %v3071 = vsub.s32 0, %v3070
        %v3072 = vrot.slane %v3067, %v3071
        %v3074 = vmul.f32 %v2941, %v3072
        %v3075 = vmul.f32 %v2944, %v3072
        %v3076 = vmul.f32 %v2949, %v3072
        %v3077 = vmul.f32 %v2952, %v3072
        %v3078 = vmul.f32 %v2957, %v3072
        %v3079 = vmul.f32 %v2960, %v3072
        %v3080 = vmul.f32 %v2965, %v3072
        %v3081 = vmul.f32 %v2968, %v3072
        %v3082 = vmul.f32 %v2973, %v3072
        %v3083 = vmul.f32 %v2976, %v3072
        %v3084 = vmul.f32 %v2981, %v3072
        %v3085 = vmul.f32 %v2984, %v3072
        %v3086 = vmul.f32 %v2989, %v3072
        %v3087 = vmul.f32 %v2992, %v3072
        %v3088 = vmul.f32 %v2997, %v3072
        %v3089 = vmul.f32 %v3000, %v3072
        %v3090 = vmul.f32 %v3005, %v3072
        %v3091 = vmul.f32 %v3008, %v3072
        %v3092 = vmul.f32 %v3013, %v3072
        %v3093 = vmul.f32 %v3016, %v3072
        %v3094 = vmul.f32 %v3021, %v3072
        %v3095 = vmul.f32 %v3024, %v3072
        %v3096 = vmul.f32 %v3029, %v3072
        %v3097 = vmul.f32 %v3032, %v3072
        %v3098 = vmul.f32 %v3037, %v3072
        %v3099 = vmul.f32 %v3040, %v3072
        %v3100 = vmul.f32 %v3045, %v3072
        %v3101 = vmul.f32 %v3048, %v3072
        %v3102 = vmul.f32 %v3053, %v3072
        %v3103 = vmul.f32 %v3056, %v3072
        %v3104 = vmul.f32 %v3061, %v3072
        %v3105 = vmul.f32 %v3064, %v3072
        %v3106 = vld [vmem:[%s3] sm:$0x1]
        %v3108 = vlaneseq
        %v3109 = vshrl.u32 %v3108, 7
        %v3110 = vsub.s32 0, %v3109
        %v3111 = vrot.slane %v3106, %v3110
        %v3113 = vadd.f32 %v3074, %v3111
        %v3114 = vadd.f32 %v3075, %v3111
        %v3115 = vadd.f32 %v3076, %v3111
        %v3116 = vadd.f32 %v3077, %v3111
        %v3117 = vadd.f32 %v3078, %v3111
        %v3118 = vadd.f32 %v3079, %v3111
        %v3119 = vadd.f32 %v3080, %v3111
        %v3120 = vadd.f32 %v3081, %v3111
        %v3121 = vadd.f32 %v3082, %v3111
        %v3122 = vadd.f32 %v3083, %v3111
        %v3123 = vadd.f32 %v3084, %v3111
        %v3124 = vadd.f32 %v3085, %v3111
        %v3125 = vadd.f32 %v3086, %v3111
        %v3126 = vadd.f32 %v3087, %v3111
        %v3127 = vadd.f32 %v3088, %v3111
        %v3128 = vadd.f32 %v3089, %v3111
        %v3129 = vadd.f32 %v3090, %v3111
        %v3130 = vadd.f32 %v3091, %v3111
        %v3131 = vadd.f32 %v3092, %v3111
        %v3132 = vadd.f32 %v3093, %v3111
        %v3133 = vadd.f32 %v3094, %v3111
        %v3134 = vadd.f32 %v3095, %v3111
        %v3135 = vadd.f32 %v3096, %v3111
        %v3136 = vadd.f32 %v3097, %v3111
        %v3137 = vadd.f32 %v3098, %v3111
        %v3138 = vadd.f32 %v3099, %v3111
        %v3139 = vadd.f32 %v3100, %v3111
        %v3140 = vadd.f32 %v3101, %v3111
        %v3141 = vadd.f32 %v3102, %v3111
        %v3142 = vadd.f32 %v3103, %v3111
        %v3143 = vadd.f32 %v3104, %v3111
        %v3144 = vadd.f32 %v3105, %v3111
        %v3145 = vmax.f32 %v3113, 0.0
        %v3146 = vmax.f32 %v3114, 0.0
        %v3147 = vmax.f32 %v3115, 0.0
        %v3148 = vmax.f32 %v3116, 0.0
        %v3149 = vmax.f32 %v3117, 0.0
        %v3150 = vmax.f32 %v3118, 0.0
        %v3151 = vmax.f32 %v3119, 0.0
        %v3152 = vmax.f32 %v3120, 0.0
        %v3153 = vmax.f32 %v3121, 0.0
        %v3154 = vmax.f32 %v3122, 0.0
        %v3155 = vmax.f32 %v3123, 0.0
        %v3156 = vmax.f32 %v3124, 0.0
        %v3157 = vmax.f32 %v3125, 0.0
        %v3158 = vmax.f32 %v3126, 0.0
        %v3159 = vmax.f32 %v3127, 0.0
        %v3160 = vmax.f32 %v3128, 0.0
        %v3161 = vmax.f32 %v3129, 0.0
        %v3162 = vmax.f32 %v3130, 0.0
        %v3163 = vmax.f32 %v3131, 0.0
        %v3164 = vmax.f32 %v3132, 0.0
        %v3165 = vmax.f32 %v3133, 0.0
        %v3166 = vmax.f32 %v3134, 0.0
        %v3167 = vmax.f32 %v3135, 0.0
        %v3168 = vmax.f32 %v3136, 0.0
        %v3169 = vmax.f32 %v3137, 0.0
        %v3170 = vmax.f32 %v3138, 0.0
        %v3171 = vmax.f32 %v3139, 0.0
        %v3172 = vmax.f32 %v3140, 0.0
        %v3173 = vmax.f32 %v3141, 0.0
        %v3174 = vmax.f32 %v3142, 0.0
        %v3175 = vmax.f32 %v3143, 0.0
        %v3176 = vmax.f32 %v3144, 0.0
        %v3209 = vrot.slane %v3145, 7
        %v3210 = vrot.slane %v3146, 7
        %v3211 = vsel %vm872, %v3209, %v3210
        %v3212 = vrot.slane %v3147, 7
        %v3213 = vsel %vm872, %v3210, %v3212
        %v3214 = vrot.slane %v3148, 7
        %v3215 = vsel %vm872, %v3212, %v3214
        %v3216 = vrot.slane %v3149, 7
        %v3217 = vsel %vm872, %v3214, %v3216
        %v3218 = vrot.slane %v3150, 7
        %v3219 = vsel %vm872, %v3216, %v3218
        %v3220 = vrot.slane %v3151, 7
        %v3221 = vsel %vm872, %v3218, %v3220
        %v3222 = vrot.slane %v3152, 7
        %v3223 = vsel %vm872, %v3220, %v3222
        %v3224 = vrot.slane %v3153, 7
        %v3225 = vsel %vm872, %v3222, %v3224
        %v3226 = vrot.slane %v3154, 7
        %v3227 = vsel %vm872, %v3224, %v3226
        %v3228 = vrot.slane %v3155, 7
        %v3229 = vsel %vm872, %v3226, %v3228
        %v3230 = vrot.slane %v3156, 7
        %v3231 = vsel %vm872, %v3228, %v3230
        %v3232 = vrot.slane %v3157, 7
        %v3233 = vsel %vm872, %v3230, %v3232
        %v3234 = vrot.slane %v3158, 7
        %v3235 = vsel %vm872, %v3232, %v3234
        %v3236 = vrot.slane %v3159, 7
        %v3237 = vsel %vm872, %v3234, %v3236
        %v3238 = vrot.slane %v3160, 7
        %v3239 = vsel %vm872, %v3236, %v3238
        %v3240 = vrot.slane %v3161, 7
        %v3241 = vsel %vm872, %v3238, %v3240
        %v3242 = vrot.slane %v3162, 7
        %v3243 = vsel %vm872, %v3240, %v3242
        %v3244 = vrot.slane %v3163, 7
        %v3245 = vsel %vm872, %v3242, %v3244
        %v3246 = vrot.slane %v3164, 7
        %v3247 = vsel %vm872, %v3244, %v3246
        %v3248 = vrot.slane %v3165, 7
        %v3249 = vsel %vm872, %v3246, %v3248
        %v3250 = vrot.slane %v3166, 7
        %v3251 = vsel %vm872, %v3248, %v3250
        %v3252 = vrot.slane %v3167, 7
        %v3253 = vsel %vm872, %v3250, %v3252
        %v3254 = vrot.slane %v3168, 7
        %v3255 = vsel %vm872, %v3252, %v3254
        %v3256 = vrot.slane %v3169, 7
        %v3257 = vsel %vm872, %v3254, %v3256
        %v3258 = vrot.slane %v3170, 7
        %v3259 = vsel %vm872, %v3256, %v3258
        %v3260 = vrot.slane %v3171, 7
        %v3261 = vsel %vm872, %v3258, %v3260
        %v3262 = vrot.slane %v3172, 7
        %v3263 = vsel %vm872, %v3260, %v3262
        %v3264 = vrot.slane %v3173, 7
        %v3265 = vsel %vm872, %v3262, %v3264
        %v3266 = vrot.slane %v3174, 7
        %v3267 = vsel %vm872, %v3264, %v3266
        %v3268 = vrot.slane %v3175, 7
        %v3269 = vsel %vm872, %v3266, %v3268
        %v3270 = vrot.slane %v3176, 7
        %v3271 = vsel %vm872, %v3268, %v3270
        %v3305 = vsel %vm872, 0.0, %v3209
        %v3306 = vsel %vm872, %v3270, 0.0
        %v3307 = vsel %vm1005, %v3305, 0.0
        %v3308 = vsel %vm1006, %v3211, 0.0
        %v3309 = vsel %vm1007, %v3213, 0.0
        %v3310 = vsel %vm1008, %v3215, 0.0
        %v3311 = vsel %vm1009, %v3217, 0.0
        %v3312 = vsel %vm1010, %v3219, 0.0
        %v3313 = vsel %vm1011, %v3221, 0.0
        %v3314 = vsel %vm1012, %v3223, 0.0
        %v3315 = vsel %vm1013, %v3225, 0.0
        %v3316 = vsel %vm1014, %v3227, 0.0
        %v3317 = vsel %vm1015, %v3229, 0.0
        %v3318 = vsel %vm1016, %v3231, 0.0
        %v3319 = vsel %vm1017, %v3233, 0.0
        %v3320 = vsel %vm1018, %v3235, 0.0
        %v3321 = vsel %vm1019, %v3237, 0.0
        %v3322 = vsel %vm1020, %v3239, 0.0
        %v3323 = vsel %vm1021, %v3241, 0.0
        %v3324 = vsel %vm1022, %v3243, 0.0
        %v3325 = vsel %vm1023, %v3245, 0.0
        %v3326 = vsel %vm1024, %v3247, 0.0
        %v3327 = vsel %vm1025, %v3249, 0.0
        %v3328 = vsel %vm1026, %v3251, 0.0
        %v3329 = vsel %vm1027, %v3253, 0.0
        %v3330 = vsel %vm1028, %v3255, 0.0
        %v3331 = vsel %vm1029, %v3257, 0.0
        %v3332 = vsel %vm1030, %v3259, 0.0
        %v3333 = vsel %vm1031, %v3261, 0.0
        %v3334 = vsel %vm1032, %v3263, 0.0
        %v3335 = vsel %vm1033, %v3265, 0.0
        %v3336 = vsel %vm1034, %v3267, 0.0
        %v3337 = vpack.c.bf16 %v3308, %v3307
        %v3338 = vpack.c.bf16 %v3310, %v3309
        %v3339 = vpack.c.bf16 %v3312, %v3311
        %v3340 = vpack.c.bf16 %v3314, %v3313
        %v3341 = vpack.c.bf16 %v3316, %v3315
        %v3342 = vpack.c.bf16 %v3318, %v3317
        %v3343 = vpack.c.bf16 %v3320, %v3319
        %v3344 = vpack.c.bf16 %v3322, %v3321
        %v3345 = vpack.c.bf16 %v3324, %v3323
        %v3346 = vpack.c.bf16 %v3326, %v3325
        %v3347 = vpack.c.bf16 %v3328, %v3327
        %v3348 = vpack.c.bf16 %v3330, %v3329
        %v3349 = vpack.c.bf16 %v3332, %v3331
        %v3350 = vpack.c.bf16 %v3334, %v3333
        %v3351 = vpack.c.bf16 %v3336, %v3335
        %v3352 = vpack.c.bf16 %v3211, %v3305
        %v3353 = vpack.c.bf16 %v3215, %v3213
        %v3354 = vpack.c.bf16 %v3219, %v3217
        %v3355 = vpack.c.bf16 %v3223, %v3221
        %v3356 = vpack.c.bf16 %v3227, %v3225
        %v3357 = vpack.c.bf16 %v3231, %v3229
        %v3358 = vpack.c.bf16 %v3235, %v3233
        %v3359 = vpack.c.bf16 %v3239, %v3237
        %v3360 = vpack.c.bf16 %v3243, %v3241
        %v3361 = vpack.c.bf16 %v3247, %v3245
        %v3362 = vpack.c.bf16 %v3251, %v3249
        %v3363 = vpack.c.bf16 %v3255, %v3253
        %v3364 = vpack.c.bf16 %v3259, %v3257
        %v3365 = vpack.c.bf16 %v3263, %v3261
        %v3366 = vpack.c.bf16 %v3267, %v3265
        %v3367 = vpack.c.bf16 %v3269, %v3269
        %v3369 = vrot.slane %v3305, 2
        %v3370 = vsel %vm1163, %v1164, %v3369
        %v3371 = vrot.slane %v3211, 2
        %v3372 = vsel %vm1163, %v3369, %v3371
        %v3373 = vrot.slane %v3213, 2
        %v3374 = vsel %vm1163, %v3371, %v3373
        %v3375 = vrot.slane %v3215, 2
        %v3376 = vsel %vm1163, %v3373, %v3375
        %v3377 = vrot.slane %v3217, 2
        %v3378 = vsel %vm1163, %v3375, %v3377
        %v3379 = vrot.slane %v3219, 2
        %v3380 = vsel %vm1163, %v3377, %v3379
        %v3381 = vrot.slane %v3221, 2
        %v3382 = vsel %vm1163, %v3379, %v3381
        %v3383 = vrot.slane %v3223, 2
        %v3384 = vsel %vm1163, %v3381, %v3383
        %v3385 = vrot.slane %v3225, 2
        %v3386 = vsel %vm1163, %v3383, %v3385
        %v3387 = vrot.slane %v3227, 2
        %v3388 = vsel %vm1163, %v3385, %v3387
        %v3389 = vrot.slane %v3229, 2
        %v3390 = vsel %vm1163, %v3387, %v3389
        %v3391 = vrot.slane %v3231, 2
        %v3392 = vsel %vm1163, %v3389, %v3391
        %v3393 = vrot.slane %v3233, 2
        %v3394 = vsel %vm1163, %v3391, %v3393
        %v3395 = vrot.slane %v3235, 2
        %v3396 = vsel %vm1163, %v3393, %v3395
        %v3397 = vrot.slane %v3237, 2
        %v3398 = vsel %vm1163, %v3395, %v3397
        %v3399 = vrot.slane %v3239, 2
        %v3400 = vsel %vm1163, %v3397, %v3399
        %v3401 = vrot.slane %v3241, 2
        %v3402 = vsel %vm1163, %v3399, %v3401
        %v3403 = vrot.slane %v3243, 2
        %v3404 = vsel %vm1163, %v3401, %v3403
        %v3405 = vrot.slane %v3245, 2
        %v3406 = vsel %vm1163, %v3403, %v3405
        %v3407 = vrot.slane %v3247, 2
        %v3408 = vsel %vm1163, %v3405, %v3407
        %v3409 = vrot.slane %v3249, 2
        %v3410 = vsel %vm1163, %v3407, %v3409
        %v3411 = vrot.slane %v3251, 2
        %v3412 = vsel %vm1163, %v3409, %v3411
        %v3413 = vrot.slane %v3253, 2
        %v3414 = vsel %vm1163, %v3411, %v3413
        %v3415 = vrot.slane %v3255, 2
        %v3416 = vsel %vm1163, %v3413, %v3415
        %v3417 = vrot.slane %v3257, 2
        %v3418 = vsel %vm1163, %v3415, %v3417
        %v3419 = vrot.slane %v3259, 2
        %v3420 = vsel %vm1163, %v3417, %v3419
        %v3421 = vrot.slane %v3261, 2
        %v3422 = vsel %vm1163, %v3419, %v3421
        %v3423 = vrot.slane %v3263, 2
        %v3424 = vsel %vm1163, %v3421, %v3423
        %v3425 = vrot.slane %v3265, 2
        %v3426 = vsel %vm1163, %v3423, %v3425
        %v3427 = vrot.slane %v3267, 2
        %v3428 = vsel %vm1163, %v3425, %v3427
        %v3429 = vrot.slane %v3269, 2
        %v3430 = vsel %vm1163, %v3427, %v3429
        %v3462 = vsel %vm1130, %v3370, 0.0
        %v3463 = vsel %vm1131, %v3372, 0.0
        %v3464 = vsel %vm1132, %v3374, 0.0
        %v3465 = vsel %vm1133, %v3376, 0.0
        %v3466 = vsel %vm1134, %v3378, 0.0
        %v3467 = vsel %vm1135, %v3380, 0.0
        %v3468 = vsel %vm1136, %v3382, 0.0
        %v3469 = vsel %vm1137, %v3384, 0.0
        %v3470 = vsel %vm1138, %v3386, 0.0
        %v3471 = vsel %vm1139, %v3388, 0.0
        %v3472 = vsel %vm1140, %v3390, 0.0
        %v3473 = vsel %vm1141, %v3392, 0.0
        %v3474 = vsel %vm1142, %v3394, 0.0
        %v3475 = vsel %vm1143, %v3396, 0.0
        %v3476 = vsel %vm1144, %v3398, 0.0
        %v3477 = vsel %vm1145, %v3400, 0.0
        %v3478 = vsel %vm1146, %v3402, 0.0
        %v3479 = vsel %vm1147, %v3404, 0.0
        %v3480 = vsel %vm1148, %v3406, 0.0
        %v3481 = vsel %vm1149, %v3408, 0.0
        %v3482 = vsel %vm1150, %v3410, 0.0
        %v3483 = vsel %vm1151, %v3412, 0.0
        %v3484 = vsel %vm1152, %v3414, 0.0
        %v3485 = vsel %vm1153, %v3416, 0.0
        %v3486 = vsel %vm1154, %v3418, 0.0
        %v3487 = vsel %vm1155, %v3420, 0.0
        %v3488 = vsel %vm1156, %v3422, 0.0
        %v3489 = vsel %vm1157, %v3424, 0.0
        %v3490 = vsel %vm1158, %v3426, 0.0
        %v3491 = vsel %vm1159, %v3428, 0.0
        %v3492 = vsel %vm1160, %v3430, 0.0
        %v3493 = vpack.c.bf16 %v3462, %v1260
        %v3494 = vpack.c.bf16 %v3464, %v3463
        %v3495 = vpack.c.bf16 %v3466, %v3465
        %v3496 = vpack.c.bf16 %v3468, %v3467
        %v3497 = vpack.c.bf16 %v3470, %v3469
        %v3498 = vpack.c.bf16 %v3472, %v3471
        %v3499 = vpack.c.bf16 %v3474, %v3473
        %v3500 = vpack.c.bf16 %v3476, %v3475
        %v3501 = vpack.c.bf16 %v3478, %v3477
        %v3502 = vpack.c.bf16 %v3480, %v3479
        %v3503 = vpack.c.bf16 %v3482, %v3481
        %v3504 = vpack.c.bf16 %v3484, %v3483
        %v3505 = vpack.c.bf16 %v3486, %v3485
        %v3506 = vpack.c.bf16 %v3488, %v3487
        %v3507 = vpack.c.bf16 %v3490, %v3489
        %v3508 = vpack.c.bf16 %v3492, %v3491
        %v3509 = vsel %vm1003, %v3305, 0.0
        %v3510 = vsel %vm1004, %v3211, 0.0
        %v3511 = vsel %vm1005, %v3213, 0.0
        %v3512 = vsel %vm1006, %v3215, 0.0
        %v3513 = vsel %vm1007, %v3217, 0.0
        %v3514 = vsel %vm1008, %v3219, 0.0
        %v3515 = vsel %vm1009, %v3221, 0.0
        %v3516 = vsel %vm1010, %v3223, 0.0
        %v3517 = vsel %vm1011, %v3225, 0.0
        %v3518 = vsel %vm1012, %v3227, 0.0
        %v3519 = vsel %vm1013, %v3229, 0.0
        %v3520 = vsel %vm1014, %v3231, 0.0
        %v3521 = vsel %vm1015, %v3233, 0.0
        %v3522 = vsel %vm1016, %v3235, 0.0
        %v3523 = vsel %vm1017, %v3237, 0.0
        %v3524 = vsel %vm1018, %v3239, 0.0
        %v3525 = vsel %vm1019, %v3241, 0.0
        %v3526 = vsel %vm1020, %v3243, 0.0
        %v3527 = vsel %vm1021, %v3245, 0.0
        %v3528 = vsel %vm1022, %v3247, 0.0
        %v3529 = vsel %vm1023, %v3249, 0.0
        %v3530 = vsel %vm1024, %v3251, 0.0
        %v3531 = vsel %vm1025, %v3253, 0.0
        %v3532 = vsel %vm1026, %v3255, 0.0
        %v3533 = vsel %vm1027, %v3257, 0.0
        %v3534 = vsel %vm1028, %v3259, 0.0
        %v3535 = vsel %vm1029, %v3261, 0.0
        %v3536 = vsel %vm1030, %v3263, 0.0
        %v3537 = vsel %vm1031, %v3265, 0.0
        %v3538 = vsel %vm1032, %v3267, 0.0
        %v3539 = vsel %vm1033, %v3269, 0.0
        %v3540 = vsel %vm1034, %v3271, 0.0
        %v3541 = vpack.c.bf16 %v3510, %v3509
        %v3542 = vpack.c.bf16 %v3512, %v3511
        %v3543 = vpack.c.bf16 %v3514, %v3513
        %v3544 = vpack.c.bf16 %v3516, %v3515
        %v3545 = vpack.c.bf16 %v3518, %v3517
        %v3546 = vpack.c.bf16 %v3520, %v3519
        %v3547 = vpack.c.bf16 %v3522, %v3521
        %v3548 = vpack.c.bf16 %v3524, %v3523
        %v3549 = vpack.c.bf16 %v3526, %v3525
        %v3550 = vpack.c.bf16 %v3528, %v3527
        %v3551 = vpack.c.bf16 %v3530, %v3529
        %v3552 = vpack.c.bf16 %v3532, %v3531
        %v3553 = vpack.c.bf16 %v3534, %v3533
        %v3554 = vpack.c.bf16 %v3536, %v3535
        %v3555 = vpack.c.bf16 %v3538, %v3537
        %v3556 = vpack.c.bf16 %v3540, %v3539
        %v3557 = vpack.c.bf16 %v3271, %v3269
        %v3558 = vpack.c.bf16 %v3306, %v3306
        %v3560 = vrot.slane %v3271, 2
        %v3561 = vsel %vm1163, %v3429, %v3560
        %v3562 = vrot.slane %v3306, 2
        %v3563 = vsel %vm1163, %v3560, %v3562
        %v3566 = vsel %vm1129, %v3372, 0.0
        %v3567 = vsel %vm1130, %v3374, 0.0
        %v3568 = vsel %vm1131, %v3376, 0.0
        %v3569 = vsel %vm1132, %v3378, 0.0
        %v3570 = vsel %vm1133, %v3380, 0.0
        %v3571 = vsel %vm1134, %v3382, 0.0
        %v3572 = vsel %vm1135, %v3384, 0.0
        %v3573 = vsel %vm1136, %v3386, 0.0
        %v3574 = vsel %vm1137, %v3388, 0.0
        %v3575 = vsel %vm1138, %v3390, 0.0
        %v3576 = vsel %vm1139, %v3392, 0.0
        %v3577 = vsel %vm1140, %v3394, 0.0
        %v3578 = vsel %vm1141, %v3396, 0.0
        %v3579 = vsel %vm1142, %v3398, 0.0
        %v3580 = vsel %vm1143, %v3400, 0.0
        %v3581 = vsel %vm1144, %v3402, 0.0
        %v3582 = vsel %vm1145, %v3404, 0.0
        %v3583 = vsel %vm1146, %v3406, 0.0
        %v3584 = vsel %vm1147, %v3408, 0.0
        %v3585 = vsel %vm1148, %v3410, 0.0
        %v3586 = vsel %vm1149, %v3412, 0.0
        %v3587 = vsel %vm1150, %v3414, 0.0
        %v3588 = vsel %vm1151, %v3416, 0.0
        %v3589 = vsel %vm1152, %v3418, 0.0
        %v3590 = vsel %vm1153, %v3420, 0.0
        %v3591 = vsel %vm1154, %v3422, 0.0
        %v3592 = vsel %vm1155, %v3424, 0.0
        %v3593 = vsel %vm1156, %v3426, 0.0
        %v3594 = vsel %vm1157, %v3428, 0.0
        %v3595 = vsel %vm1158, %v3430, 0.0
        %v3596 = vsel %vm1159, %v3561, 0.0
        %v3597 = vsel %vm1160, %v3563, 0.0
        %v3598 = vpack.c.bf16 %v3567, %v3566
        %v3599 = vpack.c.bf16 %v3569, %v3568
        %v3600 = vpack.c.bf16 %v3571, %v3570
        %v3601 = vpack.c.bf16 %v3573, %v3572
        %v3602 = vpack.c.bf16 %v3575, %v3574
        %v3603 = vpack.c.bf16 %v3577, %v3576
        %v3604 = vpack.c.bf16 %v3579, %v3578
        %v3605 = vpack.c.bf16 %v3581, %v3580
        %v3606 = vpack.c.bf16 %v3583, %v3582
        %v3607 = vpack.c.bf16 %v3585, %v3584
        %v3608 = vpack.c.bf16 %v3587, %v3586
        %v3609 = vpack.c.bf16 %v3589, %v3588
        %v3610 = vpack.c.bf16 %v3591, %v3590
        %v3611 = vpack.c.bf16 %v3593, %v3592
        %v3612 = vpack.c.bf16 %v3595, %v3594
        %v3613 = vpack.c.bf16 %v3597, %v3596
        %v3614 = vsel %vm1003, %v3213, 0.0
        %v3615 = vsel %vm1004, %v3215, 0.0
        %v3616 = vsel %vm1005, %v3217, 0.0
        %v3617 = vsel %vm1006, %v3219, 0.0
        %v3618 = vsel %vm1007, %v3221, 0.0
        %v3619 = vsel %vm1008, %v3223, 0.0
        %v3620 = vsel %vm1009, %v3225, 0.0
        %v3621 = vsel %vm1010, %v3227, 0.0
        %v3622 = vsel %vm1011, %v3229, 0.0
        %v3623 = vsel %vm1012, %v3231, 0.0
        %v3624 = vsel %vm1013, %v3233, 0.0
        %v3625 = vsel %vm1014, %v3235, 0.0
        %v3626 = vsel %vm1015, %v3237, 0.0
        %v3627 = vsel %vm1016, %v3239, 0.0
        %v3628 = vsel %vm1017, %v3241, 0.0
        %v3629 = vsel %vm1018, %v3243, 0.0
        %v3630 = vsel %vm1019, %v3245, 0.0
        %v3631 = vsel %vm1020, %v3247, 0.0
        %v3632 = vsel %vm1021, %v3249, 0.0
        %v3633 = vsel %vm1022, %v3251, 0.0
        %v3634 = vsel %vm1023, %v3253, 0.0
        %v3635 = vsel %vm1024, %v3255, 0.0
        %v3636 = vsel %vm1025, %v3257, 0.0
        %v3637 = vsel %vm1026, %v3259, 0.0
        %v3638 = vsel %vm1027, %v3261, 0.0
        %v3639 = vsel %vm1028, %v3263, 0.0
        %v3640 = vsel %vm1029, %v3265, 0.0
        %v3641 = vsel %vm1030, %v3267, 0.0
        %v3642 = vsel %vm1031, %v3269, 0.0
        %v3643 = vsel %vm1032, %v3271, 0.0
        %v3644 = vsel %vm1033, %v3306, 0.0
        %v3645 = vpack.c.bf16 %v3615, %v3614
        %v3646 = vpack.c.bf16 %v3617, %v3616
        %v3647 = vpack.c.bf16 %v3619, %v3618
        %v3648 = vpack.c.bf16 %v3621, %v3620
        %v3649 = vpack.c.bf16 %v3623, %v3622
        %v3650 = vpack.c.bf16 %v3625, %v3624
        %v3651 = vpack.c.bf16 %v3627, %v3626
        %v3652 = vpack.c.bf16 %v3629, %v3628
        %v3653 = vpack.c.bf16 %v3631, %v3630
        %v3654 = vpack.c.bf16 %v3633, %v3632
        %v3655 = vpack.c.bf16 %v3635, %v3634
        %v3656 = vpack.c.bf16 %v3637, %v3636
        %v3657 = vpack.c.bf16 %v3639, %v3638
        %v3658 = vpack.c.bf16 %v3641, %v3640
        %v3659 = vpack.c.bf16 %v3643, %v3642
        %v3660 = vpack.c.bf16 0.0, %v3644
        %v3661 = vpack.c.bf16 0.0, %v3306
        %v3662 = vsel %vm1163, %v3562, %v1164
        %v3664 = vsel %vm1129, %v3376, 0.0
        %v3665 = vsel %vm1130, %v3378, 0.0
        %v3666 = vsel %vm1131, %v3380, 0.0
        %v3667 = vsel %vm1132, %v3382, 0.0
        %v3668 = vsel %vm1133, %v3384, 0.0
        %v3669 = vsel %vm1134, %v3386, 0.0
        %v3670 = vsel %vm1135, %v3388, 0.0
        %v3671 = vsel %vm1136, %v3390, 0.0
        %v3672 = vsel %vm1137, %v3392, 0.0
        %v3673 = vsel %vm1138, %v3394, 0.0
        %v3674 = vsel %vm1139, %v3396, 0.0
        %v3675 = vsel %vm1140, %v3398, 0.0
        %v3676 = vsel %vm1141, %v3400, 0.0
        %v3677 = vsel %vm1142, %v3402, 0.0
        %v3678 = vsel %vm1143, %v3404, 0.0
        %v3679 = vsel %vm1144, %v3406, 0.0
        %v3680 = vsel %vm1145, %v3408, 0.0
        %v3681 = vsel %vm1146, %v3410, 0.0
        %v3682 = vsel %vm1147, %v3412, 0.0
        %v3683 = vsel %vm1148, %v3414, 0.0
        %v3684 = vsel %vm1149, %v3416, 0.0
        %v3685 = vsel %vm1150, %v3418, 0.0
        %v3686 = vsel %vm1151, %v3420, 0.0
        %v3687 = vsel %vm1152, %v3422, 0.0
        %v3688 = vsel %vm1153, %v3424, 0.0
        %v3689 = vsel %vm1154, %v3426, 0.0
        %v3690 = vsel %vm1155, %v3428, 0.0
        %v3691 = vsel %vm1156, %v3430, 0.0
        %v3692 = vsel %vm1157, %v3561, 0.0
        %v3693 = vsel %vm1158, %v3563, 0.0
        %v3694 = vsel %vm1159, %v3662, 0.0
        %v3695 = vpack.c.bf16 %v3665, %v3664
        %v3696 = vpack.c.bf16 %v3667, %v3666
        %v3697 = vpack.c.bf16 %v3669, %v3668
        %v3698 = vpack.c.bf16 %v3671, %v3670
        %v3699 = vpack.c.bf16 %v3673, %v3672
        %v3700 = vpack.c.bf16 %v3675, %v3674
        %v3701 = vpack.c.bf16 %v3677, %v3676
        %v3702 = vpack.c.bf16 %v3679, %v3678
        %v3703 = vpack.c.bf16 %v3681, %v3680
        %v3704 = vpack.c.bf16 %v3683, %v3682
        %v3705 = vpack.c.bf16 %v3685, %v3684
        %v3706 = vpack.c.bf16 %v3687, %v3686
        %v3707 = vpack.c.bf16 %v3689, %v3688
        %v3708 = vpack.c.bf16 %v3691, %v3690
        %v3709 = vpack.c.bf16 %v3693, %v3692
        %v3710 = vpack.c.bf16 %v1494, %v3694
        %v3712 = vshll.u32 %v3352, 16
        %v3714 = vrot.slane %v3712, 1
        %v3715 = vsel %vm1511, %v1518, %v3714
        %v3716 = vshrl.u32 %v3352, 16
        %v3718 = vor.u32 %v3716, %v3714
        %v3720 = vshll.u32 %v3353, 16
        %v3722 = vrot.slane %v3720, 1
        %v3723 = vsel %vm1511, %v3718, %v3722
        %v3724 = vshrl.u32 %v3353, 16
        %v3726 = vor.u32 %v3724, %v3722
        %v3728 = vshll.u32 %v3354, 16
        %v3730 = vrot.slane %v3728, 1
        %v3731 = vsel %vm1511, %v3726, %v3730
        %v3732 = vshrl.u32 %v3354, 16
        %v3734 = vor.u32 %v3732, %v3730
        %v3736 = vshll.u32 %v3355, 16
        %v3738 = vrot.slane %v3736, 1
        %v3739 = vsel %vm1511, %v3734, %v3738
        %v3740 = vshrl.u32 %v3355, 16
        %v3742 = vor.u32 %v3740, %v3738
        %v3744 = vshll.u32 %v3356, 16
        %v3746 = vrot.slane %v3744, 1
        %v3747 = vsel %vm1511, %v3742, %v3746
        %v3748 = vshrl.u32 %v3356, 16
        %v3750 = vor.u32 %v3748, %v3746
        %v3752 = vshll.u32 %v3357, 16
        %v3754 = vrot.slane %v3752, 1
        %v3755 = vsel %vm1511, %v3750, %v3754
        %v3756 = vshrl.u32 %v3357, 16
        %v3758 = vor.u32 %v3756, %v3754
        %v3760 = vshll.u32 %v3358, 16
        %v3762 = vrot.slane %v3760, 1
        %v3763 = vsel %vm1511, %v3758, %v3762
        %v3764 = vshrl.u32 %v3358, 16
        %v3766 = vor.u32 %v3764, %v3762
        %v3768 = vshll.u32 %v3359, 16
        %v3770 = vrot.slane %v3768, 1
        %v3771 = vsel %vm1511, %v3766, %v3770
        %v3772 = vshrl.u32 %v3359, 16
        %v3774 = vor.u32 %v3772, %v3770
        %v3776 = vshll.u32 %v3360, 16
        %v3778 = vrot.slane %v3776, 1
        %v3779 = vsel %vm1511, %v3774, %v3778
        %v3780 = vshrl.u32 %v3360, 16
        %v3782 = vor.u32 %v3780, %v3778
        %v3784 = vshll.u32 %v3361, 16
        %v3786 = vrot.slane %v3784, 1
        %v3787 = vsel %vm1511, %v3782, %v3786
        %v3788 = vshrl.u32 %v3361, 16
        %v3790 = vor.u32 %v3788, %v3786
        %v3792 = vshll.u32 %v3362, 16
        %v3794 = vrot.slane %v3792, 1
        %v3795 = vsel %vm1511, %v3790, %v3794
        %v3796 = vshrl.u32 %v3362, 16
        %v3798 = vor.u32 %v3796, %v3794
        %v3800 = vshll.u32 %v3363, 16
        %v3802 = vrot.slane %v3800, 1
        %v3803 = vsel %vm1511, %v3798, %v3802
        %v3804 = vshrl.u32 %v3363, 16
        %v3806 = vor.u32 %v3804, %v3802
        %v3808 = vshll.u32 %v3364, 16
        %v3810 = vrot.slane %v3808, 1
        %v3811 = vsel %vm1511, %v3806, %v3810
        %v3812 = vshrl.u32 %v3364, 16
        %v3814 = vor.u32 %v3812, %v3810
        %v3816 = vshll.u32 %v3365, 16
        %v3818 = vrot.slane %v3816, 1
        %v3819 = vsel %vm1511, %v3814, %v3818
        %v3820 = vshrl.u32 %v3365, 16
        %v3822 = vor.u32 %v3820, %v3818
        %v3824 = vshll.u32 %v3366, 16
        %v3826 = vrot.slane %v3824, 1
        %v3827 = vsel %vm1511, %v3822, %v3826
        %v3828 = vshrl.u32 %v3366, 16
        %v3830 = vor.u32 %v3828, %v3826
        %v3832 = vshll.u32 %v3367, 16
        %v3834 = vrot.slane %v3832, 1
        %v3835 = vsel %vm1511, %v3830, %v3834
        %v3853 = vshll.u32 %v3557, 16
        %v3855 = vrot.slane %v3853, 1
        %v3856 = vsel %vm1511, %v3830, %v3855
        %v3857 = vshrl.u32 %v3557, 16
        %v3859 = vor.u32 %v3857, %v3855
        %v3861 = vshll.u32 %v3558, 16
        %v3863 = vrot.slane %v3861, 1
        %v3864 = vsel %vm1511, %v3859, %v3863
        %v3868 = vshll.u32 %v3661, 16
        %v3870 = vrot.slane %v3868, 1
        %v3871 = vsel %vm1511, %v3859, %v3870
        %v3872 = vshrl.u32 %v3661, 16
        %v3874 = vor.u32 %v3872, %v3870
        %v3875 = vsel %vm1511, %v3874, %v1517
        %v3878 = vld [vmem:[#allocation7] sm:$0xf]
        %v3879 = vld [vmem:[#allocation7 + $0x4] sm:$0xf]
        %v3880 = vld [vmem:[#allocation7 + $0x8] sm:$0xf]
        %v3881 = vld [vmem:[#allocation7 + $0xc] sm:$0xf]
        %v3882 = vld [vmem:[#allocation7 + $0x10] sm:$0xf]
        %v3883 = vld [vmem:[#allocation7 + $0x14] sm:$0xf]
        %v3884 = vld [vmem:[#allocation7 + $0x18] sm:$0xf]
        %v3885 = vld [vmem:[#allocation7 + $0x1c] sm:$0xf]
        %v3886 = vld [vmem:[#allocation7 + $0x20] sm:$0xf]
        %v3887 = vld [vmem:[#allocation7 + $0x24] sm:$0xf]
        %v3888 = vld [vmem:[#allocation7 + $0x28] sm:$0xf]
        %v3889 = vld [vmem:[#allocation7 + $0x2c] sm:$0xf]
        %v3890 = vld [vmem:[#allocation7 + $0x30] sm:$0xf]
        %v3891 = vld [vmem:[#allocation7 + $0x34] sm:$0xf]
        %v3892 = vld [vmem:[#allocation7 + $0x38] sm:$0xf]
        %v3893 = vld [vmem:[#allocation7 + $0x3c] sm:$0xf]
        %v3894 = vld [vmem:[#allocation7 + $0x40] sm:$0xf]
        %v3895 = vld [vmem:[#allocation7 + $0x44] sm:$0xf]
        %v3896 = vld [vmem:[#allocation7 + $0x48] sm:$0xf]
        %v3897 = vld [vmem:[#allocation7 + $0x4c] sm:$0xf]
        %v3898 = vld [vmem:[#allocation7 + $0x50] sm:$0xf]
        %v3899 = vld [vmem:[#allocation7 + $0x54] sm:$0xf]
        %v3900 = vld [vmem:[#allocation7 + $0x58] sm:$0xf]
        %v3901 = vld [vmem:[#allocation7 + $0x5c] sm:$0xf]
        %v3902 = vld [vmem:[#allocation7 + $0x60] sm:$0xf]
        %v3903 = vld [vmem:[#allocation7 + $0x64] sm:$0xf]
        %v3904 = vld [vmem:[#allocation7 + $0x68] sm:$0xf]
        %v3905 = vld [vmem:[#allocation7 + $0x6c] sm:$0xf]
        %v3906 = vld [vmem:[#allocation7 + $0x70] sm:$0xf]
        %v3907 = vld [vmem:[#allocation7 + $0x74] sm:$0xf]
        %v3908 = vld [vmem:[#allocation7 + $0x78] sm:$0xf]
        %v3909 = vld [vmem:[#allocation7 + $0x7c] sm:$0xf]
        %v3910 = vld [vmem:[#allocation7 + $0x80] sm:$0xf]
        %v3911 = vld [vmem:[#allocation7 + $0x84] sm:$0xf]
        %v3912 = vld [vmem:[#allocation7 + $0x88] sm:$0xf]
        %v3913 = vld [vmem:[#allocation7 + $0x8c] sm:$0xf]
        %v3914 = vld [vmem:[#allocation7 + $0x90] sm:$0xf]
        %v3915 = vld [vmem:[#allocation7 + $0x94] sm:$0xf]
        %v3916 = vld [vmem:[#allocation7 + $0x98] sm:$0xf]
        %v3917 = vld [vmem:[#allocation7 + $0x9c] sm:$0xf]
        %v3918 = vld [vmem:[#allocation7 + $0xa0] sm:$0xf]
        %v3919 = vld [vmem:[#allocation7 + $0xa4] sm:$0xf]
        %v3920 = vld [vmem:[#allocation7 + $0xa8] sm:$0xf]
        %v3921 = vld [vmem:[#allocation7 + $0xac] sm:$0xf]
        %v3922 = vld [vmem:[#allocation7 + $0xb0] sm:$0xf]
        %v3923 = vld [vmem:[#allocation7 + $0xb4] sm:$0xf]
        %v3924 = vld [vmem:[#allocation7 + $0xb8] sm:$0xf]
        %v3925 = vld [vmem:[#allocation7 + $0xbc] sm:$0xf]
        %v3926 = vld [vmem:[#allocation7 + $0xc0] sm:$0xf]
        %v3927 = vld [vmem:[#allocation7 + $0xc4] sm:$0xf]
        %v3928 = vld [vmem:[#allocation7 + $0xc8] sm:$0xf]
        %v3929 = vld [vmem:[#allocation7 + $0xcc] sm:$0xf]
        %v3930 = vld [vmem:[#allocation7 + $0xd0] sm:$0xf]
        %v3931 = vld [vmem:[#allocation7 + $0xd4] sm:$0xf]
        %v3932 = vld [vmem:[#allocation7 + $0xd8] sm:$0xf]
        %v3933 = vld [vmem:[#allocation7 + $0xdc] sm:$0xf]
        %v3934 = vld [vmem:[#allocation7 + $0xe0] sm:$0xf]
        %v3935 = vld [vmem:[#allocation7 + $0xe4] sm:$0xf]
        %v3936 = vld [vmem:[#allocation7 + $0xe8] sm:$0xf]
        %v3937 = vld [vmem:[#allocation7 + $0xec] sm:$0xf]
        %v3938 = vld [vmem:[#allocation7 + $0xf0] sm:$0xf]
        %v3939 = vld [vmem:[#allocation7 + $0xf4] sm:$0xf]
        %v3940 = vld [vmem:[#allocation7 + $0xf8] sm:$0xf]
        %v3941 = vld [vmem:[#allocation7 + $0xfc] sm:$0xf]
        %v3942 = vld [vmem:[#allocation7 + $0x100] sm:$0xf]
        %v3943 = vld [vmem:[#allocation7 + $0x104] sm:$0xf]
        %v3944 = vld [vmem:[#allocation7 + $0x108] sm:$0xf]
        %v3945 = vld [vmem:[#allocation7 + $0x10c] sm:$0xf]
        %v3946 = vld [vmem:[#allocation7 + $0x110] sm:$0xf]
        %v3947 = vld [vmem:[#allocation7 + $0x114] sm:$0xf]
        %v3948 = vld [vmem:[#allocation7 + $0x118] sm:$0xf]
        %v3949 = vld [vmem:[#allocation7 + $0x11c] sm:$0xf]
        %v3950 = vld [vmem:[#allocation7 + $0x120] sm:$0xf]
        %v3951 = vld [vmem:[#allocation7 + $0x124] sm:$0xf]
        %v3952 = vld [vmem:[#allocation7 + $0x128] sm:$0xf]
        %v3953 = vld [vmem:[#allocation7 + $0x12c] sm:$0xf]
        %v3954 = vld [vmem:[#allocation7 + $0x130] sm:$0xf]
        %v3955 = vld [vmem:[#allocation7 + $0x134] sm:$0xf]
        %v3956 = vld [vmem:[#allocation7 + $0x138] sm:$0xf]
        %v3957 = vld [vmem:[#allocation7 + $0x13c] sm:$0xf]
        %v3958 = vld [vmem:[#allocation7 + $0x140] sm:$0xf]
        %v3959 = vld [vmem:[#allocation7 + $0x144] sm:$0xf]
        %v3960 = vld [vmem:[#allocation7 + $0x148] sm:$0xf]
        %v3961 = vld [vmem:[#allocation7 + $0x14c] sm:$0xf]
        %v3962 = vld [vmem:[#allocation7 + $0x150] sm:$0xf]
        %v3963 = vld [vmem:[#allocation7 + $0x154] sm:$0xf]
        %v3964 = vld [vmem:[#allocation7 + $0x158] sm:$0xf]
        %v3965 = vld [vmem:[#allocation7 + $0x15c] sm:$0xf]
        %v3966 = vld [vmem:[#allocation7 + $0x160] sm:$0xf]
        %v3967 = vld [vmem:[#allocation7 + $0x164] sm:$0xf]
        %v3968 = vld [vmem:[#allocation7 + $0x168] sm:$0xf]
        %v3969 = vld [vmem:[#allocation7 + $0x16c] sm:$0xf]
        %v3970 = vld [vmem:[#allocation7 + $0x170] sm:$0xf]
        %v3971 = vld [vmem:[#allocation7 + $0x174] sm:$0xf]
        %v3972 = vld [vmem:[#allocation7 + $0x178] sm:$0xf]
        %v3973 = vld [vmem:[#allocation7 + $0x17c] sm:$0xf]
        %v3974 = vld [vmem:[#allocation7 + $0x180] sm:$0xf]
        %v3975 = vld [vmem:[#allocation7 + $0x184] sm:$0xf]
        %v3976 = vld [vmem:[#allocation7 + $0x188] sm:$0xf]
        %v3977 = vld [vmem:[#allocation7 + $0x18c] sm:$0xf]
        %v3978 = vld [vmem:[#allocation7 + $0x190] sm:$0xf]
        %v3979 = vld [vmem:[#allocation7 + $0x194] sm:$0xf]
        %v3980 = vld [vmem:[#allocation7 + $0x198] sm:$0xf]
        %v3981 = vld [vmem:[#allocation7 + $0x19c] sm:$0xf]
        %v3982 = vld [vmem:[#allocation7 + $0x1a0] sm:$0xf]
        %v3983 = vld [vmem:[#allocation7 + $0x1a4] sm:$0xf]
        %v3984 = vld [vmem:[#allocation7 + $0x1a8] sm:$0xf]
        %v3985 = vld [vmem:[#allocation7 + $0x1ac] sm:$0xf]
        %v3986 = vld [vmem:[#allocation7 + $0x1b0] sm:$0xf]
        %v3987 = vld [vmem:[#allocation7 + $0x1b4] sm:$0xf]
        %v3988 = vld [vmem:[#allocation7 + $0x1b8] sm:$0xf]
        %v3989 = vld [vmem:[#allocation7 + $0x1bc] sm:$0xf]
        %v3990 = vld [vmem:[#allocation7 + $0x1c0] sm:$0xf]
        %v3991 = vld [vmem:[#allocation7 + $0x1c4] sm:$0xf]
        %v3992 = vld [vmem:[#allocation7 + $0x1c8] sm:$0xf]
        %v3993 = vld [vmem:[#allocation7 + $0x1cc] sm:$0xf]
        %v3994 = vld [vmem:[#allocation7 + $0x1d0] sm:$0xf]
        %v3995 = vld [vmem:[#allocation7 + $0x1d4] sm:$0xf]
        %v3996 = vld [vmem:[#allocation7 + $0x1d8] sm:$0xf]
        %v3997 = vld [vmem:[#allocation7 + $0x1dc] sm:$0xf]
        %v3998 = vld [vmem:[#allocation7 + $0x1e0] sm:$0xf]
        %v3999 = vld [vmem:[#allocation7 + $0x1e4] sm:$0xf]
        %v4000 = vld [vmem:[#allocation7 + $0x1e8] sm:$0xf]
        %v4001 = vld [vmem:[#allocation7 + $0x1ec] sm:$0xf]
        %v4002 = vld [vmem:[#allocation7 + $0x1f0] sm:$0xf]
        %v4003 = vld [vmem:[#allocation7 + $0x1f4] sm:$0xf]
        %v4004 = vld [vmem:[#allocation7 + $0x1f8] sm:$0xf]
        %v4005 = vld [vmem:[#allocation7 + $0x1fc] sm:$0xf]
        %v4006 = vld [vmem:[#allocation7 + $0x200] sm:$0xf]
        %v4007 = vld [vmem:[#allocation7 + $0x204] sm:$0xf]
        %v4008 = vld [vmem:[#allocation7 + $0x208] sm:$0xf]
        %v4009 = vld [vmem:[#allocation7 + $0x20c] sm:$0xf]
        %v4010 = vld [vmem:[#allocation7 + $0x210] sm:$0xf]
        %v4011 = vld [vmem:[#allocation7 + $0x214] sm:$0xf]
        %v4012 = vld [vmem:[#allocation7 + $0x218] sm:$0xf]
        %v4013 = vld [vmem:[#allocation7 + $0x21c] sm:$0xf]
        %v4014 = vld [vmem:[#allocation7 + $0x220] sm:$0xf]
        %v4015 = vld [vmem:[#allocation7 + $0x224] sm:$0xf]
        %v4016 = vld [vmem:[#allocation7 + $0x228] sm:$0xf]
        %v4017 = vld [vmem:[#allocation7 + $0x22c] sm:$0xf]
        %v4018 = vld [vmem:[#allocation7 + $0x230] sm:$0xf]
        %v4019 = vld [vmem:[#allocation7 + $0x234] sm:$0xf]
        %v4020 = vld [vmem:[#allocation7 + $0x238] sm:$0xf]
        %v4021 = vld [vmem:[#allocation7 + $0x23c] sm:$0xf]
        %v4166 = vunpack.c.l.b16 %v3878
        %v4167 = vunpack.c.l.b16 %v3879
        %v4168 = vunpack.c.l.b16 %v3880
        %v4169 = vunpack.c.l.b16 %v3881
        %v4170 = vunpack.c.l.b16 %v3882
        %v4171 = vunpack.c.l.b16 %v3883
        %v4172 = vunpack.c.l.b16 %v3884
        %v4173 = vunpack.c.l.b16 %v3885
        %v4174 = vunpack.c.l.b16 %v3886
        %v4175 = vunpack.c.l.b16 %v3887
        %v4176 = vunpack.c.l.b16 %v3888
        %v4177 = vunpack.c.l.b16 %v3889
        %v4178 = vunpack.c.l.b16 %v3890
        %v4179 = vunpack.c.l.b16 %v3891
        %v4180 = vunpack.c.l.b16 %v3892
        %v4181 = vunpack.c.l.b16 %v3893
        %v4182 = vunpack.c.l.b16 %v3894
        %v4183 = vunpack.c.l.b16 %v3895
        %v4184 = vunpack.c.l.b16 %v3896
        %v4185 = vunpack.c.l.b16 %v3897
        %v4186 = vunpack.c.l.b16 %v3898
        %v4187 = vunpack.c.l.b16 %v3899
        %v4188 = vunpack.c.l.b16 %v3900
        %v4189 = vunpack.c.l.b16 %v3901
        %v4190 = vunpack.c.l.b16 %v3902
        %v4191 = vunpack.c.l.b16 %v3903
        %v4192 = vunpack.c.l.b16 %v3904
        %v4193 = vunpack.c.l.b16 %v3905
        %v4194 = vunpack.c.l.b16 %v3906
        %v4195 = vunpack.c.l.b16 %v3907
        %v4196 = vunpack.c.l.b16 %v3908
        %v4197 = vunpack.c.l.b16 %v3909
        %v4198 = vunpack.c.l.b16 %v3910
        %v4199 = vunpack.c.l.b16 %v3911
        %v4200 = vunpack.c.l.b16 %v3912
        %v4201 = vunpack.c.l.b16 %v3913
        %v4202 = vunpack.c.l.b16 %v3914
        %v4203 = vunpack.c.l.b16 %v3915
        %v4204 = vunpack.c.l.b16 %v3916
        %v4205 = vunpack.c.l.b16 %v3917
        %v4206 = vunpack.c.l.b16 %v3918
        %v4207 = vunpack.c.l.b16 %v3919
        %v4208 = vunpack.c.l.b16 %v3920
        %v4209 = vunpack.c.l.b16 %v3921
        %v4210 = vunpack.c.l.b16 %v3922
        %v4211 = vunpack.c.l.b16 %v3923
        %v4212 = vunpack.c.l.b16 %v3924
        %v4213 = vunpack.c.l.b16 %v3925
        %v4214 = vunpack.c.l.b16 %v3926
        %v4215 = vunpack.c.l.b16 %v3927
        %v4216 = vunpack.c.l.b16 %v3928
        %v4217 = vunpack.c.l.b16 %v3929
        %v4218 = vunpack.c.l.b16 %v3930
        %v4219 = vunpack.c.l.b16 %v3931
        %v4220 = vunpack.c.l.b16 %v3932
        %v4221 = vunpack.c.l.b16 %v3933
        %v4222 = vunpack.c.l.b16 %v3934
        %v4223 = vunpack.c.l.b16 %v3935
        %v4224 = vunpack.c.l.b16 %v3936
        %v4225 = vunpack.c.l.b16 %v3937
        %v4226 = vunpack.c.l.b16 %v3938
        %v4227 = vunpack.c.l.b16 %v3939
        %v4228 = vunpack.c.l.b16 %v3940
        %v4229 = vunpack.c.l.b16 %v3941
        %v4230 = vunpack.c.l.b16 %v3942
        %v4231 = vunpack.c.l.b16 %v3943
        %v4232 = vunpack.c.l.b16 %v3944
        %v4233 = vunpack.c.l.b16 %v3945
        %v4234 = vunpack.c.l.b16 %v3946
        %v4235 = vunpack.c.l.b16 %v3947
        %v4236 = vunpack.c.l.b16 %v3948
        %v4237 = vunpack.c.l.b16 %v3949
        %v4238 = vunpack.c.l.b16 %v3950
        %v4239 = vunpack.c.l.b16 %v3951
        %v4240 = vunpack.c.l.b16 %v3952
        %v4241 = vunpack.c.l.b16 %v3953
        %v4242 = vunpack.c.l.b16 %v3954
        %v4243 = vunpack.c.l.b16 %v3955
        %v4244 = vunpack.c.l.b16 %v3956
        %v4245 = vunpack.c.l.b16 %v3957
        %v4246 = vunpack.c.l.b16 %v3958
        %v4247 = vunpack.c.l.b16 %v3959
        %v4248 = vunpack.c.l.b16 %v3960
        %v4249 = vunpack.c.l.b16 %v3961
        %v4250 = vunpack.c.l.b16 %v3962
        %v4251 = vunpack.c.l.b16 %v3963
        %v4252 = vunpack.c.l.b16 %v3964
        %v4253 = vunpack.c.l.b16 %v3965
        %v4254 = vunpack.c.l.b16 %v3966
        %v4255 = vunpack.c.l.b16 %v3967
        %v4256 = vunpack.c.l.b16 %v3968
        %v4257 = vunpack.c.l.b16 %v3969
        %v4258 = vunpack.c.l.b16 %v3970
        %v4259 = vunpack.c.l.b16 %v3971
        %v4260 = vunpack.c.l.b16 %v3972
        %v4261 = vunpack.c.l.b16 %v3973
        %v4262 = vunpack.c.l.b16 %v3974
        %v4263 = vunpack.c.l.b16 %v3975
        %v4264 = vunpack.c.l.b16 %v3976
        %v4265 = vunpack.c.l.b16 %v3977
        %v4266 = vunpack.c.l.b16 %v3978
        %v4267 = vunpack.c.l.b16 %v3979
        %v4268 = vunpack.c.l.b16 %v3980
        %v4269 = vunpack.c.l.b16 %v3981
        %v4270 = vunpack.c.l.b16 %v3982
        %v4271 = vunpack.c.l.b16 %v3983
        %v4272 = vunpack.c.l.b16 %v3984
        %v4273 = vunpack.c.l.b16 %v3985
        %v4274 = vunpack.c.l.b16 %v3986
        %v4275 = vunpack.c.l.b16 %v3987
        %v4276 = vunpack.c.l.b16 %v3988
        %v4277 = vunpack.c.l.b16 %v3989
        %v4278 = vunpack.c.l.b16 %v3990
        %v4279 = vunpack.c.l.b16 %v3991
        %v4280 = vunpack.c.l.b16 %v3992
        %v4281 = vunpack.c.l.b16 %v3993
        %v4282 = vunpack.c.l.b16 %v3994
        %v4283 = vunpack.c.l.b16 %v3995
        %v4284 = vunpack.c.l.b16 %v3996
        %v4285 = vunpack.c.l.b16 %v3997
        %v4286 = vunpack.c.l.b16 %v3998
        %v4287 = vunpack.c.l.b16 %v3999
        %v4288 = vunpack.c.l.b16 %v4000
        %v4289 = vunpack.c.l.b16 %v4001
        %v4290 = vunpack.c.l.b16 %v4002
        %v4291 = vunpack.c.l.b16 %v4003
        %v4292 = vunpack.c.l.b16 %v4004
        %v4293 = vunpack.c.l.b16 %v4005
        %v4294 = vunpack.c.l.b16 %v4006
        %v4295 = vunpack.c.l.b16 %v4007
        %v4296 = vunpack.c.l.b16 %v4008
        %v4297 = vunpack.c.l.b16 %v4009
        %v4298 = vunpack.c.l.b16 %v4010
        %v4299 = vunpack.c.l.b16 %v4011
        %v4300 = vunpack.c.l.b16 %v4012
        %v4301 = vunpack.c.l.b16 %v4013
        %v4302 = vunpack.c.l.b16 %v4014
        %v4303 = vunpack.c.l.b16 %v4015
        %v4304 = vunpack.c.l.b16 %v4016
        %v4305 = vunpack.c.l.b16 %v4017
        %v4306 = vunpack.c.l.b16 %v4018
        %v4307 = vunpack.c.l.b16 %v4019
        %v4308 = vunpack.c.l.b16 %v4020
        %v4309 = vunpack.c.l.b16 %v4021
        %v4310 = vpack.c.b16 %v4167, %v4166
        %v4311 = vpack.c.b16 %v4169, %v4168
        %v4312 = vpack.c.b16 %v4171, %v4170
        %v4313 = vpack.c.b16 %v4173, %v4172
        %v4314 = vpack.c.b16 %v4175, %v4174
        %v4315 = vpack.c.b16 %v4177, %v4176
        %v4316 = vpack.c.b16 %v4179, %v4178
        %v4317 = vpack.c.b16 %v4181, %v4180
        %v4318 = vpack.c.b16 %v4183, %v4182
        %v4319 = vpack.c.b16 %v4185, %v4184
        %v4320 = vpack.c.b16 %v4187, %v4186
        %v4321 = vpack.c.b16 %v4189, %v4188
        %v4322 = vpack.c.b16 %v4191, %v4190
        %v4323 = vpack.c.b16 %v4193, %v4192
        %v4324 = vpack.c.b16 %v4195, %v4194
        %v4325 = vpack.c.b16 %v4197, %v4196
        %v4326 = vpack.c.b16 %v4199, %v4198
        %v4327 = vpack.c.b16 %v4201, %v4200
        %v4328 = vpack.c.b16 %v4203, %v4202
        %v4329 = vpack.c.b16 %v4205, %v4204
        %v4330 = vpack.c.b16 %v4207, %v4206
        %v4331 = vpack.c.b16 %v4209, %v4208
        %v4332 = vpack.c.b16 %v4211, %v4210
        %v4333 = vpack.c.b16 %v4213, %v4212
        %v4334 = vpack.c.b16 %v4215, %v4214
        %v4335 = vpack.c.b16 %v4217, %v4216
        %v4336 = vpack.c.b16 %v4219, %v4218
        %v4337 = vpack.c.b16 %v4221, %v4220
        %v4338 = vpack.c.b16 %v4223, %v4222
        %v4339 = vpack.c.b16 %v4225, %v4224
        %v4340 = vpack.c.b16 %v4227, %v4226
        %v4341 = vpack.c.b16 %v4229, %v4228
        %v4342 = vpack.c.b16 %v4231, %v4230
        %v4343 = vpack.c.b16 %v4233, %v4232
        %v4344 = vpack.c.b16 %v4235, %v4234
        %v4345 = vpack.c.b16 %v4237, %v4236
        %v4346 = vpack.c.b16 %v4239, %v4238
        %v4347 = vpack.c.b16 %v4241, %v4240
        %v4348 = vpack.c.b16 %v4243, %v4242
        %v4349 = vpack.c.b16 %v4245, %v4244
        %v4350 = vpack.c.b16 %v4247, %v4246
        %v4351 = vpack.c.b16 %v4249, %v4248
        %v4352 = vpack.c.b16 %v4251, %v4250
        %v4353 = vpack.c.b16 %v4253, %v4252
        %v4354 = vpack.c.b16 %v4255, %v4254
        %v4355 = vpack.c.b16 %v4257, %v4256
        %v4356 = vpack.c.b16 %v4259, %v4258
        %v4357 = vpack.c.b16 %v4261, %v4260
        %v4358 = vpack.c.b16 %v4263, %v4262
        %v4359 = vpack.c.b16 %v4265, %v4264
        %v4360 = vpack.c.b16 %v4267, %v4266
        %v4361 = vpack.c.b16 %v4269, %v4268
        %v4362 = vpack.c.b16 %v4271, %v4270
        %v4363 = vpack.c.b16 %v4273, %v4272
        %v4364 = vpack.c.b16 %v4275, %v4274
        %v4365 = vpack.c.b16 %v4277, %v4276
        %v4366 = vpack.c.b16 %v4279, %v4278
        %v4367 = vpack.c.b16 %v4281, %v4280
        %v4368 = vpack.c.b16 %v4283, %v4282
        %v4369 = vpack.c.b16 %v4285, %v4284
        %v4370 = vpack.c.b16 %v4287, %v4286
        %v4371 = vpack.c.b16 %v4289, %v4288
        %v4372 = vpack.c.b16 %v4291, %v4290
        %v4373 = vpack.c.b16 %v4293, %v4292
        %v4374 = vpack.c.b16 %v4295, %v4294
        %v4375 = vpack.c.b16 %v4297, %v4296
        %v4376 = vpack.c.b16 %v4299, %v4298
        %v4377 = vpack.c.b16 %v4301, %v4300
        %v4378 = vpack.c.b16 %v4303, %v4302
        %v4379 = vpack.c.b16 %v4305, %v4304
        %v4380 = vpack.c.b16 %v4307, %v4306
        %v4381 = vpack.c.b16 %v4309, %v4308
        %4454 = vmatprep.subr.bf16.mxu0 0
        %4455 = vmatpush1.bf16.msra.mxu0 %v4317
        %4456 = vmatprep.subr.bf16.mxu0 0
        %4457 = vmatpush1.bf16.msra.mxu0 %v4316
        %4458 = vmatprep.subr.bf16.mxu0 0
        %4459 = vmatpush1.bf16.msra.mxu0 %v4315
        %4460 = vmatprep.subr.bf16.mxu0 0
        %4461 = vmatpush1.bf16.msra.mxu0 %v4314
        %4462 = vmatprep.subr.bf16.mxu0 0
        %4463 = vmatpush1.bf16.msra.mxu0 %v4313
        %4464 = vmatprep.subr.bf16.mxu0 0
        %4465 = vmatpush1.bf16.msra.mxu0 %v4312
        %4466 = vmatprep.subr.bf16.mxu0 0
        %4467 = vmatpush1.bf16.msra.mxu0 %v4311
        %4468 = vmatprep.subr.bf16.mxu0 0
        %4469 = vmatpush1.bf16.msra.mxu0 %v4310
        %4470 = vmatprep.subr.bf16.mxu0 0
        %4471 = vmatpush2.bf16.msra.mxu0 %v4325
        %4472 = vmatprep.subr.bf16.mxu0 0
        %4473 = vmatpush2.bf16.msra.mxu0 %v4324
        %4474 = vmatprep.subr.bf16.mxu0 0
        %4475 = vmatpush2.bf16.msra.mxu0 %v4323
        %4476 = vmatprep.subr.bf16.mxu0 0
        %4477 = vmatpush2.bf16.msra.mxu0 %v4322
        %4478 = vmatprep.subr.bf16.mxu0 0
        %4479 = vmatpush2.bf16.msra.mxu0 %v4321
        %4480 = vmatprep.subr.bf16.mxu0 0
        %4481 = vmatpush2.bf16.msra.mxu0 %v4320
        %4482 = vmatprep.subr.bf16.mxu0 0
        %4483 = vmatpush2.bf16.msra.mxu0 %v4319
        %4484 = vmatprep.subr.bf16.mxu0 0
        %4485 = vmatpush2.bf16.msra.mxu0 %v4318
        %4486 = vmatprep.mubr.bf16.mxu0 %v3715
        %4487 = vmatmul.mubr.bf16.gmra.mxu0 %v1065
        %v4488 = vpop.f32.mrf.mxu0
        %v4489 = vadd.f32 0.0, %v4488
        %v4490 = vpop.f32.mrf.mxu0
        %v4491 = vpop.f32.mrf.mxu0
        %v4492 = vadd.f32 0.0, %v4491
        %v4493 = vpop.f32.mrf.mxu0
        %4494 = vmatprep.mubr.bf16.mxu0 %v3723
        %4495 = vmatmul.mubr.bf16.gmra.mxu0 %v3337
        %v4496 = vpop.f32.mrf.mxu0
        %v4497 = vadd.f32 0.0, %v4496
        %v4498 = vpop.f32.mrf.mxu0
        %v4499 = vpop.f32.mrf.mxu0
        %v4500 = vadd.f32 0.0, %v4499
        %v4501 = vpop.f32.mrf.mxu0
        %4502 = vmatprep.mubr.bf16.mxu0 %v3731
        %4503 = vmatmul.mubr.bf16.gmra.mxu0 %v3338
        %v4504 = vpop.f32.mrf.mxu0
        %v4505 = vadd.f32 0.0, %v4504
        %v4506 = vpop.f32.mrf.mxu0
        %v4507 = vpop.f32.mrf.mxu0
        %v4508 = vadd.f32 0.0, %v4507
        %v4509 = vpop.f32.mrf.mxu0
        %4510 = vmatprep.mubr.bf16.mxu0 %v3739
        %4511 = vmatmul.mubr.bf16.gmra.mxu0 %v3339
        %v4512 = vpop.f32.mrf.mxu0
        %v4513 = vadd.f32 0.0, %v4512
        %v4514 = vpop.f32.mrf.mxu0
        %v4515 = vpop.f32.mrf.mxu0
        %v4516 = vadd.f32 0.0, %v4515
        %v4517 = vpop.f32.mrf.mxu0
        %4518 = vmatprep.mubr.bf16.mxu0 %v3747
        %4519 = vmatmul.mubr.bf16.gmra.mxu0 %v3340
        %v4520 = vpop.f32.mrf.mxu0
        %v4521 = vadd.f32 0.0, %v4520
        %v4522 = vpop.f32.mrf.mxu0
        %v4523 = vpop.f32.mrf.mxu0
        %v4524 = vadd.f32 0.0, %v4523
        %v4525 = vpop.f32.mrf.mxu0
        %4526 = vmatprep.mubr.bf16.mxu0 %v3755
        %4527 = vmatmul.mubr.bf16.gmra.mxu0 %v3341
        %v4528 = vpop.f32.mrf.mxu0
        %v4529 = vadd.f32 0.0, %v4528
        %v4530 = vpop.f32.mrf.mxu0
        %v4531 = vpop.f32.mrf.mxu0
        %v4532 = vadd.f32 0.0, %v4531
        %v4533 = vpop.f32.mrf.mxu0
        %4534 = vmatprep.mubr.bf16.mxu0 %v3763
        %4535 = vmatmul.mubr.bf16.gmra.mxu0 %v3342
        %v4536 = vpop.f32.mrf.mxu0
        %v4537 = vadd.f32 0.0, %v4536
        %v4538 = vpop.f32.mrf.mxu0
        %v4539 = vpop.f32.mrf.mxu0
        %v4540 = vadd.f32 0.0, %v4539
        %v4541 = vpop.f32.mrf.mxu0
        %4542 = vmatprep.mubr.bf16.mxu0 %v3771
        %4543 = vmatmul.mubr.bf16.gmra.mxu0 %v3343
        %v4544 = vpop.f32.mrf.mxu0
        %v4545 = vadd.f32 0.0, %v4544
        %v4546 = vpop.f32.mrf.mxu0
        %v4547 = vpop.f32.mrf.mxu0
        %v4548 = vadd.f32 0.0, %v4547
        %v4549 = vpop.f32.mrf.mxu0
        %4550 = vmatprep.mubr.bf16.mxu0 %v3779
        %4551 = vmatmul.mubr.bf16.gmra.mxu0 %v3344
        %v4552 = vpop.f32.mrf.mxu0
        %v4553 = vadd.f32 0.0, %v4552
        %v4554 = vpop.f32.mrf.mxu0
        %v4555 = vpop.f32.mrf.mxu0
        %v4556 = vadd.f32 0.0, %v4555
        %v4557 = vpop.f32.mrf.mxu0
        %4558 = vmatprep.mubr.bf16.mxu0 %v3787
        %4559 = vmatmul.mubr.bf16.gmra.mxu0 %v3345
        %v4560 = vpop.f32.mrf.mxu0
        %v4561 = vadd.f32 0.0, %v4560
        %v4562 = vpop.f32.mrf.mxu0
        %v4563 = vpop.f32.mrf.mxu0
        %v4564 = vadd.f32 0.0, %v4563
        %v4565 = vpop.f32.mrf.mxu0
        %4566 = vmatprep.mubr.bf16.mxu0 %v3795
        %4567 = vmatmul.mubr.bf16.gmra.mxu0 %v3346
        %v4568 = vpop.f32.mrf.mxu0
        %v4569 = vadd.f32 0.0, %v4568
        %v4570 = vpop.f32.mrf.mxu0
        %v4571 = vpop.f32.mrf.mxu0
        %v4572 = vadd.f32 0.0, %v4571
        %v4573 = vpop.f32.mrf.mxu0
        %4574 = vmatprep.mubr.bf16.mxu0 %v3803
        %4575 = vmatmul.mubr.bf16.gmra.mxu0 %v3347
        %v4576 = vpop.f32.mrf.mxu0
        %v4577 = vadd.f32 0.0, %v4576
        %v4578 = vpop.f32.mrf.mxu0
        %v4579 = vpop.f32.mrf.mxu0
        %v4580 = vadd.f32 0.0, %v4579
        %v4581 = vpop.f32.mrf.mxu0
        %4582 = vmatprep.mubr.bf16.mxu0 %v3811
        %4583 = vmatmul.mubr.bf16.gmra.mxu0 %v3348
        %v4584 = vpop.f32.mrf.mxu0
        %v4585 = vadd.f32 0.0, %v4584
        %v4586 = vpop.f32.mrf.mxu0
        %v4587 = vpop.f32.mrf.mxu0
        %v4588 = vadd.f32 0.0, %v4587
        %v4589 = vpop.f32.mrf.mxu0
        %4590 = vmatprep.mubr.bf16.mxu0 %v3819
        %4591 = vmatmul.mubr.bf16.gmra.mxu0 %v3349
        %v4592 = vpop.f32.mrf.mxu0
        %v4593 = vadd.f32 0.0, %v4592
        %v4594 = vpop.f32.mrf.mxu0
        %v4595 = vpop.f32.mrf.mxu0
        %v4596 = vadd.f32 0.0, %v4595
        %v4597 = vpop.f32.mrf.mxu0
        %4598 = vmatprep.mubr.bf16.mxu0 %v3827
        %4599 = vmatmul.mubr.bf16.gmra.mxu0 %v3350
        %v4600 = vpop.f32.mrf.mxu0
        %v4601 = vadd.f32 0.0, %v4600
        %v4602 = vpop.f32.mrf.mxu0
        %v4603 = vpop.f32.mrf.mxu0
        %v4604 = vadd.f32 0.0, %v4603
        %v4605 = vpop.f32.mrf.mxu0
        %4606 = vmatprep.mubr.bf16.mxu0 %v3835
        %4607 = vmatmul.mubr.bf16.gmra.mxu0 %v3351
        %v4608 = vpop.f32.mrf.mxu0
        %v4609 = vadd.f32 0.0, %v4608
        %v4610 = vpop.f32.mrf.mxu0
        %v4611 = vpop.f32.mrf.mxu0
        %v4612 = vadd.f32 0.0, %v4611
        %v4613 = vpop.f32.mrf.mxu0
        %4614 = vdwg.mxu0
        %4615 = vmatprep.subr.bf16.mxu0 0
        %4616 = vmatpush1.bf16.msra.mxu0 %v4333
        %4617 = vmatprep.subr.bf16.mxu0 0
        %4618 = vmatpush1.bf16.msra.mxu0 %v4332
        %4619 = vmatprep.subr.bf16.mxu0 0
        %4620 = vmatpush1.bf16.msra.mxu0 %v4331
        %4621 = vmatprep.subr.bf16.mxu0 0
        %4622 = vmatpush1.bf16.msra.mxu0 %v4330
        %4623 = vmatprep.subr.bf16.mxu0 0
        %4624 = vmatpush1.bf16.msra.mxu0 %v4329
        %4625 = vmatprep.subr.bf16.mxu0 0
        %4626 = vmatpush1.bf16.msra.mxu0 %v4328
        %4627 = vmatprep.subr.bf16.mxu0 0
        %4628 = vmatpush1.bf16.msra.mxu0 %v4327
        %4629 = vmatprep.subr.bf16.mxu0 0
        %4630 = vmatpush1.bf16.msra.mxu0 %v4326
        %4631 = vmatprep.subr.bf16.mxu0 0
        %4632 = vmatpush2.bf16.msra.mxu0 %v4341
        %4633 = vmatprep.subr.bf16.mxu0 0
        %4634 = vmatpush2.bf16.msra.mxu0 %v4340
        %4635 = vmatprep.subr.bf16.mxu0 0
        %4636 = vmatpush2.bf16.msra.mxu0 %v4339
        %4637 = vmatprep.subr.bf16.mxu0 0
        %4638 = vmatpush2.bf16.msra.mxu0 %v4338
        %4639 = vmatprep.subr.bf16.mxu0 0
        %4640 = vmatpush2.bf16.msra.mxu0 %v4337
        %4641 = vmatprep.subr.bf16.mxu0 0
        %4642 = vmatpush2.bf16.msra.mxu0 %v4336
        %4643 = vmatprep.subr.bf16.mxu0 0
        %4644 = vmatpush2.bf16.msra.mxu0 %v4335
        %4645 = vmatprep.subr.bf16.mxu0 0
        %4646 = vmatpush2.bf16.msra.mxu0 %v4334
        %4647 = vmatprep.mubr.bf16.mxu0 %v3541
        %4648 = vmatmul.mubr.bf16.gmra.mxu0 %v3493
        %v4649 = vpop.f32.mrf.mxu0
        %v4650 = vadd.f32 %v4489, %v4649
        %v4651 = vpop.f32.mrf.mxu0
        %v4652 = vpop.f32.mrf.mxu0
        %v4653 = vadd.f32 %v4492, %v4652
        %v4654 = vpop.f32.mrf.mxu0
        %4655 = vmatprep.mubr.bf16.mxu0 %v3542
        %4656 = vmatmul.mubr.bf16.gmra.mxu0 %v3494
        %v4657 = vpop.f32.mrf.mxu0
        %v4658 = vadd.f32 %v4497, %v4657
        %v4659 = vpop.f32.mrf.mxu0
        %v4660 = vpop.f32.mrf.mxu0
        %v4661 = vadd.f32 %v4500, %v4660
        %v4662 = vpop.f32.mrf.mxu0
        %4663 = vmatprep.mubr.bf16.mxu0 %v3543
        %4664 = vmatmul.mubr.bf16.gmra.mxu0 %v3495
        %v4665 = vpop.f32.mrf.mxu0
        %v4666 = vadd.f32 %v4505, %v4665
        %v4667 = vpop.f32.mrf.mxu0
        %v4668 = vpop.f32.mrf.mxu0
        %v4669 = vadd.f32 %v4508, %v4668
        %v4670 = vpop.f32.mrf.mxu0
        %4671 = vmatprep.mubr.bf16.mxu0 %v3544
        %4672 = vmatmul.mubr.bf16.gmra.mxu0 %v3496
        %v4673 = vpop.f32.mrf.mxu0
        %v4674 = vadd.f32 %v4513, %v4673
        %v4675 = vpop.f32.mrf.mxu0
        %v4676 = vpop.f32.mrf.mxu0
        %v4677 = vadd.f32 %v4516, %v4676
        %v4678 = vpop.f32.mrf.mxu0
        %4679 = vmatprep.mubr.bf16.mxu0 %v3545
        %4680 = vmatmul.mubr.bf16.gmra.mxu0 %v3497
        %v4681 = vpop.f32.mrf.mxu0
        %v4682 = vadd.f32 %v4521, %v4681
        %v4683 = vpop.f32.mrf.mxu0
        %v4684 = vpop.f32.mrf.mxu0
        %v4685 = vadd.f32 %v4524, %v4684
        %v4686 = vpop.f32.mrf.mxu0
        %4687 = vmatprep.mubr.bf16.mxu0 %v3546
        %4688 = vmatmul.mubr.bf16.gmra.mxu0 %v3498
        %v4689 = vpop.f32.mrf.mxu0
        %v4690 = vadd.f32 %v4529, %v4689
        %v4691 = vpop.f32.mrf.mxu0
        %v4692 = vpop.f32.mrf.mxu0
        %v4693 = vadd.f32 %v4532, %v4692
        %v4694 = vpop.f32.mrf.mxu0
        %4695 = vmatprep.mubr.bf16.mxu0 %v3547
        %4696 = vmatmul.mubr.bf16.gmra.mxu0 %v3499
        %v4697 = vpop.f32.mrf.mxu0
        %v4698 = vadd.f32 %v4537, %v4697
        %v4699 = vpop.f32.mrf.mxu0
        %v4700 = vpop.f32.mrf.mxu0
        %v4701 = vadd.f32 %v4540, %v4700
        %v4702 = vpop.f32.mrf.mxu0
        %4703 = vmatprep.mubr.bf16.mxu0 %v3548
        %4704 = vmatmul.mubr.bf16.gmra.mxu0 %v3500
        %v4705 = vpop.f32.mrf.mxu0
        %v4706 = vadd.f32 %v4545, %v4705
        %v4707 = vpop.f32.mrf.mxu0
        %v4708 = vpop.f32.mrf.mxu0
        %v4709 = vadd.f32 %v4548, %v4708
        %v4710 = vpop.f32.mrf.mxu0
        %4711 = vmatprep.mubr.bf16.mxu0 %v3549
        %4712 = vmatmul.mubr.bf16.gmra.mxu0 %v3501
        %v4713 = vpop.f32.mrf.mxu0
        %v4714 = vadd.f32 %v4553, %v4713
        %v4715 = vpop.f32.mrf.mxu0
        %v4716 = vpop.f32.mrf.mxu0
        %v4717 = vadd.f32 %v4556, %v4716
        %v4718 = vpop.f32.mrf.mxu0
        %4719 = vmatprep.mubr.bf16.mxu0 %v3550
        %4720 = vmatmul.mubr.bf16.gmra.mxu0 %v3502
        %v4721 = vpop.f32.mrf.mxu0
        %v4722 = vadd.f32 %v4561, %v4721
        %v4723 = vpop.f32.mrf.mxu0
        %v4724 = vpop.f32.mrf.mxu0
        %v4725 = vadd.f32 %v4564, %v4724
        %v4726 = vpop.f32.mrf.mxu0
        %4727 = vmatprep.mubr.bf16.mxu0 %v3551
        %4728 = vmatmul.mubr.bf16.gmra.mxu0 %v3503
        %v4729 = vpop.f32.mrf.mxu0
        %v4730 = vadd.f32 %v4569, %v4729
        %v4731 = vpop.f32.mrf.mxu0
        %v4732 = vpop.f32.mrf.mxu0
        %v4733 = vadd.f32 %v4572, %v4732
        %v4734 = vpop.f32.mrf.mxu0
        %4735 = vmatprep.mubr.bf16.mxu0 %v3552
        %4736 = vmatmul.mubr.bf16.gmra.mxu0 %v3504
        %v4737 = vpop.f32.mrf.mxu0
        %v4738 = vadd.f32 %v4577, %v4737
        %v4739 = vpop.f32.mrf.mxu0
        %v4740 = vpop.f32.mrf.mxu0
        %v4741 = vadd.f32 %v4580, %v4740
        %v4742 = vpop.f32.mrf.mxu0
        %4743 = vmatprep.mubr.bf16.mxu0 %v3553
        %4744 = vmatmul.mubr.bf16.gmra.mxu0 %v3505
        %v4745 = vpop.f32.mrf.mxu0
        %v4746 = vadd.f32 %v4585, %v4745
        %v4747 = vpop.f32.mrf.mxu0
        %v4748 = vpop.f32.mrf.mxu0
        %v4749 = vadd.f32 %v4588, %v4748
        %v4750 = vpop.f32.mrf.mxu0
        %4751 = vmatprep.mubr.bf16.mxu0 %v3554
        %4752 = vmatmul.mubr.bf16.gmra.mxu0 %v3506
        %v4753 = vpop.f32.mrf.mxu0
        %v4754 = vadd.f32 %v4593, %v4753
        %v4755 = vpop.f32.mrf.mxu0
        %v4756 = vpop.f32.mrf.mxu0
        %v4757 = vadd.f32 %v4596, %v4756
        %v4758 = vpop.f32.mrf.mxu0
        %4759 = vmatprep.mubr.bf16.mxu0 %v3555
        %4760 = vmatmul.mubr.bf16.gmra.mxu0 %v3507
        %v4761 = vpop.f32.mrf.mxu0
        %v4762 = vadd.f32 %v4601, %v4761
        %v4763 = vpop.f32.mrf.mxu0
        %v4764 = vpop.f32.mrf.mxu0
        %v4765 = vadd.f32 %v4604, %v4764
        %v4766 = vpop.f32.mrf.mxu0
        %4767 = vmatprep.mubr.bf16.mxu0 %v3556
        %4768 = vmatmul.mubr.bf16.gmra.mxu0 %v3508
        %v4769 = vpop.f32.mrf.mxu0
        %v4770 = vadd.f32 %v4609, %v4769
        %v4771 = vpop.f32.mrf.mxu0
        %v4772 = vpop.f32.mrf.mxu0
        %v4773 = vadd.f32 %v4612, %v4772
        %v4774 = vpop.f32.mrf.mxu0
        %4775 = vdwg.mxu0
        %4776 = vmatprep.subr.bf16.mxu0 0
        %4777 = vmatpush1.bf16.msra.mxu0 %v4349
        %4778 = vmatprep.subr.bf16.mxu0 0
        %4779 = vmatpush1.bf16.msra.mxu0 %v4348
        %4780 = vmatprep.subr.bf16.mxu0 0
        %4781 = vmatpush1.bf16.msra.mxu0 %v4347
        %4782 = vmatprep.subr.bf16.mxu0 0
        %4783 = vmatpush1.bf16.msra.mxu0 %v4346
        %4784 = vmatprep.subr.bf16.mxu0 0
        %4785 = vmatpush1.bf16.msra.mxu0 %v4345
        %4786 = vmatprep.subr.bf16.mxu0 0
        %4787 = vmatpush1.bf16.msra.mxu0 %v4344
        %4788 = vmatprep.subr.bf16.mxu0 0
        %4789 = vmatpush1.bf16.msra.mxu0 %v4343
        %4790 = vmatprep.subr.bf16.mxu0 0
        %4791 = vmatpush1.bf16.msra.mxu0 %v4342
        %4792 = vmatprep.subr.bf16.mxu0 0
        %4793 = vmatpush2.bf16.msra.mxu0 %v4357
        %4794 = vmatprep.subr.bf16.mxu0 0
        %4795 = vmatpush2.bf16.msra.mxu0 %v4356
        %4796 = vmatprep.subr.bf16.mxu0 0
        %4797 = vmatpush2.bf16.msra.mxu0 %v4355
        %4798 = vmatprep.subr.bf16.mxu0 0
        %4799 = vmatpush2.bf16.msra.mxu0 %v4354
        %4800 = vmatprep.subr.bf16.mxu0 0
        %4801 = vmatpush2.bf16.msra.mxu0 %v4353
        %4802 = vmatprep.subr.bf16.mxu0 0
        %4803 = vmatpush2.bf16.msra.mxu0 %v4352
        %4804 = vmatprep.subr.bf16.mxu0 0
        %4805 = vmatpush2.bf16.msra.mxu0 %v4351
        %4806 = vmatprep.subr.bf16.mxu0 0
        %4807 = vmatpush2.bf16.msra.mxu0 %v4350
        %4808 = vmatprep.mubr.bf16.mxu0 %v3598
        %4809 = vmatmul.mubr.bf16.gmra.mxu0 %v3723
        %v4810 = vpop.f32.mrf.mxu0
        %v4811 = vadd.f32 %v4650, %v4810
        %v4812 = vpop.f32.mrf.mxu0
        %v4813 = vpop.f32.mrf.mxu0
        %v4814 = vadd.f32 %v4653, %v4813
        %v4815 = vpop.f32.mrf.mxu0
        %4816 = vmatprep.mubr.bf16.mxu0 %v3599
        %4817 = vmatmul.mubr.bf16.gmra.mxu0 %v3731
        %v4818 = vpop.f32.mrf.mxu0
        %v4819 = vadd.f32 %v4658, %v4818
        %v4820 = vpop.f32.mrf.mxu0
        %v4821 = vpop.f32.mrf.mxu0
        %v4822 = vadd.f32 %v4661, %v4821
        %v4823 = vpop.f32.mrf.mxu0
        %4824 = vmatprep.mubr.bf16.mxu0 %v3600
        %4825 = vmatmul.mubr.bf16.gmra.mxu0 %v3739
        %v4826 = vpop.f32.mrf.mxu0
        %v4827 = vadd.f32 %v4666, %v4826
        %v4828 = vpop.f32.mrf.mxu0
        %v4829 = vpop.f32.mrf.mxu0
        %v4830 = vadd.f32 %v4669, %v4829
        %v4831 = vpop.f32.mrf.mxu0
        %4832 = vmatprep.mubr.bf16.mxu0 %v3601
        %4833 = vmatmul.mubr.bf16.gmra.mxu0 %v3747
        %v4834 = vpop.f32.mrf.mxu0
        %v4835 = vadd.f32 %v4674, %v4834
        %v4836 = vpop.f32.mrf.mxu0
        %v4837 = vpop.f32.mrf.mxu0
        %v4838 = vadd.f32 %v4677, %v4837
        %v4839 = vpop.f32.mrf.mxu0
        %4840 = vmatprep.mubr.bf16.mxu0 %v3602
        %4841 = vmatmul.mubr.bf16.gmra.mxu0 %v3755
        %v4842 = vpop.f32.mrf.mxu0
        %v4843 = vadd.f32 %v4682, %v4842
        %v4844 = vpop.f32.mrf.mxu0
        %v4845 = vpop.f32.mrf.mxu0
        %v4846 = vadd.f32 %v4685, %v4845
        %v4847 = vpop.f32.mrf.mxu0
        %4848 = vmatprep.mubr.bf16.mxu0 %v3603
        %4849 = vmatmul.mubr.bf16.gmra.mxu0 %v3763
        %v4850 = vpop.f32.mrf.mxu0
        %v4851 = vadd.f32 %v4690, %v4850
        %v4852 = vpop.f32.mrf.mxu0
        %v4853 = vpop.f32.mrf.mxu0
        %v4854 = vadd.f32 %v4693, %v4853
        %v4855 = vpop.f32.mrf.mxu0
        %4856 = vmatprep.mubr.bf16.mxu0 %v3604
        %4857 = vmatmul.mubr.bf16.gmra.mxu0 %v3771
        %v4858 = vpop.f32.mrf.mxu0
        %v4859 = vadd.f32 %v4698, %v4858
        %v4860 = vpop.f32.mrf.mxu0
        %v4861 = vpop.f32.mrf.mxu0
        %v4862 = vadd.f32 %v4701, %v4861
        %v4863 = vpop.f32.mrf.mxu0
        %4864 = vmatprep.mubr.bf16.mxu0 %v3605
        %4865 = vmatmul.mubr.bf16.gmra.mxu0 %v3779
        %v4866 = vpop.f32.mrf.mxu0
        %v4867 = vadd.f32 %v4706, %v4866
        %v4868 = vpop.f32.mrf.mxu0
        %v4869 = vpop.f32.mrf.mxu0
        %v4870 = vadd.f32 %v4709, %v4869
        %v4871 = vpop.f32.mrf.mxu0
        %4872 = vmatprep.mubr.bf16.mxu0 %v3606
        %4873 = vmatmul.mubr.bf16.gmra.mxu0 %v3787
        %v4874 = vpop.f32.mrf.mxu0
        %v4875 = vadd.f32 %v4714, %v4874
        %v4876 = vpop.f32.mrf.mxu0
        %v4877 = vpop.f32.mrf.mxu0
        %v4878 = vadd.f32 %v4717, %v4877
        %v4879 = vpop.f32.mrf.mxu0
        %4880 = vmatprep.mubr.bf16.mxu0 %v3607
        %4881 = vmatmul.mubr.bf16.gmra.mxu0 %v3795
        %v4882 = vpop.f32.mrf.mxu0
        %v4883 = vadd.f32 %v4722, %v4882
        %v4884 = vpop.f32.mrf.mxu0
        %v4885 = vpop.f32.mrf.mxu0
        %v4886 = vadd.f32 %v4725, %v4885
        %v4887 = vpop.f32.mrf.mxu0
        %4888 = vmatprep.mubr.bf16.mxu0 %v3608
        %4889 = vmatmul.mubr.bf16.gmra.mxu0 %v3803
        %v4890 = vpop.f32.mrf.mxu0
        %v4891 = vadd.f32 %v4730, %v4890
        %v4892 = vpop.f32.mrf.mxu0
        %v4893 = vpop.f32.mrf.mxu0
        %v4894 = vadd.f32 %v4733, %v4893
        %v4895 = vpop.f32.mrf.mxu0
        %4896 = vmatprep.mubr.bf16.mxu0 %v3609
        %4897 = vmatmul.mubr.bf16.gmra.mxu0 %v3811
        %v4898 = vpop.f32.mrf.mxu0
        %v4899 = vadd.f32 %v4738, %v4898
        %v4900 = vpop.f32.mrf.mxu0
        %v4901 = vpop.f32.mrf.mxu0
        %v4902 = vadd.f32 %v4741, %v4901
        %v4903 = vpop.f32.mrf.mxu0
        %4904 = vmatprep.mubr.bf16.mxu0 %v3610
        %4905 = vmatmul.mubr.bf16.gmra.mxu0 %v3819
        %v4906 = vpop.f32.mrf.mxu0
        %v4907 = vadd.f32 %v4746, %v4906
        %v4908 = vpop.f32.mrf.mxu0
        %v4909 = vpop.f32.mrf.mxu0
        %v4910 = vadd.f32 %v4749, %v4909
        %v4911 = vpop.f32.mrf.mxu0
        %4912 = vmatprep.mubr.bf16.mxu0 %v3611
        %4913 = vmatmul.mubr.bf16.gmra.mxu0 %v3827
        %v4914 = vpop.f32.mrf.mxu0
        %v4915 = vadd.f32 %v4754, %v4914
        %v4916 = vpop.f32.mrf.mxu0
        %v4917 = vpop.f32.mrf.mxu0
        %v4918 = vadd.f32 %v4757, %v4917
        %v4919 = vpop.f32.mrf.mxu0
        %4920 = vmatprep.mubr.bf16.mxu0 %v3612
        %4921 = vmatmul.mubr.bf16.gmra.mxu0 %v3856
        %v4922 = vpop.f32.mrf.mxu0
        %v4923 = vadd.f32 %v4762, %v4922
        %v4924 = vpop.f32.mrf.mxu0
        %v4925 = vpop.f32.mrf.mxu0
        %v4926 = vadd.f32 %v4765, %v4925
        %v4927 = vpop.f32.mrf.mxu0
        %4928 = vmatprep.mubr.bf16.mxu0 %v3613
        %4929 = vmatmul.mubr.bf16.gmra.mxu0 %v3864
        %v4930 = vpop.f32.mrf.mxu0
        %v4931 = vadd.f32 %v4770, %v4930
        %v4932 = vpop.f32.mrf.mxu0
        %v4933 = vpop.f32.mrf.mxu0
        %v4934 = vadd.f32 %v4773, %v4933
        %v4935 = vpop.f32.mrf.mxu0
        %4936 = vdwg.mxu0
        %4937 = vmatprep.subr.bf16.mxu0 0
        %4938 = vmatpush1.bf16.msra.mxu0 %v4365
        %4939 = vmatprep.subr.bf16.mxu0 0
        %4940 = vmatpush1.bf16.msra.mxu0 %v4364
        %4941 = vmatprep.subr.bf16.mxu0 0
        %4942 = vmatpush1.bf16.msra.mxu0 %v4363
        %4943 = vmatprep.subr.bf16.mxu0 0
        %4944 = vmatpush1.bf16.msra.mxu0 %v4362
        %4945 = vmatprep.subr.bf16.mxu0 0
        %4946 = vmatpush1.bf16.msra.mxu0 %v4361
        %4947 = vmatprep.subr.bf16.mxu0 0
        %4948 = vmatpush1.bf16.msra.mxu0 %v4360
        %4949 = vmatprep.subr.bf16.mxu0 0
        %4950 = vmatpush1.bf16.msra.mxu0 %v4359
        %4951 = vmatprep.subr.bf16.mxu0 0
        %4952 = vmatpush1.bf16.msra.mxu0 %v4358
        %4953 = vmatprep.subr.bf16.mxu0 0
        %4954 = vmatpush2.bf16.msra.mxu0 %v4373
        %4955 = vmatprep.subr.bf16.mxu0 0
        %4956 = vmatpush2.bf16.msra.mxu0 %v4372
        %4957 = vmatprep.subr.bf16.mxu0 0
        %4958 = vmatpush2.bf16.msra.mxu0 %v4371
        %4959 = vmatprep.subr.bf16.mxu0 0
        %4960 = vmatpush2.bf16.msra.mxu0 %v4370
        %4961 = vmatprep.subr.bf16.mxu0 0
        %4962 = vmatpush2.bf16.msra.mxu0 %v4369
        %4963 = vmatprep.subr.bf16.mxu0 0
        %4964 = vmatpush2.bf16.msra.mxu0 %v4368
        %4965 = vmatprep.subr.bf16.mxu0 0
        %4966 = vmatpush2.bf16.msra.mxu0 %v4367
        %4967 = vmatprep.subr.bf16.mxu0 0
        %4968 = vmatpush2.bf16.msra.mxu0 %v4366
        %4969 = vmatprep.mubr.bf16.mxu0 %v3731
        %4970 = vmatmul.mubr.bf16.gmra.mxu0 %v3645
        %v4971 = vpop.f32.mrf.mxu0
        %v4972 = vadd.f32 %v4811, %v4971
        %v4973 = vpop.f32.mrf.mxu0
        %v4974 = vpop.f32.mrf.mxu0
        %v4975 = vadd.f32 %v4814, %v4974
        %v4976 = vpop.f32.mrf.mxu0
        %4977 = vmatprep.mubr.bf16.mxu0 %v3739
        %4978 = vmatmul.mubr.bf16.gmra.mxu0 %v3646
        %v4979 = vpop.f32.mrf.mxu0
        %v4980 = vadd.f32 %v4819, %v4979
        %v4981 = vpop.f32.mrf.mxu0
        %v4982 = vpop.f32.mrf.mxu0
        %v4983 = vadd.f32 %v4822, %v4982
        %v4984 = vpop.f32.mrf.mxu0
        %4985 = vmatprep.mubr.bf16.mxu0 %v3747
        %4986 = vmatmul.mubr.bf16.gmra.mxu0 %v3647
        %v4987 = vpop.f32.mrf.mxu0
        %v4988 = vadd.f32 %v4827, %v4987
        %v4989 = vpop.f32.mrf.mxu0
        %v4990 = vpop.f32.mrf.mxu0
        %v4991 = vadd.f32 %v4830, %v4990
        %v4992 = vpop.f32.mrf.mxu0
        %4993 = vmatprep.mubr.bf16.mxu0 %v3755
        %4994 = vmatmul.mubr.bf16.gmra.mxu0 %v3648
        %v4995 = vpop.f32.mrf.mxu0
        %v4996 = vadd.f32 %v4835, %v4995
        %v4997 = vpop.f32.mrf.mxu0
        %v4998 = vpop.f32.mrf.mxu0
        %v4999 = vadd.f32 %v4838, %v4998
        %v5000 = vpop.f32.mrf.mxu0
        %5001 = vmatprep.mubr.bf16.mxu0 %v3763
        %5002 = vmatmul.mubr.bf16.gmra.mxu0 %v3649
        %v5003 = vpop.f32.mrf.mxu0
        %v5004 = vadd.f32 %v4843, %v5003
        %v5005 = vpop.f32.mrf.mxu0
        %v5006 = vpop.f32.mrf.mxu0
        %v5007 = vadd.f32 %v4846, %v5006
        %v5008 = vpop.f32.mrf.mxu0
        %5009 = vmatprep.mubr.bf16.mxu0 %v3771
        %5010 = vmatmul.mubr.bf16.gmra.mxu0 %v3650
        %v5011 = vpop.f32.mrf.mxu0
        %v5012 = vadd.f32 %v4851, %v5011
        %v5013 = vpop.f32.mrf.mxu0
        %v5014 = vpop.f32.mrf.mxu0
        %v5015 = vadd.f32 %v4854, %v5014
        %v5016 = vpop.f32.mrf.mxu0
        %5017 = vmatprep.mubr.bf16.mxu0 %v3779
        %5018 = vmatmul.mubr.bf16.gmra.mxu0 %v3651
        %v5019 = vpop.f32.mrf.mxu0
        %v5020 = vadd.f32 %v4859, %v5019
        %v5021 = vpop.f32.mrf.mxu0
        %v5022 = vpop.f32.mrf.mxu0
        %v5023 = vadd.f32 %v4862, %v5022
        %v5024 = vpop.f32.mrf.mxu0
        %5025 = vmatprep.mubr.bf16.mxu0 %v3787
        %5026 = vmatmul.mubr.bf16.gmra.mxu0 %v3652
        %v5027 = vpop.f32.mrf.mxu0
        %v5028 = vadd.f32 %v4867, %v5027
        %v5029 = vpop.f32.mrf.mxu0
        %v5030 = vpop.f32.mrf.mxu0
        %v5031 = vadd.f32 %v4870, %v5030
        %v5032 = vpop.f32.mrf.mxu0
        %5033 = vmatprep.mubr.bf16.mxu0 %v3795
        %5034 = vmatmul.mubr.bf16.gmra.mxu0 %v3653
        %v5035 = vpop.f32.mrf.mxu0
        %v5036 = vadd.f32 %v4875, %v5035
        %v5037 = vpop.f32.mrf.mxu0
        %v5038 = vpop.f32.mrf.mxu0
        %v5039 = vadd.f32 %v4878, %v5038
        %v5040 = vpop.f32.mrf.mxu0
        %5041 = vmatprep.mubr.bf16.mxu0 %v3803
        %5042 = vmatmul.mubr.bf16.gmra.mxu0 %v3654
        %v5043 = vpop.f32.mrf.mxu0
        %v5044 = vadd.f32 %v4883, %v5043
        %v5045 = vpop.f32.mrf.mxu0
        %v5046 = vpop.f32.mrf.mxu0
        %v5047 = vadd.f32 %v4886, %v5046
        %v5048 = vpop.f32.mrf.mxu0
        %5049 = vmatprep.mubr.bf16.mxu0 %v3811
        %5050 = vmatmul.mubr.bf16.gmra.mxu0 %v3655
        %v5051 = vpop.f32.mrf.mxu0
        %v5052 = vadd.f32 %v4891, %v5051
        %v5053 = vpop.f32.mrf.mxu0
        %v5054 = vpop.f32.mrf.mxu0
        %v5055 = vadd.f32 %v4894, %v5054
        %v5056 = vpop.f32.mrf.mxu0
        %5057 = vmatprep.mubr.bf16.mxu0 %v3819
        %5058 = vmatmul.mubr.bf16.gmra.mxu0 %v3656
        %v5059 = vpop.f32.mrf.mxu0
        %v5060 = vadd.f32 %v4899, %v5059
        %v5061 = vpop.f32.mrf.mxu0
        %v5062 = vpop.f32.mrf.mxu0
        %v5063 = vadd.f32 %v4902, %v5062
        %v5064 = vpop.f32.mrf.mxu0
        %5065 = vmatprep.mubr.bf16.mxu0 %v3827
        %5066 = vmatmul.mubr.bf16.gmra.mxu0 %v3657
        %v5067 = vpop.f32.mrf.mxu0
        %v5068 = vadd.f32 %v4907, %v5067
        %v5069 = vpop.f32.mrf.mxu0
        %v5070 = vpop.f32.mrf.mxu0
        %v5071 = vadd.f32 %v4910, %v5070
        %v5072 = vpop.f32.mrf.mxu0
        %5073 = vmatprep.mubr.bf16.mxu0 %v3856
        %5074 = vmatmul.mubr.bf16.gmra.mxu0 %v3658
        %v5075 = vpop.f32.mrf.mxu0
        %v5076 = vadd.f32 %v4915, %v5075
        %v5077 = vpop.f32.mrf.mxu0
        %v5078 = vpop.f32.mrf.mxu0
        %v5079 = vadd.f32 %v4918, %v5078
        %v5080 = vpop.f32.mrf.mxu0
        %5081 = vmatprep.mubr.bf16.mxu0 %v3871
        %5082 = vmatmul.mubr.bf16.gmra.mxu0 %v3659
        %v5083 = vpop.f32.mrf.mxu0
        %v5084 = vadd.f32 %v4923, %v5083
        %v5085 = vpop.f32.mrf.mxu0
        %v5086 = vpop.f32.mrf.mxu0
        %v5087 = vadd.f32 %v4926, %v5086
        %v5088 = vpop.f32.mrf.mxu0
        %5089 = vmatprep.mubr.bf16.mxu0 %v3875
        %5090 = vmatmul.mubr.bf16.gmra.mxu0 %v3660
        %v5091 = vpop.f32.mrf.mxu0
        %v5092 = vadd.f32 %v4931, %v5091
        %v5093 = vpop.f32.mrf.mxu0
        %v5094 = vpop.f32.mrf.mxu0
        %v5095 = vadd.f32 %v4934, %v5094
        %v5096 = vpop.f32.mrf.mxu0
        %5097 = vdwg.mxu0
        %5098 = vmatprep.subr.bf16.mxu0 0
        %5099 = vmatpush1.bf16.msra.mxu0 %v4381
        %5100 = vmatprep.subr.bf16.mxu0 0
        %5101 = vmatpush1.bf16.msra.mxu0 %v4380
        %5102 = vmatprep.subr.bf16.mxu0 0
        %5103 = vmatpush1.bf16.msra.mxu0 %v4379
        %5104 = vmatprep.subr.bf16.mxu0 0
        %5105 = vmatpush1.bf16.msra.mxu0 %v4378
        %5106 = vmatprep.subr.bf16.mxu0 0
        %5107 = vmatpush1.bf16.msra.mxu0 %v4377
        %5108 = vmatprep.subr.bf16.mxu0 0
        %5109 = vmatpush1.bf16.msra.mxu0 %v4376
        %5110 = vmatprep.subr.bf16.mxu0 0
        %5111 = vmatpush1.bf16.msra.mxu0 %v4375
        %5112 = vmatprep.subr.bf16.mxu0 0
        %5113 = vmatpush1.bf16.msra.mxu0 %v4374
        %5114 = vmatprep.subr.bf16.mxu0 0
        %5115 = vmatpush2.bf16.msra.mxu0 0
        %5116 = vmatprep.subr.bf16.mxu0 0
        %5117 = vmatpush2.bf16.msra.mxu0 0
        %5118 = vmatprep.subr.bf16.mxu0 0
        %5119 = vmatpush2.bf16.msra.mxu0 0
        %5120 = vmatprep.subr.bf16.mxu0 0
        %5121 = vmatpush2.bf16.msra.mxu0 0
        %5122 = vmatprep.subr.bf16.mxu0 0
        %5123 = vmatpush2.bf16.msra.mxu0 0
        %5124 = vmatprep.subr.bf16.mxu0 0
        %5125 = vmatpush2.bf16.msra.mxu0 0
        %5126 = vmatprep.subr.bf16.mxu0 0
        %5127 = vmatpush2.bf16.msra.mxu0 0
        %5128 = vmatprep.subr.bf16.mxu0 0
        %5129 = vmatpush2.bf16.msra.mxu0 0
        %5130 = vmatprep.mubr.bf16.mxu0 0
        %5131 = vmatmul.mubr.bf16.gmra.mxu0 %v3695
        %v5132 = vpop.f32.mrf.mxu0
        %v5133 = vadd.f32 %v4972, %v5132
        %v5134 = vpop.f32.mrf.mxu0
        %v5135 = vpop.f32.mrf.mxu0
        %v5136 = vadd.f32 %v4975, %v5135
        %v5137 = vpop.f32.mrf.mxu0
        %5138 = vmatprep.mubr.bf16.mxu0 0
        %5139 = vmatmul.mubr.bf16.gmra.mxu0 %v3696
        %v5140 = vpop.f32.mrf.mxu0
        %v5141 = vadd.f32 %v4980, %v5140
        %v5142 = vpop.f32.mrf.mxu0
        %v5143 = vpop.f32.mrf.mxu0
        %v5144 = vadd.f32 %v4983, %v5143
        %v5145 = vpop.f32.mrf.mxu0
        %5146 = vmatprep.mubr.bf16.mxu0 0
        %5147 = vmatmul.mubr.bf16.gmra.mxu0 %v3697
        %v5148 = vpop.f32.mrf.mxu0
        %v5149 = vadd.f32 %v4988, %v5148
        %v5150 = vpop.f32.mrf.mxu0
        %v5151 = vpop.f32.mrf.mxu0
        %v5152 = vadd.f32 %v4991, %v5151
        %v5153 = vpop.f32.mrf.mxu0
        %5154 = vmatprep.mubr.bf16.mxu0 0
        %5155 = vmatmul.mubr.bf16.gmra.mxu0 %v3698
        %v5156 = vpop.f32.mrf.mxu0
        %v5157 = vadd.f32 %v4996, %v5156
        %v5158 = vpop.f32.mrf.mxu0
        %v5159 = vpop.f32.mrf.mxu0
        %v5160 = vadd.f32 %v4999, %v5159
        %v5161 = vpop.f32.mrf.mxu0
        %5162 = vmatprep.mubr.bf16.mxu0 0
        %5163 = vmatmul.mubr.bf16.gmra.mxu0 %v3699
        %v5164 = vpop.f32.mrf.mxu0
        %v5165 = vadd.f32 %v5004, %v5164
        %v5166 = vpop.f32.mrf.mxu0
        %v5167 = vpop.f32.mrf.mxu0
        %v5168 = vadd.f32 %v5007, %v5167
        %v5169 = vpop.f32.mrf.mxu0
        %5170 = vmatprep.mubr.bf16.mxu0 0
        %5171 = vmatmul.mubr.bf16.gmra.mxu0 %v3700
        %v5172 = vpop.f32.mrf.mxu0
        %v5173 = vadd.f32 %v5012, %v5172
        %v5174 = vpop.f32.mrf.mxu0
        %v5175 = vpop.f32.mrf.mxu0
        %v5176 = vadd.f32 %v5015, %v5175
        %v5177 = vpop.f32.mrf.mxu0
        %5178 = vmatprep.mubr.bf16.mxu0 0
        %5179 = vmatmul.mubr.bf16.gmra.mxu0 %v3701
        %v5180 = vpop.f32.mrf.mxu0
        %v5181 = vadd.f32 %v5020, %v5180
        %v5182 = vpop.f32.mrf.mxu0
        %v5183 = vpop.f32.mrf.mxu0
        %v5184 = vadd.f32 %v5023, %v5183
        %v5185 = vpop.f32.mrf.mxu0
        %5186 = vmatprep.mubr.bf16.mxu0 0
        %5187 = vmatmul.mubr.bf16.gmra.mxu0 %v3702
        %v5188 = vpop.f32.mrf.mxu0
        %v5189 = vadd.f32 %v5028, %v5188
        %v5190 = vpop.f32.mrf.mxu0
        %v5191 = vpop.f32.mrf.mxu0
        %v5192 = vadd.f32 %v5031, %v5191
        %v5193 = vpop.f32.mrf.mxu0
        %5194 = vmatprep.mubr.bf16.mxu0 0
        %5195 = vmatmul.mubr.bf16.gmra.mxu0 %v3703
        %v5196 = vpop.f32.mrf.mxu0
        %v5197 = vadd.f32 %v5036, %v5196
        %v5198 = vpop.f32.mrf.mxu0
        %v5199 = vpop.f32.mrf.mxu0
        %v5200 = vadd.f32 %v5039, %v5199
        %v5201 = vpop.f32.mrf.mxu0
        %5202 = vmatprep.mubr.bf16.mxu0 0
        %5203 = vmatmul.mubr.bf16.gmra.mxu0 %v3704
        %v5204 = vpop.f32.mrf.mxu0
        %v5205 = vadd.f32 %v5044, %v5204
        %v5206 = vpop.f32.mrf.mxu0
        %v5207 = vpop.f32.mrf.mxu0
        %v5208 = vadd.f32 %v5047, %v5207
        %v5209 = vpop.f32.mrf.mxu0
        %5210 = vmatprep.mubr.bf16.mxu0 0
        %5211 = vmatmul.mubr.bf16.gmra.mxu0 %v3705
        %v5212 = vpop.f32.mrf.mxu0
        %v5213 = vadd.f32 %v5052, %v5212
        %v5214 = vpop.f32.mrf.mxu0
        %v5215 = vpop.f32.mrf.mxu0
        %v5216 = vadd.f32 %v5055, %v5215
        %v5217 = vpop.f32.mrf.mxu0
        %5218 = vmatprep.mubr.bf16.mxu0 0
        %5219 = vmatmul.mubr.bf16.gmra.mxu0 %v3706
        %v5220 = vpop.f32.mrf.mxu0
        %v5221 = vadd.f32 %v5060, %v5220
        %v5222 = vpop.f32.mrf.mxu0
        %v5223 = vpop.f32.mrf.mxu0
        %v5224 = vadd.f32 %v5063, %v5223
        %v5225 = vpop.f32.mrf.mxu0
        %5226 = vmatprep.mubr.bf16.mxu0 0
        %5227 = vmatmul.mubr.bf16.gmra.mxu0 %v3707
        %v5228 = vpop.f32.mrf.mxu0
        %v5229 = vadd.f32 %v5068, %v5228
        %v5230 = vpop.f32.mrf.mxu0
        %v5231 = vpop.f32.mrf.mxu0
        %v5232 = vadd.f32 %v5071, %v5231
        %v5233 = vpop.f32.mrf.mxu0
        %5234 = vmatprep.mubr.bf16.mxu0 0
        %5235 = vmatmul.mubr.bf16.gmra.mxu0 %v3708
        %v5236 = vpop.f32.mrf.mxu0
        %v5237 = vadd.f32 %v5076, %v5236
        %v5238 = vpop.f32.mrf.mxu0
        %v5239 = vpop.f32.mrf.mxu0
        %v5240 = vadd.f32 %v5079, %v5239
        %v5241 = vpop.f32.mrf.mxu0
        %5242 = vmatprep.mubr.bf16.mxu0 0
        %5243 = vmatmul.mubr.bf16.gmra.mxu0 %v3709
        %v5244 = vpop.f32.mrf.mxu0
        %v5245 = vadd.f32 %v5084, %v5244
        %v5246 = vpop.f32.mrf.mxu0
        %v5247 = vpop.f32.mrf.mxu0
        %v5248 = vadd.f32 %v5087, %v5247
        %v5249 = vpop.f32.mrf.mxu0
        %5250 = vmatprep.mubr.bf16.mxu0 0
        %5251 = vmatmul.mubr.bf16.gmra.mxu0 %v3710
        %v5252 = vpop.f32.mrf.mxu0
        %v5253 = vadd.f32 %v5092, %v5252
        %v5254 = vpop.f32.mrf.mxu0
        %v5255 = vpop.f32.mrf.mxu0
        %v5256 = vadd.f32 %v5095, %v5255
        %v5257 = vpop.f32.mrf.mxu0
        %5258 = vdwg.mxu0
        %v5259 = vld [vmem:[%s5] sm:$0x1]
        %v5261 = vlaneseq
        %v5262 = vshrl.u32 %v5261, 7
        %v5263 = vsub.s32 0, %v5262
        %v5264 = vrot.slane %v5259, %v5263
        %v5266 = vmul.f32 %v5133, %v5264
        %v5267 = vmul.f32 %v5136, %v5264
        %v5268 = vmul.f32 %v5141, %v5264
        %v5269 = vmul.f32 %v5144, %v5264
        %v5270 = vmul.f32 %v5149, %v5264
        %v5271 = vmul.f32 %v5152, %v5264
        %v5272 = vmul.f32 %v5157, %v5264
        %v5273 = vmul.f32 %v5160, %v5264
        %v5274 = vmul.f32 %v5165, %v5264
        %v5275 = vmul.f32 %v5168, %v5264
        %v5276 = vmul.f32 %v5173, %v5264
        %v5277 = vmul.f32 %v5176, %v5264
        %v5278 = vmul.f32 %v5181, %v5264
        %v5279 = vmul.f32 %v5184, %v5264
        %v5280 = vmul.f32 %v5189, %v5264
        %v5281 = vmul.f32 %v5192, %v5264
        %v5282 = vmul.f32 %v5197, %v5264
        %v5283 = vmul.f32 %v5200, %v5264
        %v5284 = vmul.f32 %v5205, %v5264
        %v5285 = vmul.f32 %v5208, %v5264
        %v5286 = vmul.f32 %v5213, %v5264
        %v5287 = vmul.f32 %v5216, %v5264
        %v5288 = vmul.f32 %v5221, %v5264
        %v5289 = vmul.f32 %v5224, %v5264
        %v5290 = vmul.f32 %v5229, %v5264
        %v5291 = vmul.f32 %v5232, %v5264
        %v5292 = vmul.f32 %v5237, %v5264
        %v5293 = vmul.f32 %v5240, %v5264
        %v5294 = vmul.f32 %v5245, %v5264
        %v5295 = vmul.f32 %v5248, %v5264
        %v5296 = vmul.f32 %v5253, %v5264
        %v5297 = vmul.f32 %v5256, %v5264
        %v5298 = vld [vmem:[%s6] sm:$0x1]
        %v5300 = vlaneseq
        %v5301 = vshrl.u32 %v5300, 7
        %v5302 = vsub.s32 0, %v5301
        %v5303 = vrot.slane %v5298, %v5302
        %v5305 = vadd.f32 %v5266, %v5303
        %v5306 = vadd.f32 %v5267, %v5303
        %v5307 = vadd.f32 %v5268, %v5303
        %v5308 = vadd.f32 %v5269, %v5303
        %v5309 = vadd.f32 %v5270, %v5303
        %v5310 = vadd.f32 %v5271, %v5303
        %v5311 = vadd.f32 %v5272, %v5303
        %v5312 = vadd.f32 %v5273, %v5303
        %v5313 = vadd.f32 %v5274, %v5303
        %v5314 = vadd.f32 %v5275, %v5303
        %v5315 = vadd.f32 %v5276, %v5303
        %v5316 = vadd.f32 %v5277, %v5303
        %v5317 = vadd.f32 %v5278, %v5303
        %v5318 = vadd.f32 %v5279, %v5303
        %v5319 = vadd.f32 %v5280, %v5303
        %v5320 = vadd.f32 %v5281, %v5303
        %v5321 = vadd.f32 %v5282, %v5303
        %v5322 = vadd.f32 %v5283, %v5303
        %v5323 = vadd.f32 %v5284, %v5303
        %v5324 = vadd.f32 %v5285, %v5303
        %v5325 = vadd.f32 %v5286, %v5303
        %v5326 = vadd.f32 %v5287, %v5303
        %v5327 = vadd.f32 %v5288, %v5303
        %v5328 = vadd.f32 %v5289, %v5303
        %v5329 = vadd.f32 %v5290, %v5303
        %v5330 = vadd.f32 %v5291, %v5303
        %v5331 = vadd.f32 %v5292, %v5303
        %v5332 = vadd.f32 %v5293, %v5303
        %v5333 = vadd.f32 %v5294, %v5303
        %v5334 = vadd.f32 %v5295, %v5303
        %v5335 = vadd.f32 %v5296, %v5303
        %v5336 = vadd.f32 %v5297, %v5303
        %v5337 = vadd.f32 %v5305, %v327
        %v5338 = vadd.f32 %v5306, %v328
        %v5339 = vadd.f32 %v5307, %v329
        %v5340 = vadd.f32 %v5308, %v330
        %v5341 = vadd.f32 %v5309, %v331
        %v5342 = vadd.f32 %v5310, %v332
        %v5343 = vadd.f32 %v5311, %v333
        %v5344 = vadd.f32 %v5312, %v334
        %v5345 = vadd.f32 %v5313, %v335
        %v5346 = vadd.f32 %v5314, %v336
        %v5347 = vadd.f32 %v5315, %v337
        %v5348 = vadd.f32 %v5316, %v338
        %v5349 = vadd.f32 %v5317, %v339
        %v5350 = vadd.f32 %v5318, %v340
        %v5351 = vadd.f32 %v5319, %v341
        %v5352 = vadd.f32 %v5320, %v342
        %v5353 = vadd.f32 %v5321, %v343
        %v5354 = vadd.f32 %v5322, %v344
        %v5355 = vadd.f32 %v5323, %v345
        %v5356 = vadd.f32 %v5324, %v346
        %v5357 = vadd.f32 %v5325, %v347
        %v5358 = vadd.f32 %v5326, %v348
        %v5359 = vadd.f32 %v5327, %v349
        %v5360 = vadd.f32 %v5328, %v350
        %v5361 = vadd.f32 %v5329, %v351
        %v5362 = vadd.f32 %v5330, %v352
        %v5363 = vadd.f32 %v5331, %v353
        %v5364 = vadd.f32 %v5332, %v354
        %v5365 = vadd.f32 %v5333, %v355
        %v5366 = vadd.f32 %v5334, %v356
        %v5367 = vadd.f32 %v5335, %v357
        %v5368 = vadd.f32 %v5336, %v358
        %v5369 = vmax.f32 %v5337, 0.0
        %v5370 = vmax.f32 %v5338, 0.0
        %v5371 = vmax.f32 %v5339, 0.0
        %v5372 = vmax.f32 %v5340, 0.0
        %v5373 = vmax.f32 %v5341, 0.0
        %v5374 = vmax.f32 %v5342, 0.0
        %v5375 = vmax.f32 %v5343, 0.0
        %v5376 = vmax.f32 %v5344, 0.0
        %v5377 = vmax.f32 %v5345, 0.0
        %v5378 = vmax.f32 %v5346, 0.0
        %v5379 = vmax.f32 %v5347, 0.0
        %v5380 = vmax.f32 %v5348, 0.0
        %v5381 = vmax.f32 %v5349, 0.0
        %v5382 = vmax.f32 %v5350, 0.0
        %v5383 = vmax.f32 %v5351, 0.0
        %v5384 = vmax.f32 %v5352, 0.0
        %v5385 = vmax.f32 %v5353, 0.0
        %v5386 = vmax.f32 %v5354, 0.0
        %v5387 = vmax.f32 %v5355, 0.0
        %v5388 = vmax.f32 %v5356, 0.0
        %v5389 = vmax.f32 %v5357, 0.0
        %v5390 = vmax.f32 %v5358, 0.0
        %v5391 = vmax.f32 %v5359, 0.0
        %v5392 = vmax.f32 %v5360, 0.0
        %v5393 = vmax.f32 %v5361, 0.0
        %v5394 = vmax.f32 %v5362, 0.0
        %v5395 = vmax.f32 %v5363, 0.0
        %v5396 = vmax.f32 %v5364, 0.0
        %v5397 = vmax.f32 %v5365, 0.0
        %v5398 = vmax.f32 %v5366, 0.0
        %v5399 = vmax.f32 %v5367, 0.0
        %v5400 = vmax.f32 %v5368, 0.0
        %5401 = vst [vmem:[%s325] sm:$0xff] %v5369
        %5402 = vst [vmem:[%s325 + $0x8] sm:$0xff] %v5370
        %5403 = vst [vmem:[%s325 + $0x10] sm:$0xff] %v5371
        %5404 = vst [vmem:[%s325 + $0x18] sm:$0xff] %v5372
        %5405 = vst [vmem:[%s325 + $0x20] sm:$0xff] %v5373
        %5406 = vst [vmem:[%s325 + $0x28] sm:$0xff] %v5374
        %5407 = vst [vmem:[%s325 + $0x30] sm:$0xff] %v5375
        %5408 = vst [vmem:[%s325 + $0x38] sm:$0xff] %v5376
        %5409 = vst [vmem:[%s325 + $0x40] sm:$0xff] %v5377
        %5410 = vst [vmem:[%s325 + $0x48] sm:$0xff] %v5378
        %5411 = vst [vmem:[%s325 + $0x50] sm:$0xff] %v5379
        %5412 = vst [vmem:[%s325 + $0x58] sm:$0xff] %v5380
        %5413 = vst [vmem:[%s325 + $0x60] sm:$0xff] %v5381
        %5414 = vst [vmem:[%s325 + $0x68] sm:$0xff] %v5382
        %5415 = vst [vmem:[%s325 + $0x70] sm:$0xff] %v5383
        %5416 = vst [vmem:[%s325 + $0x78] sm:$0xff] %v5384
        %5417 = vst [vmem:[%s325 + $0x80] sm:$0xff] %v5385
        %5418 = vst [vmem:[%s325 + $0x88] sm:$0xff] %v5386
        %5419 = vst [vmem:[%s325 + $0x90] sm:$0xff] %v5387
        %5420 = vst [vmem:[%s325 + $0x98] sm:$0xff] %v5388
        %5421 = vst [vmem:[%s325 + $0xa0] sm:$0xff] %v5389
        %5422 = vst [vmem:[%s325 + $0xa8] sm:$0xff] %v5390
        %5423 = vst [vmem:[%s325 + $0xb0] sm:$0xff] %v5391
        %5424 = vst [vmem:[%s325 + $0xb8] sm:$0xff] %v5392
        %5425 = vst [vmem:[%s325 + $0xc0] sm:$0xff] %v5393
        %5426 = vst [vmem:[%s325 + $0xc8] sm:$0xff] %v5394
        %5427 = vst [vmem:[%s325 + $0xd0] sm:$0xff] %v5395
        %5428 = vst [vmem:[%s325 + $0xd8] sm:$0xff] %v5396
        %5429 = vst [vmem:[%s325 + $0xe0] sm:$0xff] %v5397
        %5430 = vst [vmem:[%s325 + $0xe8] sm:$0xff] %v5398
        %5431 = vst [vmem:[%s325 + $0xf0] sm:$0xff] %v5399
        %5432 = vst [vmem:[%s325 + $0xf8] sm:$0xff] %v5400
        %s5433 = sand.u32 %s185, 1
        %s5434 = scalar_lea.sflag [#allocation4], %s5433
        %s5435 = sand.u32 %s185, 1
        %s5436 = smul.addr %s5435, 256
        %s5437 = scalar_lea.vmem [#allocation8], %s5436
        // Predicated region
        $region61: #{tpu_custom_call.1} parent=47 // pred_check
          %p5438 = pneg %p195
        $region62: #{tpu_custom_call.1} parent=47 // pred_check_branch
          %5440 = sbr.rel (%p5438) target = $region64
        $region63: #{tpu_custom_call.1} parent=47 // pred_region
          %s5442 = ssub.s32 4096, 4096
          %5443 = vsyncadd %s5434, %s5442
          %s5444 = smul.addr %s25, 32
          %s5445 = smul.addr %s5444, 128
          %s5446 = scalar_lea.hbm %s7, %s5445
          %s5447 = sshll.u32 %s5437, 4
          %s5448 = int_to_ptr.vmem [resolvable:$true] %s5447
          %5453 = dma.vmem_to_hbm [thread:$0]  %s5448, 4096, %s5446, %s5434, 128, 128, 8
        $region64: #{tpu_custom_call.1} parent=47 // pred_fallthru
          _
      $region48: #{tpu_custom_call.1} parent=5 // pred_fallthru
        _
      %p5454 = scmp.le.s32.totalorder 2, %s20
      // Predicated region
      $region65: #{tpu_custom_call.1} parent=5 // pred_check
        %p5455 = pneg %p5454
      $region66: #{tpu_custom_call.1} parent=5 // pred_check_branch
        %5457 = sbr.rel (%p5455) target = $region68
      $region67: #{tpu_custom_call.1} parent=5 // pred_region
        %s5458 = ssub.s32 %s20, 2
        // Predicated region
        $region69: #{tpu_custom_call.1} parent=67 // pred_check
          %p5459 = pneg %p201
        $region70: #{tpu_custom_call.1} parent=67 // pred_check_branch
          %5461 = sbr.rel (%p5459) target = $region72
        $region71: #{tpu_custom_call.1} parent=67 // pred_region
          %s5462 = sand.u32 %s186, 1
          %s5463 = scalar_lea.sflag [#allocation4], %s5462
          %s5464 = sand.u32 %s186, 1
          %s5465 = smul.addr %s5464, 256
          %s5466 = scalar_lea.vmem [#allocation8], %s5465
          %5467 = dma.done %s5463, 4096
        $region72: #{tpu_custom_call.1} parent=67 // pred_fallthru
          _
      $region68: #{tpu_custom_call.1} parent=5 // pred_fallthru
        _
    $region6: #{tpu_custom_call.1} parent=1 // loop_footer
      %s24 = sadd.s32 1, %s20
    $region7: #{tpu_custom_call.1} parent=1 // loop_footer_branch
      %19 = sbr.rel target = $region3
    $region8: #{tpu_custom_call.1} parent=1 // loop_exit
      _
    %5468 = vsyncpa [#allocation3], 1
    %s5469 = scalar_lea.sflag [#allocation3], 1
    %5470 = vsyncpa %s5469, 1
    %5471 = vsyncpa [#allocation6], 1
    %5472 = vsyncpa [#allocation4], 1
    %s5473 = scalar_lea.sflag [#allocation4], 1
    %5474 = vsyncpa %s5473, 1

</llo_original>
